<compile_context>
chip_gen: v7x
topology: tpu7x:2x2x1
jax: 0.10.0
libtpu: 0.0.40
codegen_flags: <defaults>
</compile_context>

<pallas_src>
import functools
import math

import jax
import jax.numpy as jnp
from jax import lax
from jax.experimental import pallas as pl
from jax.experimental.pallas import tpu as pltpu


# ------------------------------ fused kernel ------------------------------- #

def _dual_cross_attn_kernel(
    x1_ref, x2_ref,
    w_x1_ref, b_x1_ref,        # packed (E,3E): [wq2 | wk1 | wv1], applied to x1
    w_x2_ref, b_x2_ref,        # packed (E,3E): [wq1 | wk2 | wv2], applied to x2
    wo1_ref, bo1_ref,          # mha1 out-projection
    wo2_ref, bo2_ref,          # mha2 out-projection
    pw1_ref, pw2_ref, pb_ref,  # final Linear split: out1@pw1 + out2@pw2 + pb
    out_ref,
    *, n_heads, head_dim):
    E = n_heads * head_dim
    x1 = x1_ref[0]             # (L, E)
    x2 = x2_ref[0]             # (L, E)

    # One packed GEMM per input stream covers all six in-projections.
    p1 = (jnp.dot(x1, w_x1_ref[...], preferred_element_type=jnp.float32)
          + b_x1_ref[...])     # (L, 3E) columns = [ q2 | k1 | v1 ]
    p2 = (jnp.dot(x2, w_x2_ref[...], preferred_element_type=jnp.float32)
          + b_x2_ref[...])     # (L, 3E) columns = [ q1 | k2 | v2 ]

    def attend(q_all, k_all, v_all, wo_ref, bo_ref):
        # softmax scale (1/sqrt(hd)) is already folded into the query weights
        Lq = q_all.shape[0]
        acc = jnp.broadcast_to(bo_ref[...], (Lq, E)).astype(jnp.float32)
        for h in range(n_heads):             # lane-aligned 128-wide head slices
            sl = slice(h * head_dim, (h + 1) * head_dim)
            q = q_all[:, sl]
            k = k_all[:, sl]
            v = v_all[:, sl]
            # q @ k^T without materializing a transpose of k
            s = lax.dot_general(q, k, (((1,), (1,)), ((), ())),
                                preferred_element_type=jnp.float32)
            m = jnp.max(s, axis=-1, keepdims=True)
            p = jnp.exp(s - m)
            inv = pl.reciprocal(jnp.sum(p, axis=-1, keepdims=True), approx=True)
            o_h = jnp.dot(p * inv, v, preferred_element_type=jnp.float32)
            # fold this head directly into the out-projection (no concat)
            acc = acc + jnp.dot(o_h, wo_ref[sl, :],
                                preferred_element_type=jnp.float32)
        return acc

    # MHA1: query=x2, key=value=x1  (q1 lives in p2; k1/v1 live in p1)
    o1 = attend(p2[:, 0:E], p1[:, E:2 * E], p1[:, 2 * E:3 * E],
                wo1_ref, bo1_ref)
    # MHA2: query=x1, key=value=x2
    o2 = attend(p1[:, 0:E], p2[:, E:2 * E], p2[:, 2 * E:3 * E],
                wo2_ref, bo2_ref)

    # projection on concat([o1, o2]) == o1 @ pw[:E] + o2 @ pw[E:] + b
    out = (jnp.dot(o1, pw1_ref[...], preferred_element_type=jnp.float32)
           + jnp.dot(o2, pw2_ref[...], preferred_element_type=jnp.float32)
           + pb_ref[...])
    out_ref[0] = out.astype(out_ref.dtype)


# ------------------------------ module forward ------------------------------ #

def dual_cross_attention(x1, x2, params, n_heads):
    B, L, E = x1.shape
    hd = E // n_heads
    scale = 1.0 / math.sqrt(hd)
    m1, m2 = params["mha1"], params["mha2"]

    # Pack per-input-stream projection weights; fold softmax scale into wq/bq.
    w_x1 = jnp.concatenate([m2["wq"] * scale, m1["wk"], m1["wv"]], axis=1)
    b_x1 = jnp.concatenate([m2["bq"] * scale, m1["bk"], m1["bv"]]).reshape(1, 3 * E)
    w_x2 = jnp.concatenate([m1["wq"] * scale, m2["wk"], m2["wv"]], axis=1)
    b_x2 = jnp.concatenate([m1["bq"] * scale, m2["bk"], m2["bv"]]).reshape(1, 3 * E)

    pw1 = params["proj_w"][:E, :]
    pw2 = params["proj_w"][E:, :]
    pb = params["proj_b"].reshape(1, E)
    bo1 = m1["bo"].reshape(1, E)
    bo2 = m2["bo"].reshape(1, E)

    kern = functools.partial(_dual_cross_attn_kernel,
                             n_heads=n_heads, head_dim=hd)

    def _resident(shape):
        # weight blocks: same block index every grid step -> stay in VMEM
        return pl.BlockSpec(shape, lambda b: (0, 0))

    return pl.pallas_call(
        kern,
        out_shape=jax.ShapeDtypeStruct((B, L, E), x1.dtype),
        grid=(B,),
        in_specs=[
            pl.BlockSpec((1, L, E), lambda b: (b, 0, 0)),   # x1
            pl.BlockSpec((1, L, E), lambda b: (b, 0, 0)),   # x2
            _resident((E, 3 * E)), _resident((1, 3 * E)),   # packed proj (x1)
            _resident((E, 3 * E)), _resident((1, 3 * E)),   # packed proj (x2)
            _resident((E, E)), _resident((1, E)),           # wo1, bo1
            _resident((E, E)), _resident((1, E)),           # wo2, bo2
            _resident((E, E)), _resident((E, E)),           # proj_w split halves
            _resident((1, E)),                              # proj_b
        ],
        out_specs=pl.BlockSpec((1, L, E), lambda b: (b, 0, 0)),
        compiler_params=pltpu.CompilerParams(
            dimension_semantics=("parallel",)),             # shard B over cores
    )(x1, x2, w_x1, b_x1, w_x2, b_x2,
      m1["wo"], bo1, m2["wo"], bo2, pw1, pw2, pb)


# ------------------------------ pure-JAX ref -------------------------------- #

def _mha_ref(q_in, kv_in, p, n_heads):
    B, Lq, E = q_in.shape
    Lk = kv_in.shape[1]
    hd = E // n_heads
    q = q_in @ p["wq"] + p["bq"]
    k = kv_in @ p["wk"] + p["bk"]
    v = kv_in @ p["wv"] + p["bv"]
    qh = q.reshape(B, Lq, n_heads, hd).transpose(0, 2, 1, 3)
    kh = k.reshape(B, Lk, n_heads, hd).transpose(0, 2, 1, 3)
    vh = v.reshape(B, Lk, n_heads, hd).transpose(0, 2, 1, 3)
    s = jnp.einsum("bhqd,bhkd->bhqk", qh, kh) / math.sqrt(hd)
    a = jax.nn.softmax(s, axis=-1)
    o = jnp.einsum("bhqk,bhkd->bhqd", a, vh)
    o = o.transpose(0, 2, 1, 3).reshape(B, Lq, E)
    return o @ p["wo"] + p["bo"]


def _ref(x1, x2, params, n_heads):
    out1 = _mha_ref(x2, x1, params["mha1"], n_heads)
    out2 = _mha_ref(x1, x2, params["mha2"], n_heads)
    combined = jnp.concatenate([out1, out2], axis=-1)
    return combined @ params["proj_w"] + params["proj_b"]


# ---------------------------------- main ------------------------------------ #

if __name__ == "__main__":
    B, L = 2, 8
    D_MODEL, N_HEADS = 256, 2          # small, lane-aligned (head_dim = 128)
    SCALE = 0.02

    key = jax.random.PRNGKey(0)
    k_x1, k_x2, k_m1, k_m2, k_pw, k_pb = jax.random.split(key, 6)

    def init_mha(k):
        ks = jax.random.split(k, 8)
        def w(kk, shape):
            return jax.random.normal(kk, shape, jnp.float32) * SCALE
        return {
            "wq": w(ks[0], (D_MODEL, D_MODEL)),
            "wk": w(ks[1], (D_MODEL, D_MODEL)),
            "wv": w(ks[2], (D_MODEL, D_MODEL)),
            "bq": w(ks[3], (D_MODEL,)),
            "bk": w(ks[4], (D_MODEL,)),
            "bv": w(ks[5], (D_MODEL,)),
            "wo": w(ks[6], (D_MODEL, D_MODEL)),
            "bo": w(ks[7], (D_MODEL,)),
        }

    params = {
        "mha1": init_mha(k_m1),
        "mha2": init_mha(k_m2),
        "proj_w": jax.random.normal(k_pw, (2 * D_MODEL, D_MODEL),
                                    jnp.float32) * SCALE,
        "proj_b": jax.random.normal(k_pb, (D_MODEL,), jnp.float32) * SCALE,
    }

    x1 = jax.random.normal(k_x1, (B, L, D_MODEL), jnp.float32)
    x2 = jax.random.normal(k_x2, (B, L, D_MODEL), jnp.float32)

    fwd = jax.jit(dual_cross_attention, static_argnames="n_heads")
    out = jax.block_until_ready(fwd(x1, x2, params, n_heads=N_HEADS))

    ref = jax.block_until_ready(_ref(x1, x2, params, N_HEADS))
    assert out.shape == (B, L, D_MODEL)
    # approx reciprocal in the softmax denominator -> slightly looser tolerance
    assert jnp.allclose(out, ref, atol=1e-3, rtol=1e-3), (
        float(jnp.max(jnp.abs(out - ref))))

    print("KERNEL_OK")
</pallas_src>

<mosaic_0001>
module attributes {stable_mosaic.version = 11 : i64} {
  func.func @_dual_cross_attn_kernel(%arg0: i32, %arg1: memref<1x8x256xf32, #tpu.memory_space<vmem>>, %arg2: memref<1x8x256xf32, #tpu.memory_space<vmem>>, %arg3: memref<256x768xf32, #tpu.memory_space<vmem>>, %arg4: memref<1x768xf32, #tpu.memory_space<vmem>>, %arg5: memref<256x768xf32, #tpu.memory_space<vmem>>, %arg6: memref<1x768xf32, #tpu.memory_space<vmem>>, %arg7: memref<256x256xf32, #tpu.memory_space<vmem>>, %arg8: memref<1x256xf32, #tpu.memory_space<vmem>>, %arg9: memref<256x256xf32, #tpu.memory_space<vmem>>, %arg10: memref<1x256xf32, #tpu.memory_space<vmem>>, %arg11: memref<256x256xf32, #tpu.memory_space<vmem>>, %arg12: memref<256x256xf32, #tpu.memory_space<vmem>>, %arg13: memref<1x256xf32, #tpu.memory_space<vmem>>, %arg14: memref<1x8x256xf32, #tpu.memory_space<vmem>>) attributes {dimension_semantics = [#tpu.dimension_semantics<parallel>], iteration_bounds = array<i64: 2>, scalar_prefetch = 0 : i64, scratch_operands = 0 : i64, tpu.core_type = #tpu.core_type<tc>, window_params = [{transform_indices = @transform_0, window_bounds = array<i64: 1, 8, 256>}, {transform_indices = @transform_1, window_bounds = array<i64: 1, 8, 256>}, {pipeline_mode = #tpu.pipeline_mode<synchronous>, transform_indices = @transform_2, window_bounds = array<i64: 256, 768>}, {pipeline_mode = #tpu.pipeline_mode<synchronous>, transform_indices = @transform_3, window_bounds = array<i64: 1, 768>}, {pipeline_mode = #tpu.pipeline_mode<synchronous>, transform_indices = @transform_4, window_bounds = array<i64: 256, 768>}, {pipeline_mode = #tpu.pipeline_mode<synchronous>, transform_indices = @transform_5, window_bounds = array<i64: 1, 768>}, {pipeline_mode = #tpu.pipeline_mode<synchronous>, transform_indices = @transform_6, window_bounds = array<i64: 256, 256>}, {pipeline_mode = #tpu.pipeline_mode<synchronous>, transform_indices = @transform_7, window_bounds = array<i64: 1, 256>}, {pipeline_mode = #tpu.pipeline_mode<synchronous>, transform_indices = @transform_8, window_bounds = array<i64: 256, 256>}, {pipeline_mode = #tpu.pipeline_mode<synchronous>, transform_indices = @transform_9, window_bounds = array<i64: 1, 256>}, {pipeline_mode = #tpu.pipeline_mode<synchronous>, transform_indices = @transform_10, window_bounds = array<i64: 256, 256>}, {pipeline_mode = #tpu.pipeline_mode<synchronous>, transform_indices = @transform_11, window_bounds = array<i64: 256, 256>}, {pipeline_mode = #tpu.pipeline_mode<synchronous>, transform_indices = @transform_12, window_bounds = array<i64: 1, 256>}, {transform_indices = @transform_13, window_bounds = array<i64: 1, 8, 256>}]} {
    %c0 = arith.constant 0 : index
    %c0_0 = arith.constant 0 : index
    %c0_1 = arith.constant 0 : index
    %0 = vector.load %arg1[%c0, %c0_0, %c0_1] : memref<1x8x256xf32, #tpu.memory_space<vmem>>, vector<1x8x256xf32>
    %1 = vector.shape_cast %0 : vector<1x8x256xf32> to vector<8x256xf32>
    %c0_2 = arith.constant 0 : index
    %c0_3 = arith.constant 0 : index
    %c0_4 = arith.constant 0 : index
    %2 = vector.load %arg2[%c0_2, %c0_3, %c0_4] : memref<1x8x256xf32, #tpu.memory_space<vmem>>, vector<1x8x256xf32>
    %3 = vector.shape_cast %2 : vector<1x8x256xf32> to vector<8x256xf32>
    %c0_5 = arith.constant 0 : index
    %c0_6 = arith.constant 0 : index
    %4 = vector.load %arg3[%c0_5, %c0_6] : memref<256x768xf32, #tpu.memory_space<vmem>>, vector<256x768xf32>
    %cst = arith.constant dense<0.000000e+00> : vector<8x768xf32>
    %5 = tpu.matmul %1, %4, %cst {dimension_numbers = #tpu.dot_dimension_numbers<[1], [0], [0], [1], [0, 0, 1, 1], [], []>} : vector<8x256xf32>, vector<256x768xf32>, vector<8x768xf32> -> vector<8x768xf32>
    %c0_7 = arith.constant 0 : index
    %c0_8 = arith.constant 0 : index
    %6 = vector.load %arg4[%c0_7, %c0_8] : memref<1x768xf32, #tpu.memory_space<vmem>>, vector<1x768xf32>
    %7 = vector.broadcast %6 : vector<1x768xf32> to vector<8x768xf32>
    %8 = arith.addf %5, %7 : vector<8x768xf32>
    %c0_9 = arith.constant 0 : index
    %c0_10 = arith.constant 0 : index
    %9 = vector.load %arg5[%c0_9, %c0_10] : memref<256x768xf32, #tpu.memory_space<vmem>>, vector<256x768xf32>
    %cst_11 = arith.constant dense<0.000000e+00> : vector<8x768xf32>
    %10 = tpu.matmul %3, %9, %cst_11 {dimension_numbers = #tpu.dot_dimension_numbers<[1], [0], [0], [1], [0, 0, 1, 1], [], []>} : vector<8x256xf32>, vector<256x768xf32>, vector<8x768xf32> -> vector<8x768xf32>
    %c0_12 = arith.constant 0 : index
    %c0_13 = arith.constant 0 : index
    %11 = vector.load %arg6[%c0_12, %c0_13] : memref<1x768xf32, #tpu.memory_space<vmem>>, vector<1x768xf32>
    %12 = vector.broadcast %11 : vector<1x768xf32> to vector<8x768xf32>
    %13 = arith.addf %10, %12 : vector<8x768xf32>
    %14 = vector.extract_strided_slice %13 {offsets = [0, 0], sizes = [8, 256], strides = [1, 1]} : vector<8x768xf32> to vector<8x256xf32>
    %15 = vector.extract_strided_slice %8 {offsets = [0, 256], sizes = [8, 256], strides = [1, 1]} : vector<8x768xf32> to vector<8x256xf32>
    %16 = vector.extract_strided_slice %8 {offsets = [0, 512], sizes = [8, 256], strides = [1, 1]} : vector<8x768xf32> to vector<8x256xf32>
    %c0_14 = arith.constant 0 : index
    %c0_15 = arith.constant 0 : index
    %17 = vector.load %arg8[%c0_14, %c0_15] : memref<1x256xf32, #tpu.memory_space<vmem>>, vector<1x256xf32>
    %18 = vector.shape_cast %17 : vector<1x256xf32> to vector<1x256xf32>
    %19 = vector.broadcast %18 : vector<1x256xf32> to vector<8x256xf32>
    %20 = vector.extract_strided_slice %14 {offsets = [0, 0], sizes = [8, 128], strides = [1, 1]} : vector<8x256xf32> to vector<8x128xf32>
    %21 = vector.extract_strided_slice %15 {offsets = [0, 0], sizes = [8, 128], strides = [1, 1]} : vector<8x256xf32> to vector<8x128xf32>
    %22 = vector.extract_strided_slice %16 {offsets = [0, 0], sizes = [8, 128], strides = [1, 1]} : vector<8x256xf32> to vector<8x128xf32>
    %cst_16 = arith.constant dense<0.000000e+00> : vector<8x8xf32>
    %23 = tpu.matmul %20, %21, %cst_16 {dimension_numbers = #tpu.dot_dimension_numbers<[1], [1], [0], [0], [0, 0, 1, 0], [], []>} : vector<8x128xf32>, vector<8x128xf32>, vector<8x8xf32> -> vector<8x8xf32>
    %cst_17 = arith.constant dense<0xFF800000> : vector<8xf32>
    %24 = vector.multi_reduction <maximumf>, %23, %cst_17 [1] : vector<8x8xf32> to vector<8xf32>
    %25 = vector.shape_cast %24 : vector<8xf32> to vector<8x1xf32>
    %26 = vector.broadcast %25 : vector<8x1xf32> to vector<8x8xf32>
    %27 = arith.subf %23, %26 : vector<8x8xf32>
    %28 = math.exp %27 : vector<8x8xf32>
    %cst_18 = arith.constant dense<0.000000e+00> : vector<8xf32>
    %29 = vector.multi_reduction <add>, %28, %cst_18 [1] : vector<8x8xf32> to vector<8xf32>
    %30 = vector.shape_cast %29 : vector<8xf32> to vector<8x1xf32>
    %31 = tpu.reciprocal %30 {approx = true} : vector<8x1xf32> -> vector<8x1xf32>
    %32 = vector.broadcast %31 : vector<8x1xf32> to vector<8x8xf32>
    %33 = arith.mulf %28, %32 : vector<8x8xf32>
    %cst_19 = arith.constant dense<0.000000e+00> : vector<8x128xf32>
    %34 = tpu.matmul %33, %22, %cst_19 {dimension_numbers = #tpu.dot_dimension_numbers<[1], [0], [0], [1], [0, 0, 1, 1], [], []>} : vector<8x8xf32>, vector<8x128xf32>, vector<8x128xf32> -> vector<8x128xf32>
    %c0_20 = arith.constant 0 : index
    %c0_21 = arith.constant 0 : index
    %35 = vector.load %arg7[%c0_20, %c0_21] : memref<256x256xf32, #tpu.memory_space<vmem>>, vector<128x256xf32>
    %cst_22 = arith.constant dense<0.000000e+00> : vector<8x256xf32>
    %36 = tpu.matmul %34, %35, %cst_22 {dimension_numbers = #tpu.dot_dimension_numbers<[1], [0], [0], [1], [0, 0, 1, 1], [], []>} : vector<8x128xf32>, vector<128x256xf32>, vector<8x256xf32> -> vector<8x256xf32>
    %37 = arith.addf %19, %36 : vector<8x256xf32>
    %38 = vector.extract_strided_slice %14 {offsets = [0, 128], sizes = [8, 128], strides = [1, 1]} : vector<8x256xf32> to vector<8x128xf32>
    %39 = vector.extract_strided_slice %15 {offsets = [0, 128], sizes = [8, 128], strides = [1, 1]} : vector<8x256xf32> to vector<8x128xf32>
    %40 = vector.extract_strided_slice %16 {offsets = [0, 128], sizes = [8, 128], strides = [1, 1]} : vector<8x256xf32> to vector<8x128xf32>
    %cst_23 = arith.constant dense<0.000000e+00> : vector<8x8xf32>
    %41 = tpu.matmul %38, %39, %cst_23 {dimension_numbers = #tpu.dot_dimension_numbers<[1], [1], [0], [0], [0, 0, 1, 0], [], []>} : vector<8x128xf32>, vector<8x128xf32>, vector<8x8xf32> -> vector<8x8xf32>
    %cst_24 = arith.constant dense<0xFF800000> : vector<8xf32>
    %42 = vector.multi_reduction <maximumf>, %41, %cst_24 [1] : vector<8x8xf32> to vector<8xf32>
    %43 = vector.shape_cast %42 : vector<8xf32> to vector<8x1xf32>
    %44 = vector.broadcast %43 : vector<8x1xf32> to vector<8x8xf32>
    %45 = arith.subf %41, %44 : vector<8x8xf32>
    %46 = math.exp %45 : vector<8x8xf32>
    %cst_25 = arith.constant dense<0.000000e+00> : vector<8xf32>
    %47 = vector.multi_reduction <add>, %46, %cst_25 [1] : vector<8x8xf32> to vector<8xf32>
    %48 = vector.shape_cast %47 : vector<8xf32> to vector<8x1xf32>
    %49 = tpu.reciprocal %48 {approx = true} : vector<8x1xf32> -> vector<8x1xf32>
    %50 = vector.broadcast %49 : vector<8x1xf32> to vector<8x8xf32>
    %51 = arith.mulf %46, %50 : vector<8x8xf32>
    %cst_26 = arith.constant dense<0.000000e+00> : vector<8x128xf32>
    %52 = tpu.matmul %51, %40, %cst_26 {dimension_numbers = #tpu.dot_dimension_numbers<[1], [0], [0], [1], [0, 0, 1, 1], [], []>} : vector<8x8xf32>, vector<8x128xf32>, vector<8x128xf32> -> vector<8x128xf32>
    %c128 = arith.constant 128 : index
    %c0_27 = arith.constant 0 : index
    %53 = vector.load %arg7[%c128, %c0_27] : memref<256x256xf32, #tpu.memory_space<vmem>>, vector<128x256xf32>
    %cst_28 = arith.constant dense<0.000000e+00> : vector<8x256xf32>
    %54 = tpu.matmul %52, %53, %cst_28 {dimension_numbers = #tpu.dot_dimension_numbers<[1], [0], [0], [1], [0, 0, 1, 1], [], []>} : vector<8x128xf32>, vector<128x256xf32>, vector<8x256xf32> -> vector<8x256xf32>
    %55 = arith.addf %37, %54 : vector<8x256xf32>
    %56 = vector.extract_strided_slice %8 {offsets = [0, 0], sizes = [8, 256], strides = [1, 1]} : vector<8x768xf32> to vector<8x256xf32>
    %57 = vector.extract_strided_slice %13 {offsets = [0, 256], sizes = [8, 256], strides = [1, 1]} : vector<8x768xf32> to vector<8x256xf32>
    %58 = vector.extract_strided_slice %13 {offsets = [0, 512], sizes = [8, 256], strides = [1, 1]} : vector<8x768xf32> to vector<8x256xf32>
    %c0_29 = arith.constant 0 : index
    %c0_30 = arith.constant 0 : index
    %59 = vector.load %arg10[%c0_29, %c0_30] : memref<1x256xf32, #tpu.memory_space<vmem>>, vector<1x256xf32>
    %60 = vector.shape_cast %59 : vector<1x256xf32> to vector<1x256xf32>
    %61 = vector.broadcast %60 : vector<1x256xf32> to vector<8x256xf32>
    %62 = vector.extract_strided_slice %56 {offsets = [0, 0], sizes = [8, 128], strides = [1, 1]} : vector<8x256xf32> to vector<8x128xf32>
    %63 = vector.extract_strided_slice %57 {offsets = [0, 0], sizes = [8, 128], strides = [1, 1]} : vector<8x256xf32> to vector<8x128xf32>
    %64 = vector.extract_strided_slice %58 {offsets = [0, 0], sizes = [8, 128], strides = [1, 1]} : vector<8x256xf32> to vector<8x128xf32>
    %cst_31 = arith.constant dense<0.000000e+00> : vector<8x8xf32>
    %65 = tpu.matmul %62, %63, %cst_31 {dimension_numbers = #tpu.dot_dimension_numbers<[1], [1], [0], [0], [0, 0, 1, 0], [], []>} : vector<8x128xf32>, vector<8x128xf32>, vector<8x8xf32> -> vector<8x8xf32>
    %cst_32 = arith.constant dense<0xFF800000> : vector<8xf32>
    %66 = vector.multi_reduction <maximumf>, %65, %cst_32 [1] : vector<8x8xf32> to vector<8xf32>
    %67 = vector.shape_cast %66 : vector<8xf32> to vector<8x1xf32>
    %68 = vector.broadcast %67 : vector<8x1xf32> to vector<8x8xf32>
    %69 = arith.subf %65, %68 : vector<8x8xf32>
    %70 = math.exp %69 : vector<8x8xf32>
    %cst_33 = arith.constant dense<0.000000e+00> : vector<8xf32>
    %71 = vector.multi_reduction <add>, %70, %cst_33 [1] : vector<8x8xf32> to vector<8xf32>
    %72 = vector.shape_cast %71 : vector<8xf32> to vector<8x1xf32>
    %73 = tpu.reciprocal %72 {approx = true} : vector<8x1xf32> -> vector<8x1xf32>
    %74 = vector.broadcast %73 : vector<8x1xf32> to vector<8x8xf32>
    %75 = arith.mulf %70, %74 : vector<8x8xf32>
    %cst_34 = arith.constant dense<0.000000e+00> : vector<8x128xf32>
    %76 = tpu.matmul %75, %64, %cst_34 {dimension_numbers = #tpu.dot_dimension_numbers<[1], [0], [0], [1], [0, 0, 1, 1], [], []>} : vector<8x8xf32>, vector<8x128xf32>, vector<8x128xf32> -> vector<8x128xf32>
    %c0_35 = arith.constant 0 : index
    %c0_36 = arith.constant 0 : index
    %77 = vector.load %arg9[%c0_35, %c0_36] : memref<256x256xf32, #tpu.memory_space<vmem>>, vector<128x256xf32>
    %cst_37 = arith.constant dense<0.000000e+00> : vector<8x256xf32>
    %78 = tpu.matmul %76, %77, %cst_37 {dimension_numbers = #tpu.dot_dimension_numbers<[1], [0], [0], [1], [0, 0, 1, 1], [], []>} : vector<8x128xf32>, vector<128x256xf32>, vector<8x256xf32> -> vector<8x256xf32>
    %79 = arith.addf %61, %78 : vector<8x256xf32>
    %80 = vector.extract_strided_slice %56 {offsets = [0, 128], sizes = [8, 128], strides = [1, 1]} : vector<8x256xf32> to vector<8x128xf32>
    %81 = vector.extract_strided_slice %57 {offsets = [0, 128], sizes = [8, 128], strides = [1, 1]} : vector<8x256xf32> to vector<8x128xf32>
    %82 = vector.extract_strided_slice %58 {offsets = [0, 128], sizes = [8, 128], strides = [1, 1]} : vector<8x256xf32> to vector<8x128xf32>
    %cst_38 = arith.constant dense<0.000000e+00> : vector<8x8xf32>
    %83 = tpu.matmul %80, %81, %cst_38 {dimension_numbers = #tpu.dot_dimension_numbers<[1], [1], [0], [0], [0, 0, 1, 0], [], []>} : vector<8x128xf32>, vector<8x128xf32>, vector<8x8xf32> -> vector<8x8xf32>
    %cst_39 = arith.constant dense<0xFF800000> : vector<8xf32>
    %84 = vector.multi_reduction <maximumf>, %83, %cst_39 [1] : vector<8x8xf32> to vector<8xf32>
    %85 = vector.shape_cast %84 : vector<8xf32> to vector<8x1xf32>
    %86 = vector.broadcast %85 : vector<8x1xf32> to vector<8x8xf32>
    %87 = arith.subf %83, %86 : vector<8x8xf32>
    %88 = math.exp %87 : vector<8x8xf32>
    %cst_40 = arith.constant dense<0.000000e+00> : vector<8xf32>
    %89 = vector.multi_reduction <add>, %88, %cst_40 [1] : vector<8x8xf32> to vector<8xf32>
    %90 = vector.shape_cast %89 : vector<8xf32> to vector<8x1xf32>
    %91 = tpu.reciprocal %90 {approx = true} : vector<8x1xf32> -> vector<8x1xf32>
    %92 = vector.broadcast %91 : vector<8x1xf32> to vector<8x8xf32>
    %93 = arith.mulf %88, %92 : vector<8x8xf32>
    %cst_41 = arith.constant dense<0.000000e+00> : vector<8x128xf32>
    %94 = tpu.matmul %93, %82, %cst_41 {dimension_numbers = #tpu.dot_dimension_numbers<[1], [0], [0], [1], [0, 0, 1, 1], [], []>} : vector<8x8xf32>, vector<8x128xf32>, vector<8x128xf32> -> vector<8x128xf32>
    %c128_42 = arith.constant 128 : index
    %c0_43 = arith.constant 0 : index
    %95 = vector.load %arg9[%c128_42, %c0_43] : memref<256x256xf32, #tpu.memory_space<vmem>>, vector<128x256xf32>
    %cst_44 = arith.constant dense<0.000000e+00> : vector<8x256xf32>
    %96 = tpu.matmul %94, %95, %cst_44 {dimension_numbers = #tpu.dot_dimension_numbers<[1], [0], [0], [1], [0, 0, 1, 1], [], []>} : vector<8x128xf32>, vector<128x256xf32>, vector<8x256xf32> -> vector<8x256xf32>
    %97 = arith.addf %79, %96 : vector<8x256xf32>
    %c0_45 = arith.constant 0 : index
    %c0_46 = arith.constant 0 : index
    %98 = vector.load %arg11[%c0_45, %c0_46] : memref<256x256xf32, #tpu.memory_space<vmem>>, vector<256x256xf32>
    %cst_47 = arith.constant dense<0.000000e+00> : vector<8x256xf32>
    %99 = tpu.matmul %55, %98, %cst_47 {dimension_numbers = #tpu.dot_dimension_numbers<[1], [0], [0], [1], [0, 0, 1, 1], [], []>} : vector<8x256xf32>, vector<256x256xf32>, vector<8x256xf32> -> vector<8x256xf32>
    %c0_48 = arith.constant 0 : index
    %c0_49 = arith.constant 0 : index
    %100 = vector.load %arg12[%c0_48, %c0_49] : memref<256x256xf32, #tpu.memory_space<vmem>>, vector<256x256xf32>
    %cst_50 = arith.constant dense<0.000000e+00> : vector<8x256xf32>
    %101 = tpu.matmul %97, %100, %cst_50 {dimension_numbers = #tpu.dot_dimension_numbers<[1], [0], [0], [1], [0, 0, 1, 1], [], []>} : vector<8x256xf32>, vector<256x256xf32>, vector<8x256xf32> -> vector<8x256xf32>
    %102 = arith.addf %99, %101 : vector<8x256xf32>
    %c0_51 = arith.constant 0 : index
    %c0_52 = arith.constant 0 : index
    %103 = vector.load %arg13[%c0_51, %c0_52] : memref<1x256xf32, #tpu.memory_space<vmem>>, vector<1x256xf32>
    %104 = vector.broadcast %103 : vector<1x256xf32> to vector<8x256xf32>
    %105 = arith.addf %102, %104 : vector<8x256xf32>
    %c0_53 = arith.constant 0 : index
    %c0_54 = arith.constant 0 : index
    %c0_55 = arith.constant 0 : index
    %106 = vector.load %arg14[%c0_53, %c0_54, %c0_55] : memref<1x8x256xf32, #tpu.memory_space<vmem>>, vector<1x8x256xf32>
    %107 = vector.shape_cast %106 : vector<1x8x256xf32> to vector<8x256xf32>
    %108 = vector.shape_cast %105 : vector<8x256xf32> to vector<1x8x256xf32>
    tpu.vector_store %arg14[%c0_53, %c0_54, %c0_55], %108 {strides = array<i32>} : memref<1x8x256xf32, #tpu.memory_space<vmem>>, vector<1x8x256xf32>,
    return
  }
  func.func @transform_0(%arg0: i32) -> (i32, i32, i32) {
    %c0_i32 = arith.constant 0 : i32
    %c0_i32_0 = arith.constant 0 : i32
    %c0_i32_1 = arith.constant 0 : i32
    return %arg0, %c0_i32, %c0_i32_0 : i32, i32, i32
  }
  func.func @transform_1(%arg0: i32) -> (i32, i32, i32) {
    %c0_i32 = arith.constant 0 : i32
    %c0_i32_0 = arith.constant 0 : i32
    %c0_i32_1 = arith.constant 0 : i32
    return %arg0, %c0_i32, %c0_i32_0 : i32, i32, i32
  }
  func.func @transform_2(%arg0: i32) -> (i32, i32) {
    %c0_i32 = arith.constant 0 : i32
    %c0_i32_0 = arith.constant 0 : i32
    %c0_i32_1 = arith.constant 0 : i32
    return %c0_i32, %c0_i32_0 : i32, i32
  }
  func.func @transform_3(%arg0: i32) -> (i32, i32) {
    %c0_i32 = arith.constant 0 : i32
    %c0_i32_0 = arith.constant 0 : i32
    %c0_i32_1 = arith.constant 0 : i32
    return %c0_i32, %c0_i32_0 : i32, i32
  }
  func.func @transform_4(%arg0: i32) -> (i32, i32) {
    %c0_i32 = arith.constant 0 : i32
    %c0_i32_0 = arith.constant 0 : i32
    %c0_i32_1 = arith.constant 0 : i32
    return %c0_i32, %c0_i32_0 : i32, i32
  }
  func.func @transform_5(%arg0: i32) -> (i32, i32) {
    %c0_i32 = arith.constant 0 : i32
    %c0_i32_0 = arith.constant 0 : i32
    %c0_i32_1 = arith.constant 0 : i32
    return %c0_i32, %c0_i32_0 : i32, i32
  }
  func.func @transform_6(%arg0: i32) -> (i32, i32) {
    %c0_i32 = arith.constant 0 : i32
    %c0_i32_0 = arith.constant 0 : i32
    %c0_i32_1 = arith.constant 0 : i32
    return %c0_i32, %c0_i32_0 : i32, i32
  }
  func.func @transform_7(%arg0: i32) -> (i32, i32) {
    %c0_i32 = arith.constant 0 : i32
    %c0_i32_0 = arith.constant 0 : i32
    %c0_i32_1 = arith.constant 0 : i32
    return %c0_i32, %c0_i32_0 : i32, i32
  }
  func.func @transform_8(%arg0: i32) -> (i32, i32) {
    %c0_i32 = arith.constant 0 : i32
    %c0_i32_0 = arith.constant 0 : i32
    %c0_i32_1 = arith.constant 0 : i32
    return %c0_i32, %c0_i32_0 : i32, i32
  }
  func.func @transform_9(%arg0: i32) -> (i32, i32) {
    %c0_i32 = arith.constant 0 : i32
    %c0_i32_0 = arith.constant 0 : i32
    %c0_i32_1 = arith.constant 0 : i32
    return %c0_i32, %c0_i32_0 : i32, i32
  }
  func.func @transform_10(%arg0: i32) -> (i32, i32) {
    %c0_i32 = arith.constant 0 : i32
    %c0_i32_0 = arith.constant 0 : i32
    %c0_i32_1 = arith.constant 0 : i32
    return %c0_i32, %c0_i32_0 : i32, i32
  }
  func.func @transform_11(%arg0: i32) -> (i32, i32) {
    %c0_i32 = arith.constant 0 : i32
    %c0_i32_0 = arith.constant 0 : i32
    %c0_i32_1 = arith.constant 0 : i32
    return %c0_i32, %c0_i32_0 : i32, i32
  }
  func.func @transform_12(%arg0: i32) -> (i32, i32) {
    %c0_i32 = arith.constant 0 : i32
    %c0_i32_0 = arith.constant 0 : i32
    %c0_i32_1 = arith.constant 0 : i32
    return %c0_i32, %c0_i32_0 : i32, i32
  }
  func.func @transform_13(%arg0: i32) -> (i32, i32, i32) {
    %c0_i32 = arith.constant 0 : i32
    %c0_i32_0 = arith.constant 0 : i32
    %c0_i32_1 = arith.constant 0 : i32
    return %arg0, %c0_i32, %c0_i32_0 : i32, i32, i32
  }
}

</mosaic_0001>

<llo_original>
// kernel: dual_cross_attention.1
$region0: #{dual_cross_attention.1}
  #allocation0 [shape = 'u32[]', space=smem, size = 0x4, offset = 0x4, fixed_abs, tag = 'smem constant byte address 0x4 - core index']
  #allocation1 [shape = 'u32[144,128]{1,0:T(1,128)}', space=vmem, size = 0x12000, scoped, tag = 'internal scratch']
  %s0 = inlined_call_operand.vmem [shape: f32[2,8,256], index: 0, kind: input, shape index: {}]
  %s1 = inlined_call_operand.vmem [shape: f32[2,8,256], index: 1, kind: input, shape index: {}]
  %s2 = inlined_call_operand.vmem [shape: f32[256,768], index: 2, kind: input, shape index: {}]
  %s3 = inlined_call_operand.vmem [shape: f32[1,768], index: 3, kind: input, shape index: {}]
  %s4 = inlined_call_operand.vmem [shape: f32[256,768], index: 4, kind: input, shape index: {}]
  %s5 = inlined_call_operand.vmem [shape: f32[1,768], index: 5, kind: input, shape index: {}]
  %s6 = inlined_call_operand.vmem [shape: f32[256,256], index: 6, kind: input, shape index: {}]
  %s7 = inlined_call_operand.vmem [shape: f32[1,256], index: 7, kind: input, shape index: {}]
  %s8 = inlined_call_operand.vmem [shape: f32[256,256], index: 8, kind: input, shape index: {}]
  %s9 = inlined_call_operand.vmem [shape: f32[1,256], index: 9, kind: input, shape index: {}]
  %s10 = inlined_call_operand.vmem [shape: f32[256,256], index: 10, kind: input, shape index: {}]
  %s11 = inlined_call_operand.vmem [shape: f32[256,256], index: 11, kind: input, shape index: {}]
  %s12 = inlined_call_operand.vmem [shape: f32[1,256], index: 12, kind: input, shape index: {}]
  %s13 = inlined_call_operand.hbm [shape: f32[2,8,256], index: 13, kind: output, shape index: {}]
  %s14 = sld [smem:[#allocation0]]
  $region85: #{dual_cross_attention.1} parent=0
    _
  %s16 = ssub.s32 1, %s14
  %s17 = scalar_select 0, %s16, %s14
  $region1: #{dual_cross_attention.1} parent=0
    #allocation2 [shape = 'u8[16384]{0}', space=vmem, size = 0x4000, scoped, tag = 'output window, operand 0']
    #allocation3 [shape = 's32[2]{0}', space=sflag, size = 0x8, scoped, tag = 'scoped memory for dual_cross_attention.1']
    %18 = vsyncpa [#allocation3], 0
    %s19 = scalar_lea.sflag [#allocation3], 1
    %20 = vsyncpa %s19, 0
    loop: start=0, step=1, limit=4
    $region2: #{dual_cross_attention.1} parent=1 // loop_pre_header
      _
    $region3: #{dual_cross_attention.1} parent=1 // loop_header
      %s22 = sphi 0, %s26
      %p23 = scmp.ge.s32.totalorder %s22, 4
      %s32 = sphi 0, %s34
      %s35 = sphi 0, %s32
      %s36 = sphi 0, %s35
      %s52 = sphi 0, %s36
      %s58 = sphi 0, %s60
      %s61 = sphi 0, %s58
      %s62 = sphi 0, %s61
      %s78 = sphi 0, %s62
      %s82 = sphi 0, %s82
      %s84 = sphi 0, %s82
      %s85 = sphi 0, %s84
      %s99 = sphi 0, %s85
      %s103 = sphi 0, %s103
      %s105 = sphi 0, %s103
      %s106 = sphi 0, %s105
      %s120 = sphi 0, %s106
      %s124 = sphi 0, %s124
      %s126 = sphi 0, %s124
      %s127 = sphi 0, %s126
      %s141 = sphi 0, %s127
      %s145 = sphi 0, %s145
      %s147 = sphi 0, %s145
      %s148 = sphi 0, %s147
      %s162 = sphi 0, %s148
      %s166 = sphi 0, %s166
      %s168 = sphi 0, %s166
      %s169 = sphi 0, %s168
      %s183 = sphi 0, %s169
      %s187 = sphi 0, %s187
      %s189 = sphi 0, %s187
      %s190 = sphi 0, %s189
      %s204 = sphi 0, %s190
      %s208 = sphi 0, %s208
      %s210 = sphi 0, %s208
      %s211 = sphi 0, %s210
      %s225 = sphi 0, %s211
      %s229 = sphi 0, %s229
      %s231 = sphi 0, %s229
      %s232 = sphi 0, %s231
      %s246 = sphi 0, %s232
      %s250 = sphi 0, %s250
      %s252 = sphi 0, %s250
      %s253 = sphi 0, %s252
      %s267 = sphi 0, %s253
      %s271 = sphi 0, %s271
      %s273 = sphi 0, %s271
      %s274 = sphi 0, %s273
      %s288 = sphi 0, %s274
      %s292 = sphi 0, %s292
      %s294 = sphi 0, %s292
      %s295 = sphi 0, %s294
      %s309 = sphi 0, %s295
      %s315 = sphi 0, %s317
      %s318 = sphi 0, %s315
      %s319 = sphi 0, %s318
      %s335 = sphi 0, %s319
    $region4: #{dual_cross_attention.1} parent=1 // loop_header_branch
      %25 = sbr.rel (%p23) target = $region8
    $region5: #{dual_cross_attention.1} parent=1 // loop_body
      %s27 = ssub.s32 %s22, 1
      %s28 = ssub.s32 %s22, 2
      %s29 = sadd.s32 %s22, 1
      %s30 = ssub.s32 %s22, %s29
      %p31 = scmp.eq.s32.totalorder %s30, 0
      %s33 = sadd.s32 %s32, 1
      %s34 = scalar_select %p31, %s32, %s33
      %p37 = pneg %p31
      %p38 = scmp.eq.s32.totalorder %s22, 1
      %p39 = por %p37, %p38
      %p40 = scmp.ne.s32.totalorder %s32, %s35
      %p41 = scmp.eq.s32.totalorder %s22, 0
      %p42 = por %p40, %p41
      %p43 = scmp.ne.s32.totalorder %s32, %s35
      %p44 = scmp.eq.s32.totalorder %s27, 1
      %p45 = por %p43, %p44
      %p46 = scmp.ne.s32.totalorder %s35, %s36
      %p47 = scmp.eq.s32.totalorder %s27, 0
      %p48 = por %p46, %p47
      %p49 = scmp.ne.s32.totalorder %s35, %s36
      %p50 = scmp.eq.s32.totalorder %s28, 1
      %p51 = por %p49, %p50
      %p53 = scmp.ne.s32.totalorder %s36, %s52
      %p54 = scmp.eq.s32.totalorder %s28, 0
      %p55 = por %p53, %p54
      %s56 = ssub.s32 %s22, %s29
      %p57 = scmp.eq.s32.totalorder %s56, 0
      %s59 = sadd.s32 %s58, 1
      %s60 = scalar_select %p57, %s58, %s59
      %p63 = pneg %p57
      %p64 = scmp.eq.s32.totalorder %s22, 1
      %p65 = por %p63, %p64
      %p66 = scmp.ne.s32.totalorder %s58, %s61
      %p67 = scmp.eq.s32.totalorder %s22, 0
      %p68 = por %p66, %p67
      %p69 = scmp.ne.s32.totalorder %s58, %s61
      %p70 = scmp.eq.s32.totalorder %s27, 1
      %p71 = por %p69, %p70
      %p72 = scmp.ne.s32.totalorder %s61, %s62
      %p73 = scmp.eq.s32.totalorder %s27, 0
      %p74 = por %p72, %p73
      %p75 = scmp.ne.s32.totalorder %s61, %s62
      %p76 = scmp.eq.s32.totalorder %s28, 1
      %p77 = por %p75, %p76
      %p79 = scmp.ne.s32.totalorder %s62, %s78
      %p80 = scmp.eq.s32.totalorder %s28, 0
      %p81 = por %p79, %p80
      %s83 = sadd.s32 %s82, 1
      %p86 = scmp.eq.s32.totalorder %s22, 1
      %p87 = scmp.ne.s32.totalorder %s82, %s84
      %p88 = scmp.eq.s32.totalorder %s22, 0
      %p89 = por %p87, %p88
      %p90 = scmp.ne.s32.totalorder %s82, %s84
      %p91 = scmp.eq.s32.totalorder %s27, 1
      %p92 = por %p90, %p91
      %p93 = scmp.ne.s32.totalorder %s84, %s85
      %p94 = scmp.eq.s32.totalorder %s27, 0
      %p95 = por %p93, %p94
      %p96 = scmp.ne.s32.totalorder %s84, %s85
      %p97 = scmp.eq.s32.totalorder %s28, 1
      %p98 = por %p96, %p97
      %p100 = scmp.ne.s32.totalorder %s85, %s99
      %p101 = scmp.eq.s32.totalorder %s28, 0
      %p102 = por %p100, %p101
      %s104 = sadd.s32 %s103, 1
      %p107 = scmp.eq.s32.totalorder %s22, 1
      %p108 = scmp.ne.s32.totalorder %s103, %s105
      %p109 = scmp.eq.s32.totalorder %s22, 0
      %p110 = por %p108, %p109
      %p111 = scmp.ne.s32.totalorder %s103, %s105
      %p112 = scmp.eq.s32.totalorder %s27, 1
      %p113 = por %p111, %p112
      %p114 = scmp.ne.s32.totalorder %s105, %s106
      %p115 = scmp.eq.s32.totalorder %s27, 0
      %p116 = por %p114, %p115
      %p117 = scmp.ne.s32.totalorder %s105, %s106
      %p118 = scmp.eq.s32.totalorder %s28, 1
      %p119 = por %p117, %p118
      %p121 = scmp.ne.s32.totalorder %s106, %s120
      %p122 = scmp.eq.s32.totalorder %s28, 0
      %p123 = por %p121, %p122
      %s125 = sadd.s32 %s124, 1
      %p128 = scmp.eq.s32.totalorder %s22, 1
      %p129 = scmp.ne.s32.totalorder %s124, %s126
      %p130 = scmp.eq.s32.totalorder %s22, 0
      %p131 = por %p129, %p130
      %p132 = scmp.ne.s32.totalorder %s124, %s126
      %p133 = scmp.eq.s32.totalorder %s27, 1
      %p134 = por %p132, %p133
      %p135 = scmp.ne.s32.totalorder %s126, %s127
      %p136 = scmp.eq.s32.totalorder %s27, 0
      %p137 = por %p135, %p136
      %p138 = scmp.ne.s32.totalorder %s126, %s127
      %p139 = scmp.eq.s32.totalorder %s28, 1
      %p140 = por %p138, %p139
      %p142 = scmp.ne.s32.totalorder %s127, %s141
      %p143 = scmp.eq.s32.totalorder %s28, 0
      %p144 = por %p142, %p143
      %s146 = sadd.s32 %s145, 1
      %p149 = scmp.eq.s32.totalorder %s22, 1
      %p150 = scmp.ne.s32.totalorder %s145, %s147
      %p151 = scmp.eq.s32.totalorder %s22, 0
      %p152 = por %p150, %p151
      %p153 = scmp.ne.s32.totalorder %s145, %s147
      %p154 = scmp.eq.s32.totalorder %s27, 1
      %p155 = por %p153, %p154
      %p156 = scmp.ne.s32.totalorder %s147, %s148
      %p157 = scmp.eq.s32.totalorder %s27, 0
      %p158 = por %p156, %p157
      %p159 = scmp.ne.s32.totalorder %s147, %s148
      %p160 = scmp.eq.s32.totalorder %s28, 1
      %p161 = por %p159, %p160
      %p163 = scmp.ne.s32.totalorder %s148, %s162
      %p164 = scmp.eq.s32.totalorder %s28, 0
      %p165 = por %p163, %p164
      %s167 = sadd.s32 %s166, 1
      %p170 = scmp.eq.s32.totalorder %s22, 1
      %p171 = scmp.ne.s32.totalorder %s166, %s168
      %p172 = scmp.eq.s32.totalorder %s22, 0
      %p173 = por %p171, %p172
      %p174 = scmp.ne.s32.totalorder %s166, %s168
      %p175 = scmp.eq.s32.totalorder %s27, 1
      %p176 = por %p174, %p175
      %p177 = scmp.ne.s32.totalorder %s168, %s169
      %p178 = scmp.eq.s32.totalorder %s27, 0
      %p179 = por %p177, %p178
      %p180 = scmp.ne.s32.totalorder %s168, %s169
      %p181 = scmp.eq.s32.totalorder %s28, 1
      %p182 = por %p180, %p181
      %p184 = scmp.ne.s32.totalorder %s169, %s183
      %p185 = scmp.eq.s32.totalorder %s28, 0
      %p186 = por %p184, %p185
      %s188 = sadd.s32 %s187, 1
      %p191 = scmp.eq.s32.totalorder %s22, 1
      %p192 = scmp.ne.s32.totalorder %s187, %s189
      %p193 = scmp.eq.s32.totalorder %s22, 0
      %p194 = por %p192, %p193
      %p195 = scmp.ne.s32.totalorder %s187, %s189
      %p196 = scmp.eq.s32.totalorder %s27, 1
      %p197 = por %p195, %p196
      %p198 = scmp.ne.s32.totalorder %s189, %s190
      %p199 = scmp.eq.s32.totalorder %s27, 0
      %p200 = por %p198, %p199
      %p201 = scmp.ne.s32.totalorder %s189, %s190
      %p202 = scmp.eq.s32.totalorder %s28, 1
      %p203 = por %p201, %p202
      %p205 = scmp.ne.s32.totalorder %s190, %s204
      %p206 = scmp.eq.s32.totalorder %s28, 0
      %p207 = por %p205, %p206
      %s209 = sadd.s32 %s208, 1
      %p212 = scmp.eq.s32.totalorder %s22, 1
      %p213 = scmp.ne.s32.totalorder %s208, %s210
      %p214 = scmp.eq.s32.totalorder %s22, 0
      %p215 = por %p213, %p214
      %p216 = scmp.ne.s32.totalorder %s208, %s210
      %p217 = scmp.eq.s32.totalorder %s27, 1
      %p218 = por %p216, %p217
      %p219 = scmp.ne.s32.totalorder %s210, %s211
      %p220 = scmp.eq.s32.totalorder %s27, 0
      %p221 = por %p219, %p220
      %p222 = scmp.ne.s32.totalorder %s210, %s211
      %p223 = scmp.eq.s32.totalorder %s28, 1
      %p224 = por %p222, %p223
      %p226 = scmp.ne.s32.totalorder %s211, %s225
      %p227 = scmp.eq.s32.totalorder %s28, 0
      %p228 = por %p226, %p227
      %s230 = sadd.s32 %s229, 1
      %p233 = scmp.eq.s32.totalorder %s22, 1
      %p234 = scmp.ne.s32.totalorder %s229, %s231
      %p235 = scmp.eq.s32.totalorder %s22, 0
      %p236 = por %p234, %p235
      %p237 = scmp.ne.s32.totalorder %s229, %s231
      %p238 = scmp.eq.s32.totalorder %s27, 1
      %p239 = por %p237, %p238
      %p240 = scmp.ne.s32.totalorder %s231, %s232
      %p241 = scmp.eq.s32.totalorder %s27, 0
      %p242 = por %p240, %p241
      %p243 = scmp.ne.s32.totalorder %s231, %s232
      %p244 = scmp.eq.s32.totalorder %s28, 1
      %p245 = por %p243, %p244
      %p247 = scmp.ne.s32.totalorder %s232, %s246
      %p248 = scmp.eq.s32.totalorder %s28, 0
      %p249 = por %p247, %p248
      %s251 = sadd.s32 %s250, 1
      %p254 = scmp.eq.s32.totalorder %s22, 1
      %p255 = scmp.ne.s32.totalorder %s250, %s252
      %p256 = scmp.eq.s32.totalorder %s22, 0
      %p257 = por %p255, %p256
      %p258 = scmp.ne.s32.totalorder %s250, %s252
      %p259 = scmp.eq.s32.totalorder %s27, 1
      %p260 = por %p258, %p259
      %p261 = scmp.ne.s32.totalorder %s252, %s253
      %p262 = scmp.eq.s32.totalorder %s27, 0
      %p263 = por %p261, %p262
      %p264 = scmp.ne.s32.totalorder %s252, %s253
      %p265 = scmp.eq.s32.totalorder %s28, 1
      %p266 = por %p264, %p265
      %p268 = scmp.ne.s32.totalorder %s253, %s267
      %p269 = scmp.eq.s32.totalorder %s28, 0
      %p270 = por %p268, %p269
      %s272 = sadd.s32 %s271, 1
      %p275 = scmp.eq.s32.totalorder %s22, 1
      %p276 = scmp.ne.s32.totalorder %s271, %s273
      %p277 = scmp.eq.s32.totalorder %s22, 0
      %p278 = por %p276, %p277
      %p279 = scmp.ne.s32.totalorder %s271, %s273
      %p280 = scmp.eq.s32.totalorder %s27, 1
      %p281 = por %p279, %p280
      %p282 = scmp.ne.s32.totalorder %s273, %s274
      %p283 = scmp.eq.s32.totalorder %s27, 0
      %p284 = por %p282, %p283
      %p285 = scmp.ne.s32.totalorder %s273, %s274
      %p286 = scmp.eq.s32.totalorder %s28, 1
      %p287 = por %p285, %p286
      %p289 = scmp.ne.s32.totalorder %s274, %s288
      %p290 = scmp.eq.s32.totalorder %s28, 0
      %p291 = por %p289, %p290
      %s293 = sadd.s32 %s292, 1
      %p296 = scmp.eq.s32.totalorder %s22, 1
      %p297 = scmp.ne.s32.totalorder %s292, %s294
      %p298 = scmp.eq.s32.totalorder %s22, 0
      %p299 = por %p297, %p298
      %p300 = scmp.ne.s32.totalorder %s292, %s294
      %p301 = scmp.eq.s32.totalorder %s27, 1
      %p302 = por %p300, %p301
      %p303 = scmp.ne.s32.totalorder %s294, %s295
      %p304 = scmp.eq.s32.totalorder %s27, 0
      %p305 = por %p303, %p304
      %p306 = scmp.ne.s32.totalorder %s294, %s295
      %p307 = scmp.eq.s32.totalorder %s28, 1
      %p308 = por %p306, %p307
      %p310 = scmp.ne.s32.totalorder %s295, %s309
      %p311 = scmp.eq.s32.totalorder %s28, 0
      %p312 = por %p310, %p311
      %s313 = ssub.s32 %s22, %s29
      %p314 = scmp.eq.s32.totalorder %s313, 0
      %s316 = sadd.s32 %s315, 1
      %s317 = scalar_select %p314, %s315, %s316
      %p320 = pneg %p314
      %p321 = scmp.eq.s32.totalorder %s22, 1
      %p322 = por %p320, %p321
      %p323 = scmp.ne.s32.totalorder %s315, %s318
      %p324 = scmp.eq.s32.totalorder %s22, 0
      %p325 = por %p323, %p324
      %p326 = scmp.ne.s32.totalorder %s315, %s318
      %p327 = scmp.eq.s32.totalorder %s27, 1
      %p328 = por %p326, %p327
      %p329 = scmp.ne.s32.totalorder %s318, %s319
      %p330 = scmp.eq.s32.totalorder %s27, 0
      %p331 = por %p329, %p330
      %p332 = scmp.ne.s32.totalorder %s318, %s319
      %p333 = scmp.eq.s32.totalorder %s28, 1
      %p334 = por %p332, %p333
      %p336 = scmp.ne.s32.totalorder %s319, %s335
      %p337 = scmp.eq.s32.totalorder %s28, 0
      %p338 = por %p336, %p337
      %p339 = scmp.le.s32.totalorder 1, %s22
      %p340 = scmp.lt.s32.totalorder %s22, 3
      %p341 = pnand %p339, %p340
      %p342 = pneg %p341
      // Predicated region
      $region9: #{dual_cross_attention.1} parent=5 // pred_check
        _
      $region10: #{dual_cross_attention.1} parent=5 // pred_check_branch
        %344 = sbr.rel (%p341) target = $region12
      $region11: #{dual_cross_attention.1} parent=5 // pred_region
        %s345 = ssub.s32 %s22, 1
        // Predicated region
        $region13: #{dual_cross_attention.1} parent=11 // pred_check
          %p346 = pneg %p95
        $region14: #{dual_cross_attention.1} parent=11 // pred_check_branch
          %348 = sbr.rel (%p346) target = $region16
        $region15: #{dual_cross_attention.1} parent=11 // pred_region
          _
        $region16: #{dual_cross_attention.1} parent=11 // pred_fallthru
          _
        // Predicated region
        $region17: #{dual_cross_attention.1} parent=11 // pred_check
          %p349 = pneg %p116
        $region18: #{dual_cross_attention.1} parent=11 // pred_check_branch
          %351 = sbr.rel (%p349) target = $region20
        $region19: #{dual_cross_attention.1} parent=11 // pred_region
          _
        $region20: #{dual_cross_attention.1} parent=11 // pred_fallthru
          _
        // Predicated region
        $region21: #{dual_cross_attention.1} parent=11 // pred_check
          %p352 = pneg %p137
        $region22: #{dual_cross_attention.1} parent=11 // pred_check_branch
          %354 = sbr.rel (%p352) target = $region24
        $region23: #{dual_cross_attention.1} parent=11 // pred_region
          _
        $region24: #{dual_cross_attention.1} parent=11 // pred_fallthru
          _
        // Predicated region
        $region25: #{dual_cross_attention.1} parent=11 // pred_check
          %p355 = pneg %p158
        $region26: #{dual_cross_attention.1} parent=11 // pred_check_branch
          %357 = sbr.rel (%p355) target = $region28
        $region27: #{dual_cross_attention.1} parent=11 // pred_region
          _
        $region28: #{dual_cross_attention.1} parent=11 // pred_fallthru
          _
        // Predicated region
        $region29: #{dual_cross_attention.1} parent=11 // pred_check
          %p358 = pneg %p179
        $region30: #{dual_cross_attention.1} parent=11 // pred_check_branch
          %360 = sbr.rel (%p358) target = $region32
        $region31: #{dual_cross_attention.1} parent=11 // pred_region
          _
        $region32: #{dual_cross_attention.1} parent=11 // pred_fallthru
          _
        // Predicated region
        $region33: #{dual_cross_attention.1} parent=11 // pred_check
          %p361 = pneg %p200
        $region34: #{dual_cross_attention.1} parent=11 // pred_check_branch
          %363 = sbr.rel (%p361) target = $region36
        $region35: #{dual_cross_attention.1} parent=11 // pred_region
          _
        $region36: #{dual_cross_attention.1} parent=11 // pred_fallthru
          _
        // Predicated region
        $region37: #{dual_cross_attention.1} parent=11 // pred_check
          %p364 = pneg %p221
        $region38: #{dual_cross_attention.1} parent=11 // pred_check_branch
          %366 = sbr.rel (%p364) target = $region40
        $region39: #{dual_cross_attention.1} parent=11 // pred_region
          _
        $region40: #{dual_cross_attention.1} parent=11 // pred_fallthru
          _
        // Predicated region
        $region41: #{dual_cross_attention.1} parent=11 // pred_check
          %p367 = pneg %p242
        $region42: #{dual_cross_attention.1} parent=11 // pred_check_branch
          %369 = sbr.rel (%p367) target = $region44
        $region43: #{dual_cross_attention.1} parent=11 // pred_region
          _
        $region44: #{dual_cross_attention.1} parent=11 // pred_fallthru
          _
        // Predicated region
        $region45: #{dual_cross_attention.1} parent=11 // pred_check
          %p370 = pneg %p263
        $region46: #{dual_cross_attention.1} parent=11 // pred_check_branch
          %372 = sbr.rel (%p370) target = $region48
        $region47: #{dual_cross_attention.1} parent=11 // pred_region
          _
        $region48: #{dual_cross_attention.1} parent=11 // pred_fallthru
          _
        // Predicated region
        $region49: #{dual_cross_attention.1} parent=11 // pred_check
          %p373 = pneg %p284
        $region50: #{dual_cross_attention.1} parent=11 // pred_check_branch
          %375 = sbr.rel (%p373) target = $region52
        $region51: #{dual_cross_attention.1} parent=11 // pred_region
          _
        $region52: #{dual_cross_attention.1} parent=11 // pred_fallthru
          _
        // Predicated region
        $region53: #{dual_cross_attention.1} parent=11 // pred_check
          %p376 = pneg %p305
        $region54: #{dual_cross_attention.1} parent=11 // pred_check_branch
          %378 = sbr.rel (%p376) target = $region56
        $region55: #{dual_cross_attention.1} parent=11 // pred_region
          _
        $region56: #{dual_cross_attention.1} parent=11 // pred_fallthru
          _
      $region12: #{dual_cross_attention.1} parent=5 // pred_fallthru
        _
      %p379 = scmp.lt.s32.totalorder %s22, 2
      // Predicated region
      $region57: #{dual_cross_attention.1} parent=5 // pred_check
        %p380 = pneg %p379
      $region58: #{dual_cross_attention.1} parent=5 // pred_check_branch
        %382 = sbr.rel (%p380) target = $region60
      $region59: #{dual_cross_attention.1} parent=5 // pred_region
        // Predicated region
        $region61: #{dual_cross_attention.1} parent=59 // pred_check
          %p383 = pneg %p42
        $region62: #{dual_cross_attention.1} parent=59 // pred_check_branch
          %385 = sbr.rel (%p383) target = $region64
        $region63: #{dual_cross_attention.1} parent=59 // pred_region
          %p386 = scmp.lt.s32.totalorder %s22, 1
          %s387 = scalar_select %p386, %s22, 1
          %s388 = smul.addr %s387, 2
          %s389 = smul.addr %s388, 8
          %s390 = scalar_lea.vmem %s0, %s389
        $region64: #{dual_cross_attention.1} parent=59 // pred_fallthru
          _
        // Predicated region
        $region65: #{dual_cross_attention.1} parent=59 // pred_check
          %p391 = pneg %p68
        $region66: #{dual_cross_attention.1} parent=59 // pred_check_branch
          %393 = sbr.rel (%p391) target = $region68
        $region67: #{dual_cross_attention.1} parent=59 // pred_region
          %p394 = scmp.lt.s32.totalorder %s22, 1
          %s395 = scalar_select %p394, %s22, 1
          %s396 = smul.addr %s395, 2
          %s397 = smul.addr %s396, 8
          %s398 = scalar_lea.vmem %s1, %s397
        $region68: #{dual_cross_attention.1} parent=59 // pred_fallthru
          _
      $region60: #{dual_cross_attention.1} parent=5 // pred_fallthru
        _
      %p399 = scmp.le.s32.totalorder 1, %s22
      %p400 = scmp.lt.s32.totalorder %s22, 3
      %p401 = pnand %p399, %p400
      %p402 = pneg %p401
      // Predicated region
      $region69: #{dual_cross_attention.1} parent=5 // pred_check
        _
      $region70: #{dual_cross_attention.1} parent=5 // pred_check_branch
        %404 = sbr.rel (%p401) target = $region72
      $region71: #{dual_cross_attention.1} parent=5 // pred_region
        %s405 = ssub.s32 %s22, 1
        %p406 = scmp.lt.s32.totalorder %s27, 1
        %s407 = scalar_select %p406, %s27, 1
        %s408 = smul.addr %s407, 2
        %s409 = smul.addr %s408, 8
        %s410 = scalar_lea.vmem %s0, %s409
        %p411 = pneg %p48
        %p412 = pneg %p45
        %p413 = scmp.lt.s32.totalorder %s27, 1
        %s414 = scalar_select %p413, %s27, 1
        %s415 = smul.addr %s414, 2
        %s416 = smul.addr %s415, 8
        %s417 = scalar_lea.vmem %s1, %s416
        %p418 = pneg %p74
        %p419 = pneg %p71
        %p420 = pneg %p95
        %p421 = pneg %p92
        %p422 = pneg %p116
        %p423 = pneg %p113
        %p424 = pneg %p137
        %p425 = pneg %p134
        %p426 = pneg %p158
        %p427 = pneg %p155
        %p428 = pneg %p179
        %p429 = pneg %p176
        %p430 = pneg %p200
        %p431 = pneg %p197
        %p432 = pneg %p221
        %p433 = pneg %p218
        %p434 = pneg %p242
        %p435 = pneg %p239
        %p436 = pneg %p263
        %p437 = pneg %p260
        %p438 = pneg %p284
        %p439 = pneg %p281
        %p440 = pneg %p305
        %p441 = pneg %p302
        %p442 = pneg %p331
        %p443 = pneg %p328
        %s444 = sand.u32 %s318, 1
        %s445 = scalar_lea.sflag [#allocation3], %s444
        %s446 = sand.u32 %s318, 1
        %s447 = smul.addr %s446, 16
        %s448 = scalar_lea.vmem [#allocation2], %s447
        %p449 = scmp.lt.s32.totalorder %s27, 1
        %s450 = scalar_select %p449, %s27, 1
        %s451 = smul.addr %s450, 2
        %s452 = smul.addr %s451, 8
        %s453 = scalar_lea.vmem %s0, %s452
        %p454 = scmp.lt.s32.totalorder %s27, 1
        %s455 = scalar_select %p454, %s27, 1
        %s456 = smul.addr %s455, 2
        %s457 = smul.addr %s456, 8
        %s458 = scalar_lea.vmem %s1, %s457
        %v459 = vld [vmem:[%s453] sm:$0xff]
        %v460 = vld [vmem:[%s453 + $0x8] sm:$0xff]
        %v461 = vld [vmem:[%s458] sm:$0xff]
        %v462 = vld [vmem:[%s458 + $0x8] sm:$0xff]
        %v463 = vld [vmem:[%s2] sm:$0xff]
        %v464 = vld [vmem:[%s2 + $0x8] sm:$0xff]
        %v465 = vld [vmem:[%s2 + $0x10] sm:$0xff]
        %v466 = vld [vmem:[%s2 + $0x18] sm:$0xff]
        %v467 = vld [vmem:[%s2 + $0x20] sm:$0xff]
        %v468 = vld [vmem:[%s2 + $0x28] sm:$0xff]
        %v469 = vld [vmem:[%s2 + $0x30] sm:$0xff]
        %v470 = vld [vmem:[%s2 + $0x38] sm:$0xff]
        %v471 = vld [vmem:[%s2 + $0x40] sm:$0xff]
        %v472 = vld [vmem:[%s2 + $0x48] sm:$0xff]
        %v473 = vld [vmem:[%s2 + $0x50] sm:$0xff]
        %v474 = vld [vmem:[%s2 + $0x58] sm:$0xff]
        %v475 = vld [vmem:[%s2 + $0x60] sm:$0xff]
        %v476 = vld [vmem:[%s2 + $0x68] sm:$0xff]
        %v477 = vld [vmem:[%s2 + $0x70] sm:$0xff]
        %v478 = vld [vmem:[%s2 + $0x78] sm:$0xff]
        %v479 = vld [vmem:[%s2 + $0x80] sm:$0xff]
        %v480 = vld [vmem:[%s2 + $0x88] sm:$0xff]
        %v481 = vld [vmem:[%s2 + $0x90] sm:$0xff]
        %v482 = vld [vmem:[%s2 + $0x98] sm:$0xff]
        %v483 = vld [vmem:[%s2 + $0xa0] sm:$0xff]
        %v484 = vld [vmem:[%s2 + $0xa8] sm:$0xff]
        %v485 = vld [vmem:[%s2 + $0xb0] sm:$0xff]
        %v486 = vld [vmem:[%s2 + $0xb8] sm:$0xff]
        %v487 = vld [vmem:[%s2 + $0xc0] sm:$0xff]
        %v488 = vld [vmem:[%s2 + $0xc8] sm:$0xff]
        %v489 = vld [vmem:[%s2 + $0xd0] sm:$0xff]
        %v490 = vld [vmem:[%s2 + $0xd8] sm:$0xff]
        %v491 = vld [vmem:[%s2 + $0xe0] sm:$0xff]
        %v492 = vld [vmem:[%s2 + $0xe8] sm:$0xff]
        %v493 = vld [vmem:[%s2 + $0xf0] sm:$0xff]
        %v494 = vld [vmem:[%s2 + $0xf8] sm:$0xff]
        %v495 = vld [vmem:[%s2 + $0x100] sm:$0xff]
        %v496 = vld [vmem:[%s2 + $0x108] sm:$0xff]
        %v497 = vld [vmem:[%s2 + $0x110] sm:$0xff]
        %v498 = vld [vmem:[%s2 + $0x118] sm:$0xff]
        %v499 = vld [vmem:[%s2 + $0x120] sm:$0xff]
        %v500 = vld [vmem:[%s2 + $0x128] sm:$0xff]
        %v501 = vld [vmem:[%s2 + $0x130] sm:$0xff]
        %v502 = vld [vmem:[%s2 + $0x138] sm:$0xff]
        %v503 = vld [vmem:[%s2 + $0x140] sm:$0xff]
        %v504 = vld [vmem:[%s2 + $0x148] sm:$0xff]
        %v505 = vld [vmem:[%s2 + $0x150] sm:$0xff]
        %v506 = vld [vmem:[%s2 + $0x158] sm:$0xff]
        %v507 = vld [vmem:[%s2 + $0x160] sm:$0xff]
        %v508 = vld [vmem:[%s2 + $0x168] sm:$0xff]
        %v509 = vld [vmem:[%s2 + $0x170] sm:$0xff]
        %v510 = vld [vmem:[%s2 + $0x178] sm:$0xff]
        %v511 = vld [vmem:[%s2 + $0x180] sm:$0xff]
        %v512 = vld [vmem:[%s2 + $0x188] sm:$0xff]
        %v513 = vld [vmem:[%s2 + $0x190] sm:$0xff]
        %v514 = vld [vmem:[%s2 + $0x198] sm:$0xff]
        %v515 = vld [vmem:[%s2 + $0x1a0] sm:$0xff]
        %v516 = vld [vmem:[%s2 + $0x1a8] sm:$0xff]
        %v517 = vld [vmem:[%s2 + $0x1b0] sm:$0xff]
        %v518 = vld [vmem:[%s2 + $0x1b8] sm:$0xff]
        %v519 = vld [vmem:[%s2 + $0x1c0] sm:$0xff]
        %v520 = vld [vmem:[%s2 + $0x1c8] sm:$0xff]
        %v521 = vld [vmem:[%s2 + $0x1d0] sm:$0xff]
        %v522 = vld [vmem:[%s2 + $0x1d8] sm:$0xff]
        %v523 = vld [vmem:[%s2 + $0x1e0] sm:$0xff]
        %v524 = vld [vmem:[%s2 + $0x1e8] sm:$0xff]
        %v525 = vld [vmem:[%s2 + $0x1f0] sm:$0xff]
        %v526 = vld [vmem:[%s2 + $0x1f8] sm:$0xff]
        %v527 = vld [vmem:[%s2 + $0x200] sm:$0xff]
        %v528 = vld [vmem:[%s2 + $0x208] sm:$0xff]
        %v529 = vld [vmem:[%s2 + $0x210] sm:$0xff]
        %v530 = vld [vmem:[%s2 + $0x218] sm:$0xff]
        %v531 = vld [vmem:[%s2 + $0x220] sm:$0xff]
        %v532 = vld [vmem:[%s2 + $0x228] sm:$0xff]
        %v533 = vld [vmem:[%s2 + $0x230] sm:$0xff]
        %v534 = vld [vmem:[%s2 + $0x238] sm:$0xff]
        %v535 = vld [vmem:[%s2 + $0x240] sm:$0xff]
        %v536 = vld [vmem:[%s2 + $0x248] sm:$0xff]
        %v537 = vld [vmem:[%s2 + $0x250] sm:$0xff]
        %v538 = vld [vmem:[%s2 + $0x258] sm:$0xff]
        %v539 = vld [vmem:[%s2 + $0x260] sm:$0xff]
        %v540 = vld [vmem:[%s2 + $0x268] sm:$0xff]
        %v541 = vld [vmem:[%s2 + $0x270] sm:$0xff]
        %v542 = vld [vmem:[%s2 + $0x278] sm:$0xff]
        %v543 = vld [vmem:[%s2 + $0x280] sm:$0xff]
        %v544 = vld [vmem:[%s2 + $0x288] sm:$0xff]
        %v545 = vld [vmem:[%s2 + $0x290] sm:$0xff]
        %v546 = vld [vmem:[%s2 + $0x298] sm:$0xff]
        %v547 = vld [vmem:[%s2 + $0x2a0] sm:$0xff]
        %v548 = vld [vmem:[%s2 + $0x2a8] sm:$0xff]
        %v549 = vld [vmem:[%s2 + $0x2b0] sm:$0xff]
        %v550 = vld [vmem:[%s2 + $0x2b8] sm:$0xff]
        %v551 = vld [vmem:[%s2 + $0x2c0] sm:$0xff]
        %v552 = vld [vmem:[%s2 + $0x2c8] sm:$0xff]
        %v553 = vld [vmem:[%s2 + $0x2d0] sm:$0xff]
        %v554 = vld [vmem:[%s2 + $0x2d8] sm:$0xff]
        %v555 = vld [vmem:[%s2 + $0x2e0] sm:$0xff]
        %v556 = vld [vmem:[%s2 + $0x2e8] sm:$0xff]
        %v557 = vld [vmem:[%s2 + $0x2f0] sm:$0xff]
        %v558 = vld [vmem:[%s2 + $0x2f8] sm:$0xff]
        %v559 = vld [vmem:[%s2 + $0x300] sm:$0xff]
        %v560 = vld [vmem:[%s2 + $0x308] sm:$0xff]
        %v561 = vld [vmem:[%s2 + $0x310] sm:$0xff]
        %v562 = vld [vmem:[%s2 + $0x318] sm:$0xff]
        %v563 = vld [vmem:[%s2 + $0x320] sm:$0xff]
        %v564 = vld [vmem:[%s2 + $0x328] sm:$0xff]
        %v565 = vld [vmem:[%s2 + $0x330] sm:$0xff]
        %v566 = vld [vmem:[%s2 + $0x338] sm:$0xff]
        %v567 = vld [vmem:[%s2 + $0x340] sm:$0xff]
        %v568 = vld [vmem:[%s2 + $0x348] sm:$0xff]
        %v569 = vld [vmem:[%s2 + $0x350] sm:$0xff]
        %v570 = vld [vmem:[%s2 + $0x358] sm:$0xff]
        %v571 = vld [vmem:[%s2 + $0x360] sm:$0xff]
        %v572 = vld [vmem:[%s2 + $0x368] sm:$0xff]
        %v573 = vld [vmem:[%s2 + $0x370] sm:$0xff]
        %v574 = vld [vmem:[%s2 + $0x378] sm:$0xff]
        %v575 = vld [vmem:[%s2 + $0x380] sm:$0xff]
        %v576 = vld [vmem:[%s2 + $0x388] sm:$0xff]
        %v577 = vld [vmem:[%s2 + $0x390] sm:$0xff]
        %v578 = vld [vmem:[%s2 + $0x398] sm:$0xff]
        %v579 = vld [vmem:[%s2 + $0x3a0] sm:$0xff]
        %v580 = vld [vmem:[%s2 + $0x3a8] sm:$0xff]
        %v581 = vld [vmem:[%s2 + $0x3b0] sm:$0xff]
        %v582 = vld [vmem:[%s2 + $0x3b8] sm:$0xff]
        %v583 = vld [vmem:[%s2 + $0x3c0] sm:$0xff]
        %v584 = vld [vmem:[%s2 + $0x3c8] sm:$0xff]
        %v585 = vld [vmem:[%s2 + $0x3d0] sm:$0xff]
        %v586 = vld [vmem:[%s2 + $0x3d8] sm:$0xff]
        %v587 = vld [vmem:[%s2 + $0x3e0] sm:$0xff]
        %v588 = vld [vmem:[%s2 + $0x3e8] sm:$0xff]
        %v589 = vld [vmem:[%s2 + $0x3f0] sm:$0xff]
        %v590 = vld [vmem:[%s2 + $0x3f8] sm:$0xff]
        %v591 = vld [vmem:[%s2 + $0x400] sm:$0xff]
        %v592 = vld [vmem:[%s2 + $0x408] sm:$0xff]
        %v593 = vld [vmem:[%s2 + $0x410] sm:$0xff]
        %v594 = vld [vmem:[%s2 + $0x418] sm:$0xff]
        %v595 = vld [vmem:[%s2 + $0x420] sm:$0xff]
        %v596 = vld [vmem:[%s2 + $0x428] sm:$0xff]
        %v597 = vld [vmem:[%s2 + $0x430] sm:$0xff]
        %v598 = vld [vmem:[%s2 + $0x438] sm:$0xff]
        %v599 = vld [vmem:[%s2 + $0x440] sm:$0xff]
        %v600 = vld [vmem:[%s2 + $0x448] sm:$0xff]
        %v601 = vld [vmem:[%s2 + $0x450] sm:$0xff]
        %v602 = vld [vmem:[%s2 + $0x458] sm:$0xff]
        %v603 = vld [vmem:[%s2 + $0x460] sm:$0xff]
        %v604 = vld [vmem:[%s2 + $0x468] sm:$0xff]
        %v605 = vld [vmem:[%s2 + $0x470] sm:$0xff]
        %v606 = vld [vmem:[%s2 + $0x478] sm:$0xff]
        %v607 = vld [vmem:[%s2 + $0x480] sm:$0xff]
        %v608 = vld [vmem:[%s2 + $0x488] sm:$0xff]
        %v609 = vld [vmem:[%s2 + $0x490] sm:$0xff]
        %v610 = vld [vmem:[%s2 + $0x498] sm:$0xff]
        %v611 = vld [vmem:[%s2 + $0x4a0] sm:$0xff]
        %v612 = vld [vmem:[%s2 + $0x4a8] sm:$0xff]
        %v613 = vld [vmem:[%s2 + $0x4b0] sm:$0xff]
        %v614 = vld [vmem:[%s2 + $0x4b8] sm:$0xff]
        %v615 = vld [vmem:[%s2 + $0x4c0] sm:$0xff]
        %v616 = vld [vmem:[%s2 + $0x4c8] sm:$0xff]
        %v617 = vld [vmem:[%s2 + $0x4d0] sm:$0xff]
        %v618 = vld [vmem:[%s2 + $0x4d8] sm:$0xff]
        %v619 = vld [vmem:[%s2 + $0x4e0] sm:$0xff]
        %v620 = vld [vmem:[%s2 + $0x4e8] sm:$0xff]
        %v621 = vld [vmem:[%s2 + $0x4f0] sm:$0xff]
        %v622 = vld [vmem:[%s2 + $0x4f8] sm:$0xff]
        %v623 = vld [vmem:[%s2 + $0x500] sm:$0xff]
        %v624 = vld [vmem:[%s2 + $0x508] sm:$0xff]
        %v625 = vld [vmem:[%s2 + $0x510] sm:$0xff]
        %v626 = vld [vmem:[%s2 + $0x518] sm:$0xff]
        %v627 = vld [vmem:[%s2 + $0x520] sm:$0xff]
        %v628 = vld [vmem:[%s2 + $0x528] sm:$0xff]
        %v629 = vld [vmem:[%s2 + $0x530] sm:$0xff]
        %v630 = vld [vmem:[%s2 + $0x538] sm:$0xff]
        %v631 = vld [vmem:[%s2 + $0x540] sm:$0xff]
        %v632 = vld [vmem:[%s2 + $0x548] sm:$0xff]
        %v633 = vld [vmem:[%s2 + $0x550] sm:$0xff]
        %v634 = vld [vmem:[%s2 + $0x558] sm:$0xff]
        %v635 = vld [vmem:[%s2 + $0x560] sm:$0xff]
        %v636 = vld [vmem:[%s2 + $0x568] sm:$0xff]
        %v637 = vld [vmem:[%s2 + $0x570] sm:$0xff]
        %v638 = vld [vmem:[%s2 + $0x578] sm:$0xff]
        %v639 = vld [vmem:[%s2 + $0x580] sm:$0xff]
        %v640 = vld [vmem:[%s2 + $0x588] sm:$0xff]
        %v641 = vld [vmem:[%s2 + $0x590] sm:$0xff]
        %v642 = vld [vmem:[%s2 + $0x598] sm:$0xff]
        %v643 = vld [vmem:[%s2 + $0x5a0] sm:$0xff]
        %v644 = vld [vmem:[%s2 + $0x5a8] sm:$0xff]
        %v645 = vld [vmem:[%s2 + $0x5b0] sm:$0xff]
        %v646 = vld [vmem:[%s2 + $0x5b8] sm:$0xff]
        %v647 = vld [vmem:[%s2 + $0x5c0] sm:$0xff]
        %v648 = vld [vmem:[%s2 + $0x5c8] sm:$0xff]
        %v649 = vld [vmem:[%s2 + $0x5d0] sm:$0xff]
        %v650 = vld [vmem:[%s2 + $0x5d8] sm:$0xff]
        %v651 = vld [vmem:[%s2 + $0x5e0] sm:$0xff]
        %v652 = vld [vmem:[%s2 + $0x5e8] sm:$0xff]
        %v653 = vld [vmem:[%s2 + $0x5f0] sm:$0xff]
        %v654 = vld [vmem:[%s2 + $0x5f8] sm:$0xff]
        %v655 = vld [vmem:[%s3] sm:$0x3f]
        %v657 = vlaneseq
        %v658 = vshrl.u32 %v657, 7
        %v659 = vsub.s32 0, %v658
        %v660 = vrot.slane %v655, %v659
        %v661 = vlaneseq
        %v662 = vshrl.u32 %v661, 7
        %v663 = vsub.s32 1, %v662
        %v664 = vrot.slane %v655, %v663
        %v665 = vlaneseq
        %v666 = vshrl.u32 %v665, 7
        %v667 = vsub.s32 2, %v666
        %v668 = vrot.slane %v655, %v667
        %v669 = vlaneseq
        %v670 = vshrl.u32 %v669, 7
        %v671 = vsub.s32 3, %v670
        %v672 = vrot.slane %v655, %v671
        %v673 = vlaneseq
        %v674 = vshrl.u32 %v673, 7
        %v675 = vsub.s32 4, %v674
        %v676 = vrot.slane %v655, %v675
        %v677 = vlaneseq
        %v678 = vshrl.u32 %v677, 7
        %v679 = vsub.s32 5, %v678
        %v680 = vrot.slane %v655, %v679
        %687 = vmatprep.subr.mxu0 %v464
        %688 = vmatpush1.msra.mxu0 %v463
        %689 = vmatprep.subr.mxu0 %v470
        %690 = vmatpush1.msra.mxu0 %v469
        %691 = vmatprep.subr.mxu0 %v476
        %692 = vmatpush1.msra.mxu0 %v475
        %693 = vmatprep.subr.mxu0 %v482
        %694 = vmatpush1.msra.mxu0 %v481
        %695 = vmatprep.subr.mxu0 %v488
        %696 = vmatpush1.msra.mxu0 %v487
        %697 = vmatprep.subr.mxu0 %v494
        %698 = vmatpush1.msra.mxu0 %v493
        %699 = vmatprep.subr.mxu0 %v500
        %700 = vmatpush1.msra.mxu0 %v499
        %701 = vmatprep.subr.mxu0 %v506
        %702 = vmatpush1.msra.mxu0 %v505
        %703 = vmatprep.subr.mxu0 %v512
        %704 = vmatpush1.msra.mxu0 %v511
        %705 = vmatprep.subr.mxu0 %v518
        %706 = vmatpush1.msra.mxu0 %v517
        %707 = vmatprep.subr.mxu0 %v524
        %708 = vmatpush1.msra.mxu0 %v523
        %709 = vmatprep.subr.mxu0 %v530
        %710 = vmatpush1.msra.mxu0 %v529
        %711 = vmatprep.subr.mxu0 %v536
        %712 = vmatpush1.msra.mxu0 %v535
        %713 = vmatprep.subr.mxu0 %v542
        %714 = vmatpush1.msra.mxu0 %v541
        %715 = vmatprep.subr.mxu0 %v548
        %716 = vmatpush1.msra.mxu0 %v547
        %717 = vmatprep.subr.mxu0 %v554
        %718 = vmatpush1.msra.mxu0 %v553
        %719 = vmatprep.subr.mxu0 %v560
        %720 = vmatpush1.msra.mxu0 %v559
        %721 = vmatprep.subr.mxu0 %v566
        %722 = vmatpush1.msra.mxu0 %v565
        %723 = vmatprep.subr.mxu0 %v572
        %724 = vmatpush1.msra.mxu0 %v571
        %725 = vmatprep.subr.mxu0 %v578
        %726 = vmatpush1.msra.mxu0 %v577
        %727 = vmatprep.subr.mxu0 %v584
        %728 = vmatpush1.msra.mxu0 %v583
        %729 = vmatprep.subr.mxu0 %v590
        %730 = vmatpush1.msra.mxu0 %v589
        %731 = vmatprep.subr.mxu0 %v596
        %732 = vmatpush1.msra.mxu0 %v595
        %733 = vmatprep.subr.mxu0 %v602
        %734 = vmatpush1.msra.mxu0 %v601
        %735 = vmatprep.subr.mxu0 %v608
        %736 = vmatpush1.msra.mxu0 %v607
        %737 = vmatprep.subr.mxu0 %v614
        %738 = vmatpush1.msra.mxu0 %v613
        %739 = vmatprep.subr.mxu0 %v620
        %740 = vmatpush1.msra.mxu0 %v619
        %741 = vmatprep.subr.mxu0 %v626
        %742 = vmatpush1.msra.mxu0 %v625
        %743 = vmatprep.subr.mxu0 %v632
        %744 = vmatpush1.msra.mxu0 %v631
        %745 = vmatprep.subr.mxu0 %v638
        %746 = vmatpush1.msra.mxu0 %v637
        %747 = vmatprep.subr.mxu0 %v644
        %748 = vmatpush1.msra.mxu0 %v643
        %749 = vmatprep.subr.mxu0 %v650
        %750 = vmatpush1.msra.mxu0 %v649
        %751 = vmatprep.mubr.f32.mxu0 %v460
        %752 = vmatmul.mubr.f32.gmra.mrb[0].mxu0 %v459
        %v753 = vpop.f32.mrb[0].mxu0
        %v754 = vadd.f32 %v660, %v753
        %v755 = vpop.f32.mrb[0].mxu0
        %v756 = vadd.f32 %v664, %v755
        %757 = vdwg.mxu0
        %758 = vmatprep.subr.mxu0 %v466
        %759 = vmatpush1.msra.mxu0 %v465
        %760 = vmatprep.subr.mxu0 %v472
        %761 = vmatpush1.msra.mxu0 %v471
        %762 = vmatprep.subr.mxu0 %v478
        %763 = vmatpush1.msra.mxu0 %v477
        %764 = vmatprep.subr.mxu0 %v484
        %765 = vmatpush1.msra.mxu0 %v483
        %766 = vmatprep.subr.mxu0 %v490
        %767 = vmatpush1.msra.mxu0 %v489
        %768 = vmatprep.subr.mxu0 %v496
        %769 = vmatpush1.msra.mxu0 %v495
        %770 = vmatprep.subr.mxu0 %v502
        %771 = vmatpush1.msra.mxu0 %v501
        %772 = vmatprep.subr.mxu0 %v508
        %773 = vmatpush1.msra.mxu0 %v507
        %774 = vmatprep.subr.mxu0 %v514
        %775 = vmatpush1.msra.mxu0 %v513
        %776 = vmatprep.subr.mxu0 %v520
        %777 = vmatpush1.msra.mxu0 %v519
        %778 = vmatprep.subr.mxu0 %v526
        %779 = vmatpush1.msra.mxu0 %v525
        %780 = vmatprep.subr.mxu0 %v532
        %781 = vmatpush1.msra.mxu0 %v531
        %782 = vmatprep.subr.mxu0 %v538
        %783 = vmatpush1.msra.mxu0 %v537
        %784 = vmatprep.subr.mxu0 %v544
        %785 = vmatpush1.msra.mxu0 %v543
        %786 = vmatprep.subr.mxu0 %v550
        %787 = vmatpush1.msra.mxu0 %v549
        %788 = vmatprep.subr.mxu0 %v556
        %789 = vmatpush1.msra.mxu0 %v555
        %790 = vmatprep.subr.mxu0 %v562
        %791 = vmatpush1.msra.mxu0 %v561
        %792 = vmatprep.subr.mxu0 %v568
        %793 = vmatpush1.msra.mxu0 %v567
        %794 = vmatprep.subr.mxu0 %v574
        %795 = vmatpush1.msra.mxu0 %v573
        %796 = vmatprep.subr.mxu0 %v580
        %797 = vmatpush1.msra.mxu0 %v579
        %798 = vmatprep.subr.mxu0 %v586
        %799 = vmatpush1.msra.mxu0 %v585
        %800 = vmatprep.subr.mxu0 %v592
        %801 = vmatpush1.msra.mxu0 %v591
        %802 = vmatprep.subr.mxu0 %v598
        %803 = vmatpush1.msra.mxu0 %v597
        %804 = vmatprep.subr.mxu0 %v604
        %805 = vmatpush1.msra.mxu0 %v603
        %806 = vmatprep.subr.mxu0 %v610
        %807 = vmatpush1.msra.mxu0 %v609
        %808 = vmatprep.subr.mxu0 %v616
        %809 = vmatpush1.msra.mxu0 %v615
        %810 = vmatprep.subr.mxu0 %v622
        %811 = vmatpush1.msra.mxu0 %v621
        %812 = vmatprep.subr.mxu0 %v628
        %813 = vmatpush1.msra.mxu0 %v627
        %814 = vmatprep.subr.mxu0 %v634
        %815 = vmatpush1.msra.mxu0 %v633
        %816 = vmatprep.subr.mxu0 %v640
        %817 = vmatpush1.msra.mxu0 %v639
        %818 = vmatprep.subr.mxu0 %v646
        %819 = vmatpush1.msra.mxu0 %v645
        %820 = vmatprep.subr.mxu0 %v652
        %821 = vmatpush1.msra.mxu0 %v651
        %822 = vmatprep.mubr.f32.mxu0 %v460
        %823 = vmatmul.mubr.f32.gmra.mrb[0].mxu0 %v459
        %v824 = vpop.f32.mrb[0].mxu0
        %v825 = vadd.f32 %v668, %v824
        %v826 = vpop.f32.mrb[0].mxu0
        %v827 = vadd.f32 %v672, %v826
        %828 = vdwg.mxu0
        %829 = vmatprep.subr.mxu0 %v468
        %830 = vmatpush1.msra.mxu0 %v467
        %831 = vmatprep.subr.mxu0 %v474
        %832 = vmatpush1.msra.mxu0 %v473
        %833 = vmatprep.subr.mxu0 %v480
        %834 = vmatpush1.msra.mxu0 %v479
        %835 = vmatprep.subr.mxu0 %v486
        %836 = vmatpush1.msra.mxu0 %v485
        %837 = vmatprep.subr.mxu0 %v492
        %838 = vmatpush1.msra.mxu0 %v491
        %839 = vmatprep.subr.mxu0 %v498
        %840 = vmatpush1.msra.mxu0 %v497
        %841 = vmatprep.subr.mxu0 %v504
        %842 = vmatpush1.msra.mxu0 %v503
        %843 = vmatprep.subr.mxu0 %v510
        %844 = vmatpush1.msra.mxu0 %v509
        %845 = vmatprep.subr.mxu0 %v516
        %846 = vmatpush1.msra.mxu0 %v515
        %847 = vmatprep.subr.mxu0 %v522
        %848 = vmatpush1.msra.mxu0 %v521
        %849 = vmatprep.subr.mxu0 %v528
        %850 = vmatpush1.msra.mxu0 %v527
        %851 = vmatprep.subr.mxu0 %v534
        %852 = vmatpush1.msra.mxu0 %v533
        %853 = vmatprep.subr.mxu0 %v540
        %854 = vmatpush1.msra.mxu0 %v539
        %855 = vmatprep.subr.mxu0 %v546
        %856 = vmatpush1.msra.mxu0 %v545
        %857 = vmatprep.subr.mxu0 %v552
        %858 = vmatpush1.msra.mxu0 %v551
        %859 = vmatprep.subr.mxu0 %v558
        %860 = vmatpush1.msra.mxu0 %v557
        %861 = vmatprep.subr.mxu0 %v564
        %862 = vmatpush1.msra.mxu0 %v563
        %863 = vmatprep.subr.mxu0 %v570
        %864 = vmatpush1.msra.mxu0 %v569
        %865 = vmatprep.subr.mxu0 %v576
        %866 = vmatpush1.msra.mxu0 %v575
        %867 = vmatprep.subr.mxu0 %v582
        %868 = vmatpush1.msra.mxu0 %v581
        %869 = vmatprep.subr.mxu0 %v588
        %870 = vmatpush1.msra.mxu0 %v587
        %871 = vmatprep.subr.mxu0 %v594
        %872 = vmatpush1.msra.mxu0 %v593
        %873 = vmatprep.subr.mxu0 %v600
        %874 = vmatpush1.msra.mxu0 %v599
        %875 = vmatprep.subr.mxu0 %v606
        %876 = vmatpush1.msra.mxu0 %v605
        %877 = vmatprep.subr.mxu0 %v612
        %878 = vmatpush1.msra.mxu0 %v611
        %879 = vmatprep.subr.mxu0 %v618
        %880 = vmatpush1.msra.mxu0 %v617
        %881 = vmatprep.subr.mxu0 %v624
        %882 = vmatpush1.msra.mxu0 %v623
        %883 = vmatprep.subr.mxu0 %v630
        %884 = vmatpush1.msra.mxu0 %v629
        %885 = vmatprep.subr.mxu0 %v636
        %886 = vmatpush1.msra.mxu0 %v635
        %887 = vmatprep.subr.mxu0 %v642
        %888 = vmatpush1.msra.mxu0 %v641
        %889 = vmatprep.subr.mxu0 %v648
        %890 = vmatpush1.msra.mxu0 %v647
        %891 = vmatprep.subr.mxu0 %v654
        %892 = vmatpush1.msra.mxu0 %v653
        %893 = vmatprep.mubr.f32.mxu0 %v460
        %894 = vmatmul.mubr.f32.gmra.mrb[0].mxu0 %v459
        %v895 = vpop.f32.mrb[0].mxu0
        %v896 = vadd.f32 %v676, %v895
        %v897 = vpop.f32.mrb[0].mxu0
        %v898 = vadd.f32 %v680, %v897
        %899 = vdwg.mxu0
        %v900 = vld [vmem:[%s4] sm:$0xff]
        %v901 = vld [vmem:[%s4 + $0x8] sm:$0xff]
        %v902 = vld [vmem:[%s4 + $0x10] sm:$0xff]
        %v903 = vld [vmem:[%s4 + $0x18] sm:$0xff]
        %v904 = vld [vmem:[%s4 + $0x20] sm:$0xff]
        %v905 = vld [vmem:[%s4 + $0x28] sm:$0xff]
        %v906 = vld [vmem:[%s4 + $0x30] sm:$0xff]
        %v907 = vld [vmem:[%s4 + $0x38] sm:$0xff]
        %v908 = vld [vmem:[%s4 + $0x40] sm:$0xff]
        %v909 = vld [vmem:[%s4 + $0x48] sm:$0xff]
        %v910 = vld [vmem:[%s4 + $0x50] sm:$0xff]
        %v911 = vld [vmem:[%s4 + $0x58] sm:$0xff]
        %v912 = vld [vmem:[%s4 + $0x60] sm:$0xff]
        %v913 = vld [vmem:[%s4 + $0x68] sm:$0xff]
        %v914 = vld [vmem:[%s4 + $0x70] sm:$0xff]
        %v915 = vld [vmem:[%s4 + $0x78] sm:$0xff]
        %v916 = vld [vmem:[%s4 + $0x80] sm:$0xff]
        %v917 = vld [vmem:[%s4 + $0x88] sm:$0xff]
        %v918 = vld [vmem:[%s4 + $0x90] sm:$0xff]
        %v919 = vld [vmem:[%s4 + $0x98] sm:$0xff]
        %v920 = vld [vmem:[%s4 + $0xa0] sm:$0xff]
        %v921 = vld [vmem:[%s4 + $0xa8] sm:$0xff]
        %v922 = vld [vmem:[%s4 + $0xb0] sm:$0xff]
        %v923 = vld [vmem:[%s4 + $0xb8] sm:$0xff]
        %v924 = vld [vmem:[%s4 + $0xc0] sm:$0xff]
        %v925 = vld [vmem:[%s4 + $0xc8] sm:$0xff]
        %v926 = vld [vmem:[%s4 + $0xd0] sm:$0xff]
        %v927 = vld [vmem:[%s4 + $0xd8] sm:$0xff]
        %v928 = vld [vmem:[%s4 + $0xe0] sm:$0xff]
        %v929 = vld [vmem:[%s4 + $0xe8] sm:$0xff]
        %v930 = vld [vmem:[%s4 + $0xf0] sm:$0xff]
        %v931 = vld [vmem:[%s4 + $0xf8] sm:$0xff]
        %v932 = vld [vmem:[%s4 + $0x100] sm:$0xff]
        %v933 = vld [vmem:[%s4 + $0x108] sm:$0xff]
        %v934 = vld [vmem:[%s4 + $0x110] sm:$0xff]
        %v935 = vld [vmem:[%s4 + $0x118] sm:$0xff]
        %v936 = vld [vmem:[%s4 + $0x120] sm:$0xff]
        %v937 = vld [vmem:[%s4 + $0x128] sm:$0xff]
        %v938 = vld [vmem:[%s4 + $0x130] sm:$0xff]
        %v939 = vld [vmem:[%s4 + $0x138] sm:$0xff]
        %v940 = vld [vmem:[%s4 + $0x140] sm:$0xff]
        %v941 = vld [vmem:[%s4 + $0x148] sm:$0xff]
        %v942 = vld [vmem:[%s4 + $0x150] sm:$0xff]
        %v943 = vld [vmem:[%s4 + $0x158] sm:$0xff]
        %v944 = vld [vmem:[%s4 + $0x160] sm:$0xff]
        %v945 = vld [vmem:[%s4 + $0x168] sm:$0xff]
        %v946 = vld [vmem:[%s4 + $0x170] sm:$0xff]
        %v947 = vld [vmem:[%s4 + $0x178] sm:$0xff]
        %v948 = vld [vmem:[%s4 + $0x180] sm:$0xff]
        %v949 = vld [vmem:[%s4 + $0x188] sm:$0xff]
        %v950 = vld [vmem:[%s4 + $0x190] sm:$0xff]
        %v951 = vld [vmem:[%s4 + $0x198] sm:$0xff]
        %v952 = vld [vmem:[%s4 + $0x1a0] sm:$0xff]
        %v953 = vld [vmem:[%s4 + $0x1a8] sm:$0xff]
        %v954 = vld [vmem:[%s4 + $0x1b0] sm:$0xff]
        %v955 = vld [vmem:[%s4 + $0x1b8] sm:$0xff]
        %v956 = vld [vmem:[%s4 + $0x1c0] sm:$0xff]
        %v957 = vld [vmem:[%s4 + $0x1c8] sm:$0xff]
        %v958 = vld [vmem:[%s4 + $0x1d0] sm:$0xff]
        %v959 = vld [vmem:[%s4 + $0x1d8] sm:$0xff]
        %v960 = vld [vmem:[%s4 + $0x1e0] sm:$0xff]
        %v961 = vld [vmem:[%s4 + $0x1e8] sm:$0xff]
        %v962 = vld [vmem:[%s4 + $0x1f0] sm:$0xff]
        %v963 = vld [vmem:[%s4 + $0x1f8] sm:$0xff]
        %v964 = vld [vmem:[%s4 + $0x200] sm:$0xff]
        %v965 = vld [vmem:[%s4 + $0x208] sm:$0xff]
        %v966 = vld [vmem:[%s4 + $0x210] sm:$0xff]
        %v967 = vld [vmem:[%s4 + $0x218] sm:$0xff]
        %v968 = vld [vmem:[%s4 + $0x220] sm:$0xff]
        %v969 = vld [vmem:[%s4 + $0x228] sm:$0xff]
        %v970 = vld [vmem:[%s4 + $0x230] sm:$0xff]
        %v971 = vld [vmem:[%s4 + $0x238] sm:$0xff]
        %v972 = vld [vmem:[%s4 + $0x240] sm:$0xff]
        %v973 = vld [vmem:[%s4 + $0x248] sm:$0xff]
        %v974 = vld [vmem:[%s4 + $0x250] sm:$0xff]
        %v975 = vld [vmem:[%s4 + $0x258] sm:$0xff]
        %v976 = vld [vmem:[%s4 + $0x260] sm:$0xff]
        %v977 = vld [vmem:[%s4 + $0x268] sm:$0xff]
        %v978 = vld [vmem:[%s4 + $0x270] sm:$0xff]
        %v979 = vld [vmem:[%s4 + $0x278] sm:$0xff]
        %v980 = vld [vmem:[%s4 + $0x280] sm:$0xff]
        %v981 = vld [vmem:[%s4 + $0x288] sm:$0xff]
        %v982 = vld [vmem:[%s4 + $0x290] sm:$0xff]
        %v983 = vld [vmem:[%s4 + $0x298] sm:$0xff]
        %v984 = vld [vmem:[%s4 + $0x2a0] sm:$0xff]
        %v985 = vld [vmem:[%s4 + $0x2a8] sm:$0xff]
        %v986 = vld [vmem:[%s4 + $0x2b0] sm:$0xff]
        %v987 = vld [vmem:[%s4 + $0x2b8] sm:$0xff]
        %v988 = vld [vmem:[%s4 + $0x2c0] sm:$0xff]
        %v989 = vld [vmem:[%s4 + $0x2c8] sm:$0xff]
        %v990 = vld [vmem:[%s4 + $0x2d0] sm:$0xff]
        %v991 = vld [vmem:[%s4 + $0x2d8] sm:$0xff]
        %v992 = vld [vmem:[%s4 + $0x2e0] sm:$0xff]
        %v993 = vld [vmem:[%s4 + $0x2e8] sm:$0xff]
        %v994 = vld [vmem:[%s4 + $0x2f0] sm:$0xff]
        %v995 = vld [vmem:[%s4 + $0x2f8] sm:$0xff]
        %v996 = vld [vmem:[%s4 + $0x300] sm:$0xff]
        %v997 = vld [vmem:[%s4 + $0x308] sm:$0xff]
        %v998 = vld [vmem:[%s4 + $0x310] sm:$0xff]
        %v999 = vld [vmem:[%s4 + $0x318] sm:$0xff]
        %v1000 = vld [vmem:[%s4 + $0x320] sm:$0xff]
        %v1001 = vld [vmem:[%s4 + $0x328] sm:$0xff]
        %v1002 = vld [vmem:[%s4 + $0x330] sm:$0xff]
        %v1003 = vld [vmem:[%s4 + $0x338] sm:$0xff]
        %v1004 = vld [vmem:[%s4 + $0x340] sm:$0xff]
        %v1005 = vld [vmem:[%s4 + $0x348] sm:$0xff]
        %v1006 = vld [vmem:[%s4 + $0x350] sm:$0xff]
        %v1007 = vld [vmem:[%s4 + $0x358] sm:$0xff]
        %v1008 = vld [vmem:[%s4 + $0x360] sm:$0xff]
        %v1009 = vld [vmem:[%s4 + $0x368] sm:$0xff]
        %v1010 = vld [vmem:[%s4 + $0x370] sm:$0xff]
        %v1011 = vld [vmem:[%s4 + $0x378] sm:$0xff]
        %v1012 = vld [vmem:[%s4 + $0x380] sm:$0xff]
        %v1013 = vld [vmem:[%s4 + $0x388] sm:$0xff]
        %v1014 = vld [vmem:[%s4 + $0x390] sm:$0xff]
        %v1015 = vld [vmem:[%s4 + $0x398] sm:$0xff]
        %v1016 = vld [vmem:[%s4 + $0x3a0] sm:$0xff]
        %v1017 = vld [vmem:[%s4 + $0x3a8] sm:$0xff]
        %v1018 = vld [vmem:[%s4 + $0x3b0] sm:$0xff]
        %v1019 = vld [vmem:[%s4 + $0x3b8] sm:$0xff]
        %v1020 = vld [vmem:[%s4 + $0x3c0] sm:$0xff]
        %v1021 = vld [vmem:[%s4 + $0x3c8] sm:$0xff]
        %v1022 = vld [vmem:[%s4 + $0x3d0] sm:$0xff]
        %v1023 = vld [vmem:[%s4 + $0x3d8] sm:$0xff]
        %v1024 = vld [vmem:[%s4 + $0x3e0] sm:$0xff]
        %v1025 = vld [vmem:[%s4 + $0x3e8] sm:$0xff]
        %v1026 = vld [vmem:[%s4 + $0x3f0] sm:$0xff]
        %v1027 = vld [vmem:[%s4 + $0x3f8] sm:$0xff]
        %v1028 = vld [vmem:[%s4 + $0x400] sm:$0xff]
        %v1029 = vld [vmem:[%s4 + $0x408] sm:$0xff]
        %v1030 = vld [vmem:[%s4 + $0x410] sm:$0xff]
        %v1031 = vld [vmem:[%s4 + $0x418] sm:$0xff]
        %v1032 = vld [vmem:[%s4 + $0x420] sm:$0xff]
        %v1033 = vld [vmem:[%s4 + $0x428] sm:$0xff]
        %v1034 = vld [vmem:[%s4 + $0x430] sm:$0xff]
        %v1035 = vld [vmem:[%s4 + $0x438] sm:$0xff]
        %v1036 = vld [vmem:[%s4 + $0x440] sm:$0xff]
        %v1037 = vld [vmem:[%s4 + $0x448] sm:$0xff]
        %v1038 = vld [vmem:[%s4 + $0x450] sm:$0xff]
        %v1039 = vld [vmem:[%s4 + $0x458] sm:$0xff]
        %v1040 = vld [vmem:[%s4 + $0x460] sm:$0xff]
        %v1041 = vld [vmem:[%s4 + $0x468] sm:$0xff]
        %v1042 = vld [vmem:[%s4 + $0x470] sm:$0xff]
        %v1043 = vld [vmem:[%s4 + $0x478] sm:$0xff]
        %v1044 = vld [vmem:[%s4 + $0x480] sm:$0xff]
        %v1045 = vld [vmem:[%s4 + $0x488] sm:$0xff]
        %v1046 = vld [vmem:[%s4 + $0x490] sm:$0xff]
        %v1047 = vld [vmem:[%s4 + $0x498] sm:$0xff]
        %v1048 = vld [vmem:[%s4 + $0x4a0] sm:$0xff]
        %v1049 = vld [vmem:[%s4 + $0x4a8] sm:$0xff]
        %v1050 = vld [vmem:[%s4 + $0x4b0] sm:$0xff]
        %v1051 = vld [vmem:[%s4 + $0x4b8] sm:$0xff]
        %v1052 = vld [vmem:[%s4 + $0x4c0] sm:$0xff]
        %v1053 = vld [vmem:[%s4 + $0x4c8] sm:$0xff]
        %v1054 = vld [vmem:[%s4 + $0x4d0] sm:$0xff]
        %v1055 = vld [vmem:[%s4 + $0x4d8] sm:$0xff]
        %v1056 = vld [vmem:[%s4 + $0x4e0] sm:$0xff]
        %v1057 = vld [vmem:[%s4 + $0x4e8] sm:$0xff]
        %v1058 = vld [vmem:[%s4 + $0x4f0] sm:$0xff]
        %v1059 = vld [vmem:[%s4 + $0x4f8] sm:$0xff]
        %v1060 = vld [vmem:[%s4 + $0x500] sm:$0xff]
        %v1061 = vld [vmem:[%s4 + $0x508] sm:$0xff]
        %v1062 = vld [vmem:[%s4 + $0x510] sm:$0xff]
        %v1063 = vld [vmem:[%s4 + $0x518] sm:$0xff]
        %v1064 = vld [vmem:[%s4 + $0x520] sm:$0xff]
        %v1065 = vld [vmem:[%s4 + $0x528] sm:$0xff]
        %v1066 = vld [vmem:[%s4 + $0x530] sm:$0xff]
        %v1067 = vld [vmem:[%s4 + $0x538] sm:$0xff]
        %v1068 = vld [vmem:[%s4 + $0x540] sm:$0xff]
        %v1069 = vld [vmem:[%s4 + $0x548] sm:$0xff]
        %v1070 = vld [vmem:[%s4 + $0x550] sm:$0xff]
        %v1071 = vld [vmem:[%s4 + $0x558] sm:$0xff]
        %v1072 = vld [vmem:[%s4 + $0x560] sm:$0xff]
        %v1073 = vld [vmem:[%s4 + $0x568] sm:$0xff]
        %v1074 = vld [vmem:[%s4 + $0x570] sm:$0xff]
        %v1075 = vld [vmem:[%s4 + $0x578] sm:$0xff]
        %v1076 = vld [vmem:[%s4 + $0x580] sm:$0xff]
        %v1077 = vld [vmem:[%s4 + $0x588] sm:$0xff]
        %v1078 = vld [vmem:[%s4 + $0x590] sm:$0xff]
        %v1079 = vld [vmem:[%s4 + $0x598] sm:$0xff]
        %v1080 = vld [vmem:[%s4 + $0x5a0] sm:$0xff]
        %v1081 = vld [vmem:[%s4 + $0x5a8] sm:$0xff]
        %v1082 = vld [vmem:[%s4 + $0x5b0] sm:$0xff]
        %v1083 = vld [vmem:[%s4 + $0x5b8] sm:$0xff]
        %v1084 = vld [vmem:[%s4 + $0x5c0] sm:$0xff]
        %v1085 = vld [vmem:[%s4 + $0x5c8] sm:$0xff]
        %v1086 = vld [vmem:[%s4 + $0x5d0] sm:$0xff]
        %v1087 = vld [vmem:[%s4 + $0x5d8] sm:$0xff]
        %v1088 = vld [vmem:[%s4 + $0x5e0] sm:$0xff]
        %v1089 = vld [vmem:[%s4 + $0x5e8] sm:$0xff]
        %v1090 = vld [vmem:[%s4 + $0x5f0] sm:$0xff]
        %v1091 = vld [vmem:[%s4 + $0x5f8] sm:$0xff]
        %v1092 = vld [vmem:[%s5] sm:$0x3f]
        %v1094 = vlaneseq
        %v1095 = vshrl.u32 %v1094, 7
        %v1096 = vsub.s32 0, %v1095
        %v1097 = vrot.slane %v1092, %v1096
        %v1098 = vlaneseq
        %v1099 = vshrl.u32 %v1098, 7
        %v1100 = vsub.s32 1, %v1099
        %v1101 = vrot.slane %v1092, %v1100
        %v1102 = vlaneseq
        %v1103 = vshrl.u32 %v1102, 7
        %v1104 = vsub.s32 2, %v1103
        %v1105 = vrot.slane %v1092, %v1104
        %v1106 = vlaneseq
        %v1107 = vshrl.u32 %v1106, 7
        %v1108 = vsub.s32 3, %v1107
        %v1109 = vrot.slane %v1092, %v1108
        %v1110 = vlaneseq
        %v1111 = vshrl.u32 %v1110, 7
        %v1112 = vsub.s32 4, %v1111
        %v1113 = vrot.slane %v1092, %v1112
        %v1114 = vlaneseq
        %v1115 = vshrl.u32 %v1114, 7
        %v1116 = vsub.s32 5, %v1115
        %v1117 = vrot.slane %v1092, %v1116
        %1124 = vmatprep.subr.mxu0 %v901
        %1125 = vmatpush1.msra.mxu0 %v900
        %1126 = vmatprep.subr.mxu0 %v907
        %1127 = vmatpush1.msra.mxu0 %v906
        %1128 = vmatprep.subr.mxu0 %v913
        %1129 = vmatpush1.msra.mxu0 %v912
        %1130 = vmatprep.subr.mxu0 %v919
        %1131 = vmatpush1.msra.mxu0 %v918
        %1132 = vmatprep.subr.mxu0 %v925
        %1133 = vmatpush1.msra.mxu0 %v924
        %1134 = vmatprep.subr.mxu0 %v931
        %1135 = vmatpush1.msra.mxu0 %v930
        %1136 = vmatprep.subr.mxu0 %v937
        %1137 = vmatpush1.msra.mxu0 %v936
        %1138 = vmatprep.subr.mxu0 %v943
        %1139 = vmatpush1.msra.mxu0 %v942
        %1140 = vmatprep.subr.mxu0 %v949
        %1141 = vmatpush1.msra.mxu0 %v948
        %1142 = vmatprep.subr.mxu0 %v955
        %1143 = vmatpush1.msra.mxu0 %v954
        %1144 = vmatprep.subr.mxu0 %v961
        %1145 = vmatpush1.msra.mxu0 %v960
        %1146 = vmatprep.subr.mxu0 %v967
        %1147 = vmatpush1.msra.mxu0 %v966
        %1148 = vmatprep.subr.mxu0 %v973
        %1149 = vmatpush1.msra.mxu0 %v972
        %1150 = vmatprep.subr.mxu0 %v979
        %1151 = vmatpush1.msra.mxu0 %v978
        %1152 = vmatprep.subr.mxu0 %v985
        %1153 = vmatpush1.msra.mxu0 %v984
        %1154 = vmatprep.subr.mxu0 %v991
        %1155 = vmatpush1.msra.mxu0 %v990
        %1156 = vmatprep.subr.mxu0 %v997
        %1157 = vmatpush1.msra.mxu0 %v996
        %1158 = vmatprep.subr.mxu0 %v1003
        %1159 = vmatpush1.msra.mxu0 %v1002
        %1160 = vmatprep.subr.mxu0 %v1009
        %1161 = vmatpush1.msra.mxu0 %v1008
        %1162 = vmatprep.subr.mxu0 %v1015
        %1163 = vmatpush1.msra.mxu0 %v1014
        %1164 = vmatprep.subr.mxu0 %v1021
        %1165 = vmatpush1.msra.mxu0 %v1020
        %1166 = vmatprep.subr.mxu0 %v1027
        %1167 = vmatpush1.msra.mxu0 %v1026
        %1168 = vmatprep.subr.mxu0 %v1033
        %1169 = vmatpush1.msra.mxu0 %v1032
        %1170 = vmatprep.subr.mxu0 %v1039
        %1171 = vmatpush1.msra.mxu0 %v1038
        %1172 = vmatprep.subr.mxu0 %v1045
        %1173 = vmatpush1.msra.mxu0 %v1044
        %1174 = vmatprep.subr.mxu0 %v1051
        %1175 = vmatpush1.msra.mxu0 %v1050
        %1176 = vmatprep.subr.mxu0 %v1057
        %1177 = vmatpush1.msra.mxu0 %v1056
        %1178 = vmatprep.subr.mxu0 %v1063
        %1179 = vmatpush1.msra.mxu0 %v1062
        %1180 = vmatprep.subr.mxu0 %v1069
        %1181 = vmatpush1.msra.mxu0 %v1068
        %1182 = vmatprep.subr.mxu0 %v1075
        %1183 = vmatpush1.msra.mxu0 %v1074
        %1184 = vmatprep.subr.mxu0 %v1081
        %1185 = vmatpush1.msra.mxu0 %v1080
        %1186 = vmatprep.subr.mxu0 %v1087
        %1187 = vmatpush1.msra.mxu0 %v1086
        %1188 = vmatprep.mubr.f32.mxu0 %v462
        %1189 = vmatmul.mubr.f32.gmra.mrb[0].mxu0 %v461
        %v1190 = vpop.f32.mrb[0].mxu0
        %v1191 = vadd.f32 %v1097, %v1190
        %v1192 = vpop.f32.mrb[0].mxu0
        %v1193 = vadd.f32 %v1101, %v1192
        %1194 = vdwg.mxu0
        %1195 = vmatprep.subr.mxu0 %v903
        %1196 = vmatpush1.msra.mxu0 %v902
        %1197 = vmatprep.subr.mxu0 %v909
        %1198 = vmatpush1.msra.mxu0 %v908
        %1199 = vmatprep.subr.mxu0 %v915
        %1200 = vmatpush1.msra.mxu0 %v914
        %1201 = vmatprep.subr.mxu0 %v921
        %1202 = vmatpush1.msra.mxu0 %v920
        %1203 = vmatprep.subr.mxu0 %v927
        %1204 = vmatpush1.msra.mxu0 %v926
        %1205 = vmatprep.subr.mxu0 %v933
        %1206 = vmatpush1.msra.mxu0 %v932
        %1207 = vmatprep.subr.mxu0 %v939
        %1208 = vmatpush1.msra.mxu0 %v938
        %1209 = vmatprep.subr.mxu0 %v945
        %1210 = vmatpush1.msra.mxu0 %v944
        %1211 = vmatprep.subr.mxu0 %v951
        %1212 = vmatpush1.msra.mxu0 %v950
        %1213 = vmatprep.subr.mxu0 %v957
        %1214 = vmatpush1.msra.mxu0 %v956
        %1215 = vmatprep.subr.mxu0 %v963
        %1216 = vmatpush1.msra.mxu0 %v962
        %1217 = vmatprep.subr.mxu0 %v969
        %1218 = vmatpush1.msra.mxu0 %v968
        %1219 = vmatprep.subr.mxu0 %v975
        %1220 = vmatpush1.msra.mxu0 %v974
        %1221 = vmatprep.subr.mxu0 %v981
        %1222 = vmatpush1.msra.mxu0 %v980
        %1223 = vmatprep.subr.mxu0 %v987
        %1224 = vmatpush1.msra.mxu0 %v986
        %1225 = vmatprep.subr.mxu0 %v993
        %1226 = vmatpush1.msra.mxu0 %v992
        %1227 = vmatprep.subr.mxu0 %v999
        %1228 = vmatpush1.msra.mxu0 %v998
        %1229 = vmatprep.subr.mxu0 %v1005
        %1230 = vmatpush1.msra.mxu0 %v1004
        %1231 = vmatprep.subr.mxu0 %v1011
        %1232 = vmatpush1.msra.mxu0 %v1010
        %1233 = vmatprep.subr.mxu0 %v1017
        %1234 = vmatpush1.msra.mxu0 %v1016
        %1235 = vmatprep.subr.mxu0 %v1023
        %1236 = vmatpush1.msra.mxu0 %v1022
        %1237 = vmatprep.subr.mxu0 %v1029
        %1238 = vmatpush1.msra.mxu0 %v1028
        %1239 = vmatprep.subr.mxu0 %v1035
        %1240 = vmatpush1.msra.mxu0 %v1034
        %1241 = vmatprep.subr.mxu0 %v1041
        %1242 = vmatpush1.msra.mxu0 %v1040
        %1243 = vmatprep.subr.mxu0 %v1047
        %1244 = vmatpush1.msra.mxu0 %v1046
        %1245 = vmatprep.subr.mxu0 %v1053
        %1246 = vmatpush1.msra.mxu0 %v1052
        %1247 = vmatprep.subr.mxu0 %v1059
        %1248 = vmatpush1.msra.mxu0 %v1058
        %1249 = vmatprep.subr.mxu0 %v1065
        %1250 = vmatpush1.msra.mxu0 %v1064
        %1251 = vmatprep.subr.mxu0 %v1071
        %1252 = vmatpush1.msra.mxu0 %v1070
        %1253 = vmatprep.subr.mxu0 %v1077
        %1254 = vmatpush1.msra.mxu0 %v1076
        %1255 = vmatprep.subr.mxu0 %v1083
        %1256 = vmatpush1.msra.mxu0 %v1082
        %1257 = vmatprep.subr.mxu0 %v1089
        %1258 = vmatpush1.msra.mxu0 %v1088
        %1259 = vmatprep.mubr.f32.mxu0 %v462
        %1260 = vmatmul.mubr.f32.gmra.mrb[0].mxu0 %v461
        %v1261 = vpop.f32.mrb[0].mxu0
        %v1262 = vadd.f32 %v1105, %v1261
        %v1263 = vpop.f32.mrb[0].mxu0
        %v1264 = vadd.f32 %v1109, %v1263
        %1265 = vdwg.mxu0
        %1266 = vmatprep.subr.mxu0 %v905
        %1267 = vmatpush1.msra.mxu0 %v904
        %1268 = vmatprep.subr.mxu0 %v911
        %1269 = vmatpush1.msra.mxu0 %v910
        %1270 = vmatprep.subr.mxu0 %v917
        %1271 = vmatpush1.msra.mxu0 %v916
        %1272 = vmatprep.subr.mxu0 %v923
        %1273 = vmatpush1.msra.mxu0 %v922
        %1274 = vmatprep.subr.mxu0 %v929
        %1275 = vmatpush1.msra.mxu0 %v928
        %1276 = vmatprep.subr.mxu0 %v935
        %1277 = vmatpush1.msra.mxu0 %v934
        %1278 = vmatprep.subr.mxu0 %v941
        %1279 = vmatpush1.msra.mxu0 %v940
        %1280 = vmatprep.subr.mxu0 %v947
        %1281 = vmatpush1.msra.mxu0 %v946
        %1282 = vmatprep.subr.mxu0 %v953
        %1283 = vmatpush1.msra.mxu0 %v952
        %1284 = vmatprep.subr.mxu0 %v959
        %1285 = vmatpush1.msra.mxu0 %v958
        %1286 = vmatprep.subr.mxu0 %v965
        %1287 = vmatpush1.msra.mxu0 %v964
        %1288 = vmatprep.subr.mxu0 %v971
        %1289 = vmatpush1.msra.mxu0 %v970
        %1290 = vmatprep.subr.mxu0 %v977
        %1291 = vmatpush1.msra.mxu0 %v976
        %1292 = vmatprep.subr.mxu0 %v983
        %1293 = vmatpush1.msra.mxu0 %v982
        %1294 = vmatprep.subr.mxu0 %v989
        %1295 = vmatpush1.msra.mxu0 %v988
        %1296 = vmatprep.subr.mxu0 %v995
        %1297 = vmatpush1.msra.mxu0 %v994
        %1298 = vmatprep.subr.mxu0 %v1001
        %1299 = vmatpush1.msra.mxu0 %v1000
        %1300 = vmatprep.subr.mxu0 %v1007
        %1301 = vmatpush1.msra.mxu0 %v1006
        %1302 = vmatprep.subr.mxu0 %v1013
        %1303 = vmatpush1.msra.mxu0 %v1012
        %1304 = vmatprep.subr.mxu0 %v1019
        %1305 = vmatpush1.msra.mxu0 %v1018
        %1306 = vmatprep.subr.mxu0 %v1025
        %1307 = vmatpush1.msra.mxu0 %v1024
        %1308 = vmatprep.subr.mxu0 %v1031
        %1309 = vmatpush1.msra.mxu0 %v1030
        %1310 = vmatprep.subr.mxu0 %v1037
        %1311 = vmatpush1.msra.mxu0 %v1036
        %1312 = vmatprep.subr.mxu0 %v1043
        %1313 = vmatpush1.msra.mxu0 %v1042
        %1314 = vmatprep.subr.mxu0 %v1049
        %1315 = vmatpush1.msra.mxu0 %v1048
        %1316 = vmatprep.subr.mxu0 %v1055
        %1317 = vmatpush1.msra.mxu0 %v1054
        %1318 = vmatprep.subr.mxu0 %v1061
        %1319 = vmatpush1.msra.mxu0 %v1060
        %1320 = vmatprep.subr.mxu0 %v1067
        %1321 = vmatpush1.msra.mxu0 %v1066
        %1322 = vmatprep.subr.mxu0 %v1073
        %1323 = vmatpush1.msra.mxu0 %v1072
        %1324 = vmatprep.subr.mxu0 %v1079
        %1325 = vmatpush1.msra.mxu0 %v1078
        %1326 = vmatprep.subr.mxu0 %v1085
        %1327 = vmatpush1.msra.mxu0 %v1084
        %1328 = vmatprep.subr.mxu0 %v1091
        %1329 = vmatpush1.msra.mxu0 %v1090
        %1330 = vmatprep.mubr.f32.mxu0 %v462
        %1331 = vmatmul.mubr.f32.gmra.mrb[0].mxu0 %v461
        %v1332 = vpop.f32.mrb[0].mxu0
        %v1333 = vadd.f32 %v1113, %v1332
        %v1334 = vpop.f32.mrb[0].mxu0
        %v1335 = vadd.f32 %v1117, %v1334
        %1336 = vdwg.mxu0
        %v1337 = vld [vmem:[%s7] sm:$0x3]
        %v1339 = vlaneseq
        %v1340 = vshrl.u32 %v1339, 7
        %v1341 = vsub.s32 0, %v1340
        %v1342 = vrot.slane %v1337, %v1341
        %v1343 = vlaneseq
        %v1344 = vshrl.u32 %v1343, 7
        %v1345 = vsub.s32 1, %v1344
        %v1346 = vrot.slane %v1337, %v1345
        %1349 = vmatprep.subr.mxu0 0.0
        %1350 = vmatpush1.xpose.msra.mxu0 %v825
        %1351 = vmatprep.subr.mxu0 0.0
        %1352 = vmatpush1.xpose.msra.mxu0 0.0
        %1353 = vmatprep.subr.mxu0 0.0
        %1354 = vmatpush1.xpose.msra.mxu0 0.0
        %1355 = vmatprep.subr.mxu0 0.0
        %1356 = vmatpush1.xpose.msra.mxu0 0.0
        %1357 = vmatprep.subr.mxu0 0.0
        %1358 = vmatpush1.xpose.msra.mxu0 0.0
        %1359 = vmatprep.subr.mxu0 0.0
        %1360 = vmatpush1.xpose.msra.mxu0 0.0
        %1361 = vmatprep.subr.mxu0 0.0
        %1362 = vmatpush1.xpose.msra.mxu0 0.0
        %1363 = vmatprep.subr.mxu0 0.0
        %1364 = vmatpush1.xpose.msra.mxu0 0.0
        %1365 = vmatprep.subr.mxu0 0.0
        %1366 = vmatpush1.xpose.msra.mxu0 0.0
        %1367 = vmatprep.subr.mxu0 0.0
        %1368 = vmatpush1.xpose.msra.mxu0 0.0
        %1369 = vmatprep.subr.mxu0 0.0
        %1370 = vmatpush1.xpose.msra.mxu0 0.0
        %1371 = vmatprep.subr.mxu0 0.0
        %1372 = vmatpush1.xpose.msra.mxu0 0.0
        %1373 = vmatprep.subr.mxu0 0.0
        %1374 = vmatpush1.xpose.msra.mxu0 0.0
        %1375 = vmatprep.subr.mxu0 0.0
        %1376 = vmatpush1.xpose.msra.mxu0 0.0
        %1377 = vmatprep.subr.mxu0 0.0
        %1378 = vmatpush1.xpose.msra.mxu0 0.0
        %1379 = vmatprep.subr.mxu0 0.0
        %1380 = vmatpush1.xpose.msra.mxu0 0.0
        %1381 = vmatprep.subr.mxu0 0.0
        %1382 = vmatpush1.xpose.msra.mxu0 0.0
        %1383 = vmatprep.subr.mxu0 0.0
        %1384 = vmatpush1.xpose.msra.mxu0 0.0
        %1385 = vmatprep.subr.mxu0 0.0
        %1386 = vmatpush1.xpose.msra.mxu0 0.0
        %1387 = vmatprep.subr.mxu0 0.0
        %1388 = vmatpush1.xpose.msra.mxu0 0.0
        %1389 = vmatprep.subr.mxu0 0.0
        %1390 = vmatpush1.xpose.msra.mxu0 0.0
        %1391 = vmatprep.subr.mxu0 0.0
        %1392 = vmatpush1.xpose.msra.mxu0 0.0
        %1393 = vmatprep.subr.mxu0 0.0
        %1394 = vmatpush1.xpose.msra.mxu0 0.0
        %1395 = vmatprep.subr.mxu0 0.0
        %1396 = vmatpush1.xpose.msra.mxu0 0.0
        %1397 = vmatprep.subr.mxu0 0.0
        %1398 = vmatpush1.xpose.msra.mxu0 0.0
        %1399 = vmatprep.subr.mxu0 0.0
        %1400 = vmatpush1.xpose.msra.mxu0 0.0
        %1401 = vmatprep.subr.mxu0 0.0
        %1402 = vmatpush1.xpose.msra.mxu0 0.0
        %1403 = vmatprep.subr.mxu0 0.0
        %1404 = vmatpush1.xpose.msra.mxu0 0.0
        %1405 = vmatprep.subr.mxu0 0.0
        %1406 = vmatpush1.xpose.msra.mxu0 0.0
        %1407 = vmatprep.subr.mxu0 0.0
        %1408 = vmatpush1.xpose.msra.mxu0 0.0
        %1409 = vmatprep.subr.mxu0 0.0
        %1410 = vmatpush1.xpose.msra.mxu0 0.0
        %1411 = vmatprep.subr.mxu0 0.0
        %1412 = vmatpush1.xpose.msra.mxu0 0.0
        %1413 = vmatprep.mubr.f32.mxu0 0.0
        %1414 = vmatmul.mubr.f32.gmra.mrb[0].mxu0 %v1191
        %v1415 = vpop.f32.mrb[0].mxu0
        %v1416 = vadd.f32 0.0, %v1415
        %v1417 = vpop.f32.mrb[0].mxu0
        %1418 = vdwg.mxu0
        %vm1419 = vcmask 64512
        %v1420 = vsel %vm1419, %v1416, -inf
        %1421 = vmax.xlane.f32.xlu0 %v1420
        %v1422 = vpop.xlane.xlu0 %1421
        %v1423 = vsub.f32 %v1416, %v1422
        %v1424 = vmul.f32 %v1423, 1.442695
        %v1425 = vpow.pop %v1424
        %v1426 = vsel %vm1419, %v1425, 0.0
        %1427 = vadd.xlane.f32.xlu0 %v1426
        %v1428 = vpop.xlane.xlu0 %1427
        %v1429 = vrcp.pop %v1428
        %v1430 = vmul.f32 %v1425, %v1429
        %v1432 = vsel %vm1419, %v1430, 0
        %1434 = vmatprep.subr.mxu0 0.0
        %1435 = vmatpush1.msra.mxu0 %v896
        %1436 = vmatprep.subr.mxu0 0.0
        %1437 = vmatpush1.msra.mxu0 0.0
        %1438 = vmatprep.subr.mxu0 0.0
        %1439 = vmatpush1.msra.mxu0 0.0
        %1440 = vmatprep.subr.mxu0 0.0
        %1441 = vmatpush1.msra.mxu0 0.0
        %1442 = vmatprep.subr.mxu0 0.0
        %1443 = vmatpush1.msra.mxu0 0.0
        %1444 = vmatprep.subr.mxu0 0.0
        %1445 = vmatpush1.msra.mxu0 0.0
        %1446 = vmatprep.subr.mxu0 0.0
        %1447 = vmatpush1.msra.mxu0 0.0
        %1448 = vmatprep.subr.mxu0 0.0
        %1449 = vmatpush1.msra.mxu0 0.0
        %1450 = vmatprep.subr.mxu0 0.0
        %1451 = vmatpush1.msra.mxu0 0.0
        %1452 = vmatprep.subr.mxu0 0.0
        %1453 = vmatpush1.msra.mxu0 0.0
        %1454 = vmatprep.subr.mxu0 0.0
        %1455 = vmatpush1.msra.mxu0 0.0
        %1456 = vmatprep.subr.mxu0 0.0
        %1457 = vmatpush1.msra.mxu0 0.0
        %1458 = vmatprep.subr.mxu0 0.0
        %1459 = vmatpush1.msra.mxu0 0.0
        %1460 = vmatprep.subr.mxu0 0.0
        %1461 = vmatpush1.msra.mxu0 0.0
        %1462 = vmatprep.subr.mxu0 0.0
        %1463 = vmatpush1.msra.mxu0 0.0
        %1464 = vmatprep.subr.mxu0 0.0
        %1465 = vmatpush1.msra.mxu0 0.0
        %1466 = vmatprep.subr.mxu0 0.0
        %1467 = vmatpush1.msra.mxu0 0.0
        %1468 = vmatprep.subr.mxu0 0.0
        %1469 = vmatpush1.msra.mxu0 0.0
        %1470 = vmatprep.subr.mxu0 0.0
        %1471 = vmatpush1.msra.mxu0 0.0
        %1472 = vmatprep.subr.mxu0 0.0
        %1473 = vmatpush1.msra.mxu0 0.0
        %1474 = vmatprep.subr.mxu0 0.0
        %1475 = vmatpush1.msra.mxu0 0.0
        %1476 = vmatprep.subr.mxu0 0.0
        %1477 = vmatpush1.msra.mxu0 0.0
        %1478 = vmatprep.subr.mxu0 0.0
        %1479 = vmatpush1.msra.mxu0 0.0
        %1480 = vmatprep.subr.mxu0 0.0
        %1481 = vmatpush1.msra.mxu0 0.0
        %1482 = vmatprep.subr.mxu0 0.0
        %1483 = vmatpush1.msra.mxu0 0.0
        %1484 = vmatprep.subr.mxu0 0.0
        %1485 = vmatpush1.msra.mxu0 0.0
        %1486 = vmatprep.subr.mxu0 0.0
        %1487 = vmatpush1.msra.mxu0 0.0
        %1488 = vmatprep.subr.mxu0 0.0
        %1489 = vmatpush1.msra.mxu0 0.0
        %1490 = vmatprep.subr.mxu0 0.0
        %1491 = vmatpush1.msra.mxu0 0.0
        %1492 = vmatprep.subr.mxu0 0.0
        %1493 = vmatpush1.msra.mxu0 0.0
        %1494 = vmatprep.subr.mxu0 0.0
        %1495 = vmatpush1.msra.mxu0 0.0
        %1496 = vmatprep.subr.mxu0 0.0
        %1497 = vmatpush1.msra.mxu0 0.0
        %1498 = vmatprep.mubr.f32.mxu0 0.0
        %1499 = vmatmul.mubr.f32.gmra.mrb[0].mxu0 %v1432
        %v1500 = vpop.f32.mrb[0].mxu0
        %v1501 = vadd.f32 0.0, %v1500
        %v1502 = vpop.f32.mrb[0].mxu0
        %1503 = vdwg.mxu0
        %v1504 = vld [vmem:[%s6] sm:$0xff]
        %v1505 = vld [vmem:[%s6 + $0x8] sm:$0xff]
        %v1506 = vld [vmem:[%s6 + $0x10] sm:$0xff]
        %v1507 = vld [vmem:[%s6 + $0x18] sm:$0xff]
        %v1508 = vld [vmem:[%s6 + $0x20] sm:$0xff]
        %v1509 = vld [vmem:[%s6 + $0x28] sm:$0xff]
        %v1510 = vld [vmem:[%s6 + $0x30] sm:$0xff]
        %v1511 = vld [vmem:[%s6 + $0x38] sm:$0xff]
        %v1512 = vld [vmem:[%s6 + $0x40] sm:$0xff]
        %v1513 = vld [vmem:[%s6 + $0x48] sm:$0xff]
        %v1514 = vld [vmem:[%s6 + $0x50] sm:$0xff]
        %v1515 = vld [vmem:[%s6 + $0x58] sm:$0xff]
        %v1516 = vld [vmem:[%s6 + $0x60] sm:$0xff]
        %v1517 = vld [vmem:[%s6 + $0x68] sm:$0xff]
        %v1518 = vld [vmem:[%s6 + $0x70] sm:$0xff]
        %v1519 = vld [vmem:[%s6 + $0x78] sm:$0xff]
        %v1520 = vld [vmem:[%s6 + $0x80] sm:$0xff]
        %v1521 = vld [vmem:[%s6 + $0x88] sm:$0xff]
        %v1522 = vld [vmem:[%s6 + $0x90] sm:$0xff]
        %v1523 = vld [vmem:[%s6 + $0x98] sm:$0xff]
        %v1524 = vld [vmem:[%s6 + $0xa0] sm:$0xff]
        %v1525 = vld [vmem:[%s6 + $0xa8] sm:$0xff]
        %v1526 = vld [vmem:[%s6 + $0xb0] sm:$0xff]
        %v1527 = vld [vmem:[%s6 + $0xb8] sm:$0xff]
        %v1528 = vld [vmem:[%s6 + $0xc0] sm:$0xff]
        %v1529 = vld [vmem:[%s6 + $0xc8] sm:$0xff]
        %v1530 = vld [vmem:[%s6 + $0xd0] sm:$0xff]
        %v1531 = vld [vmem:[%s6 + $0xd8] sm:$0xff]
        %v1532 = vld [vmem:[%s6 + $0xe0] sm:$0xff]
        %v1533 = vld [vmem:[%s6 + $0xe8] sm:$0xff]
        %v1534 = vld [vmem:[%s6 + $0xf0] sm:$0xff]
        %v1535 = vld [vmem:[%s6 + $0xf8] sm:$0xff]
        %1536 = vmatprep.subr.mxu0 %v1505
        %1537 = vmatpush1.msra.mxu0 %v1504
        %1538 = vmatprep.subr.mxu0 %v1507
        %1539 = vmatpush1.msra.mxu0 %v1506
        %1540 = vmatprep.subr.mxu0 %v1509
        %1541 = vmatpush1.msra.mxu0 %v1508
        %1542 = vmatprep.subr.mxu0 %v1511
        %1543 = vmatpush1.msra.mxu0 %v1510
        %1544 = vmatprep.subr.mxu0 %v1513
        %1545 = vmatpush1.msra.mxu0 %v1512
        %1546 = vmatprep.subr.mxu0 %v1515
        %1547 = vmatpush1.msra.mxu0 %v1514
        %1548 = vmatprep.subr.mxu0 %v1517
        %1549 = vmatpush1.msra.mxu0 %v1516
        %1550 = vmatprep.subr.mxu0 %v1519
        %1551 = vmatpush1.msra.mxu0 %v1518
        %1552 = vmatprep.subr.mxu0 %v1521
        %1553 = vmatpush1.msra.mxu0 %v1520
        %1554 = vmatprep.subr.mxu0 %v1523
        %1555 = vmatpush1.msra.mxu0 %v1522
        %1556 = vmatprep.subr.mxu0 %v1525
        %1557 = vmatpush1.msra.mxu0 %v1524
        %1558 = vmatprep.subr.mxu0 %v1527
        %1559 = vmatpush1.msra.mxu0 %v1526
        %1560 = vmatprep.subr.mxu0 %v1529
        %1561 = vmatpush1.msra.mxu0 %v1528
        %1562 = vmatprep.subr.mxu0 %v1531
        %1563 = vmatpush1.msra.mxu0 %v1530
        %1564 = vmatprep.subr.mxu0 %v1533
        %1565 = vmatpush1.msra.mxu0 %v1532
        %1566 = vmatprep.subr.mxu0 %v1535
        %1567 = vmatpush1.msra.mxu0 %v1534
        %1568 = vmatprep.subr.mxu0 0.0
        %1569 = vmatpush1.msra.mxu0 0.0
        %1570 = vmatprep.subr.mxu0 0.0
        %1571 = vmatpush1.msra.mxu0 0.0
        %1572 = vmatprep.subr.mxu0 0.0
        %1573 = vmatpush1.msra.mxu0 0.0
        %1574 = vmatprep.subr.mxu0 0.0
        %1575 = vmatpush1.msra.mxu0 0.0
        %1576 = vmatprep.subr.mxu0 0.0
        %1577 = vmatpush1.msra.mxu0 0.0
        %1578 = vmatprep.subr.mxu0 0.0
        %1579 = vmatpush1.msra.mxu0 0.0
        %1580 = vmatprep.subr.mxu0 0.0
        %1581 = vmatpush1.msra.mxu0 0.0
        %1582 = vmatprep.subr.mxu0 0.0
        %1583 = vmatpush1.msra.mxu0 0.0
        %1584 = vmatprep.subr.mxu0 0.0
        %1585 = vmatpush1.msra.mxu0 0.0
        %1586 = vmatprep.subr.mxu0 0.0
        %1587 = vmatpush1.msra.mxu0 0.0
        %1588 = vmatprep.subr.mxu0 0.0
        %1589 = vmatpush1.msra.mxu0 0.0
        %1590 = vmatprep.subr.mxu0 0.0
        %1591 = vmatpush1.msra.mxu0 0.0
        %1592 = vmatprep.subr.mxu0 0.0
        %1593 = vmatpush1.msra.mxu0 0.0
        %1594 = vmatprep.subr.mxu0 0.0
        %1595 = vmatpush1.msra.mxu0 0.0
        %1596 = vmatprep.subr.mxu0 0.0
        %1597 = vmatpush1.msra.mxu0 0.0
        %1598 = vmatprep.subr.mxu0 0.0
        %1599 = vmatpush1.msra.mxu0 0.0
        %1600 = vmatprep.mubr.f32.mxu0 0.0
        %1601 = vmatmul.mubr.f32.gmra.mrb[0].mxu0 %v1501
        %v1602 = vpop.f32.mrb[0].mxu0
        %v1603 = vadd.f32 0.0, %v1602
        %v1604 = vpop.f32.mrb[0].mxu0
        %v1605 = vadd.f32 0.0, %v1604
        %1606 = vdwg.mxu0
        %v1607 = vadd.f32 %v1342, %v1603
        %v1608 = vadd.f32 %v1346, %v1605
        %1609 = vmatprep.subr.mxu0 0.0
        %1610 = vmatpush1.xpose.msra.mxu0 %v827
        %1611 = vmatprep.subr.mxu0 0.0
        %1612 = vmatpush1.xpose.msra.mxu0 0.0
        %1613 = vmatprep.subr.mxu0 0.0
        %1614 = vmatpush1.xpose.msra.mxu0 0.0
        %1615 = vmatprep.subr.mxu0 0.0
        %1616 = vmatpush1.xpose.msra.mxu0 0.0
        %1617 = vmatprep.subr.mxu0 0.0
        %1618 = vmatpush1.xpose.msra.mxu0 0.0
        %1619 = vmatprep.subr.mxu0 0.0
        %1620 = vmatpush1.xpose.msra.mxu0 0.0
        %1621 = vmatprep.subr.mxu0 0.0
        %1622 = vmatpush1.xpose.msra.mxu0 0.0
        %1623 = vmatprep.subr.mxu0 0.0
        %1624 = vmatpush1.xpose.msra.mxu0 0.0
        %1625 = vmatprep.subr.mxu0 0.0
        %1626 = vmatpush1.xpose.msra.mxu0 0.0
        %1627 = vmatprep.subr.mxu0 0.0
        %1628 = vmatpush1.xpose.msra.mxu0 0.0
        %1629 = vmatprep.subr.mxu0 0.0
        %1630 = vmatpush1.xpose.msra.mxu0 0.0
        %1631 = vmatprep.subr.mxu0 0.0
        %1632 = vmatpush1.xpose.msra.mxu0 0.0
        %1633 = vmatprep.subr.mxu0 0.0
        %1634 = vmatpush1.xpose.msra.mxu0 0.0
        %1635 = vmatprep.subr.mxu0 0.0
        %1636 = vmatpush1.xpose.msra.mxu0 0.0
        %1637 = vmatprep.subr.mxu0 0.0
        %1638 = vmatpush1.xpose.msra.mxu0 0.0
        %1639 = vmatprep.subr.mxu0 0.0
        %1640 = vmatpush1.xpose.msra.mxu0 0.0
        %1641 = vmatprep.subr.mxu0 0.0
        %1642 = vmatpush1.xpose.msra.mxu0 0.0
        %1643 = vmatprep.subr.mxu0 0.0
        %1644 = vmatpush1.xpose.msra.mxu0 0.0
        %1645 = vmatprep.subr.mxu0 0.0
        %1646 = vmatpush1.xpose.msra.mxu0 0.0
        %1647 = vmatprep.subr.mxu0 0.0
        %1648 = vmatpush1.xpose.msra.mxu0 0.0
        %1649 = vmatprep.subr.mxu0 0.0
        %1650 = vmatpush1.xpose.msra.mxu0 0.0
        %1651 = vmatprep.subr.mxu0 0.0
        %1652 = vmatpush1.xpose.msra.mxu0 0.0
        %1653 = vmatprep.subr.mxu0 0.0
        %1654 = vmatpush1.xpose.msra.mxu0 0.0
        %1655 = vmatprep.subr.mxu0 0.0
        %1656 = vmatpush1.xpose.msra.mxu0 0.0
        %1657 = vmatprep.subr.mxu0 0.0
        %1658 = vmatpush1.xpose.msra.mxu0 0.0
        %1659 = vmatprep.subr.mxu0 0.0
        %1660 = vmatpush1.xpose.msra.mxu0 0.0
        %1661 = vmatprep.subr.mxu0 0.0
        %1662 = vmatpush1.xpose.msra.mxu0 0.0
        %1663 = vmatprep.subr.mxu0 0.0
        %1664 = vmatpush1.xpose.msra.mxu0 0.0
        %1665 = vmatprep.subr.mxu0 0.0
        %1666 = vmatpush1.xpose.msra.mxu0 0.0
        %1667 = vmatprep.subr.mxu0 0.0
        %1668 = vmatpush1.xpose.msra.mxu0 0.0
        %1669 = vmatprep.subr.mxu0 0.0
        %1670 = vmatpush1.xpose.msra.mxu0 0.0
        %1671 = vmatprep.subr.mxu0 0.0
        %1672 = vmatpush1.xpose.msra.mxu0 0.0
        %1673 = vmatprep.mubr.f32.mxu0 0.0
        %1674 = vmatmul.mubr.f32.gmra.mrb[0].mxu0 %v1193
        %v1675 = vpop.f32.mrb[0].mxu0
        %v1676 = vadd.f32 0.0, %v1675
        %v1677 = vpop.f32.mrb[0].mxu0
        %1678 = vdwg.mxu0
        %v1679 = vsel %vm1419, %v1676, -inf
        %1680 = vmax.xlane.f32.xlu0 %v1679
        %v1681 = vpop.xlane.xlu0 %1680
        %v1682 = vsub.f32 %v1676, %v1681
        %v1683 = vmul.f32 %v1682, 1.442695
        %v1684 = vpow.pop %v1683
        %v1685 = vsel %vm1419, %v1684, 0.0
        %1686 = vadd.xlane.f32.xlu0 %v1685
        %v1687 = vpop.xlane.xlu0 %1686
        %v1688 = vrcp.pop %v1687
        %v1689 = vmul.f32 %v1684, %v1688
        %v1691 = vsel %vm1419, %v1689, 0
        %1693 = vmatprep.subr.mxu0 0.0
        %1694 = vmatpush1.msra.mxu0 %v898
        %1695 = vmatprep.subr.mxu0 0.0
        %1696 = vmatpush1.msra.mxu0 0.0
        %1697 = vmatprep.subr.mxu0 0.0
        %1698 = vmatpush1.msra.mxu0 0.0
        %1699 = vmatprep.subr.mxu0 0.0
        %1700 = vmatpush1.msra.mxu0 0.0
        %1701 = vmatprep.subr.mxu0 0.0
        %1702 = vmatpush1.msra.mxu0 0.0
        %1703 = vmatprep.subr.mxu0 0.0
        %1704 = vmatpush1.msra.mxu0 0.0
        %1705 = vmatprep.subr.mxu0 0.0
        %1706 = vmatpush1.msra.mxu0 0.0
        %1707 = vmatprep.subr.mxu0 0.0
        %1708 = vmatpush1.msra.mxu0 0.0
        %1709 = vmatprep.subr.mxu0 0.0
        %1710 = vmatpush1.msra.mxu0 0.0
        %1711 = vmatprep.subr.mxu0 0.0
        %1712 = vmatpush1.msra.mxu0 0.0
        %1713 = vmatprep.subr.mxu0 0.0
        %1714 = vmatpush1.msra.mxu0 0.0
        %1715 = vmatprep.subr.mxu0 0.0
        %1716 = vmatpush1.msra.mxu0 0.0
        %1717 = vmatprep.subr.mxu0 0.0
        %1718 = vmatpush1.msra.mxu0 0.0
        %1719 = vmatprep.subr.mxu0 0.0
        %1720 = vmatpush1.msra.mxu0 0.0
        %1721 = vmatprep.subr.mxu0 0.0
        %1722 = vmatpush1.msra.mxu0 0.0
        %1723 = vmatprep.subr.mxu0 0.0
        %1724 = vmatpush1.msra.mxu0 0.0
        %1725 = vmatprep.subr.mxu0 0.0
        %1726 = vmatpush1.msra.mxu0 0.0
        %1727 = vmatprep.subr.mxu0 0.0
        %1728 = vmatpush1.msra.mxu0 0.0
        %1729 = vmatprep.subr.mxu0 0.0
        %1730 = vmatpush1.msra.mxu0 0.0
        %1731 = vmatprep.subr.mxu0 0.0
        %1732 = vmatpush1.msra.mxu0 0.0
        %1733 = vmatprep.subr.mxu0 0.0
        %1734 = vmatpush1.msra.mxu0 0.0
        %1735 = vmatprep.subr.mxu0 0.0
        %1736 = vmatpush1.msra.mxu0 0.0
        %1737 = vmatprep.subr.mxu0 0.0
        %1738 = vmatpush1.msra.mxu0 0.0
        %1739 = vmatprep.subr.mxu0 0.0
        %1740 = vmatpush1.msra.mxu0 0.0
        %1741 = vmatprep.subr.mxu0 0.0
        %1742 = vmatpush1.msra.mxu0 0.0
        %1743 = vmatprep.subr.mxu0 0.0
        %1744 = vmatpush1.msra.mxu0 0.0
        %1745 = vmatprep.subr.mxu0 0.0
        %1746 = vmatpush1.msra.mxu0 0.0
        %1747 = vmatprep.subr.mxu0 0.0
        %1748 = vmatpush1.msra.mxu0 0.0
        %1749 = vmatprep.subr.mxu0 0.0
        %1750 = vmatpush1.msra.mxu0 0.0
        %1751 = vmatprep.subr.mxu0 0.0
        %1752 = vmatpush1.msra.mxu0 0.0
        %1753 = vmatprep.subr.mxu0 0.0
        %1754 = vmatpush1.msra.mxu0 0.0
        %1755 = vmatprep.subr.mxu0 0.0
        %1756 = vmatpush1.msra.mxu0 0.0
        %1757 = vmatprep.mubr.f32.mxu0 0.0
        %1758 = vmatmul.mubr.f32.gmra.mrb[0].mxu0 %v1691
        %v1759 = vpop.f32.mrb[0].mxu0
        %v1760 = vadd.f32 0.0, %v1759
        %v1761 = vpop.f32.mrb[0].mxu0
        %1762 = vdwg.mxu0
        %v1763 = vld [vmem:[%s6 + $0x100] sm:$0xff]
        %v1764 = vld [vmem:[%s6 + $0x108] sm:$0xff]
        %v1765 = vld [vmem:[%s6 + $0x110] sm:$0xff]
        %v1766 = vld [vmem:[%s6 + $0x118] sm:$0xff]
        %v1767 = vld [vmem:[%s6 + $0x120] sm:$0xff]
        %v1768 = vld [vmem:[%s6 + $0x128] sm:$0xff]
        %v1769 = vld [vmem:[%s6 + $0x130] sm:$0xff]
        %v1770 = vld [vmem:[%s6 + $0x138] sm:$0xff]
        %v1771 = vld [vmem:[%s6 + $0x140] sm:$0xff]
        %v1772 = vld [vmem:[%s6 + $0x148] sm:$0xff]
        %v1773 = vld [vmem:[%s6 + $0x150] sm:$0xff]
        %v1774 = vld [vmem:[%s6 + $0x158] sm:$0xff]
        %v1775 = vld [vmem:[%s6 + $0x160] sm:$0xff]
        %v1776 = vld [vmem:[%s6 + $0x168] sm:$0xff]
        %v1777 = vld [vmem:[%s6 + $0x170] sm:$0xff]
        %v1778 = vld [vmem:[%s6 + $0x178] sm:$0xff]
        %v1779 = vld [vmem:[%s6 + $0x180] sm:$0xff]
        %v1780 = vld [vmem:[%s6 + $0x188] sm:$0xff]
        %v1781 = vld [vmem:[%s6 + $0x190] sm:$0xff]
        %v1782 = vld [vmem:[%s6 + $0x198] sm:$0xff]
        %v1783 = vld [vmem:[%s6 + $0x1a0] sm:$0xff]
        %v1784 = vld [vmem:[%s6 + $0x1a8] sm:$0xff]
        %v1785 = vld [vmem:[%s6 + $0x1b0] sm:$0xff]
        %v1786 = vld [vmem:[%s6 + $0x1b8] sm:$0xff]
        %v1787 = vld [vmem:[%s6 + $0x1c0] sm:$0xff]
        %v1788 = vld [vmem:[%s6 + $0x1c8] sm:$0xff]
        %v1789 = vld [vmem:[%s6 + $0x1d0] sm:$0xff]
        %v1790 = vld [vmem:[%s6 + $0x1d8] sm:$0xff]
        %v1791 = vld [vmem:[%s6 + $0x1e0] sm:$0xff]
        %v1792 = vld [vmem:[%s6 + $0x1e8] sm:$0xff]
        %v1793 = vld [vmem:[%s6 + $0x1f0] sm:$0xff]
        %v1794 = vld [vmem:[%s6 + $0x1f8] sm:$0xff]
        %1795 = vmatprep.subr.mxu0 %v1764
        %1796 = vmatpush1.msra.mxu0 %v1763
        %1797 = vmatprep.subr.mxu0 %v1766
        %1798 = vmatpush1.msra.mxu0 %v1765
        %1799 = vmatprep.subr.mxu0 %v1768
        %1800 = vmatpush1.msra.mxu0 %v1767
        %1801 = vmatprep.subr.mxu0 %v1770
        %1802 = vmatpush1.msra.mxu0 %v1769
        %1803 = vmatprep.subr.mxu0 %v1772
        %1804 = vmatpush1.msra.mxu0 %v1771
        %1805 = vmatprep.subr.mxu0 %v1774
        %1806 = vmatpush1.msra.mxu0 %v1773
        %1807 = vmatprep.subr.mxu0 %v1776
        %1808 = vmatpush1.msra.mxu0 %v1775
        %1809 = vmatprep.subr.mxu0 %v1778
        %1810 = vmatpush1.msra.mxu0 %v1777
        %1811 = vmatprep.subr.mxu0 %v1780
        %1812 = vmatpush1.msra.mxu0 %v1779
        %1813 = vmatprep.subr.mxu0 %v1782
        %1814 = vmatpush1.msra.mxu0 %v1781
        %1815 = vmatprep.subr.mxu0 %v1784
        %1816 = vmatpush1.msra.mxu0 %v1783
        %1817 = vmatprep.subr.mxu0 %v1786
        %1818 = vmatpush1.msra.mxu0 %v1785
        %1819 = vmatprep.subr.mxu0 %v1788
        %1820 = vmatpush1.msra.mxu0 %v1787
        %1821 = vmatprep.subr.mxu0 %v1790
        %1822 = vmatpush1.msra.mxu0 %v1789
        %1823 = vmatprep.subr.mxu0 %v1792
        %1824 = vmatpush1.msra.mxu0 %v1791
        %1825 = vmatprep.subr.mxu0 %v1794
        %1826 = vmatpush1.msra.mxu0 %v1793
        %1827 = vmatprep.subr.mxu0 0.0
        %1828 = vmatpush1.msra.mxu0 0.0
        %1829 = vmatprep.subr.mxu0 0.0
        %1830 = vmatpush1.msra.mxu0 0.0
        %1831 = vmatprep.subr.mxu0 0.0
        %1832 = vmatpush1.msra.mxu0 0.0
        %1833 = vmatprep.subr.mxu0 0.0
        %1834 = vmatpush1.msra.mxu0 0.0
        %1835 = vmatprep.subr.mxu0 0.0
        %1836 = vmatpush1.msra.mxu0 0.0
        %1837 = vmatprep.subr.mxu0 0.0
        %1838 = vmatpush1.msra.mxu0 0.0
        %1839 = vmatprep.subr.mxu0 0.0
        %1840 = vmatpush1.msra.mxu0 0.0
        %1841 = vmatprep.subr.mxu0 0.0
        %1842 = vmatpush1.msra.mxu0 0.0
        %1843 = vmatprep.subr.mxu0 0.0
        %1844 = vmatpush1.msra.mxu0 0.0
        %1845 = vmatprep.subr.mxu0 0.0
        %1846 = vmatpush1.msra.mxu0 0.0
        %1847 = vmatprep.subr.mxu0 0.0
        %1848 = vmatpush1.msra.mxu0 0.0
        %1849 = vmatprep.subr.mxu0 0.0
        %1850 = vmatpush1.msra.mxu0 0.0
        %1851 = vmatprep.subr.mxu0 0.0
        %1852 = vmatpush1.msra.mxu0 0.0
        %1853 = vmatprep.subr.mxu0 0.0
        %1854 = vmatpush1.msra.mxu0 0.0
        %1855 = vmatprep.subr.mxu0 0.0
        %1856 = vmatpush1.msra.mxu0 0.0
        %1857 = vmatprep.subr.mxu0 0.0
        %1858 = vmatpush1.msra.mxu0 0.0
        %1859 = vmatprep.mubr.f32.mxu0 0.0
        %1860 = vmatmul.mubr.f32.gmra.mrb[0].mxu0 %v1760
        %v1861 = vpop.f32.mrb[0].mxu0
        %v1862 = vadd.f32 0.0, %v1861
        %v1863 = vpop.f32.mrb[0].mxu0
        %v1864 = vadd.f32 0.0, %v1863
        %1865 = vdwg.mxu0
        %v1866 = vadd.f32 %v1607, %v1862
        %v1867 = vadd.f32 %v1608, %v1864
        %v1868 = vld [vmem:[%s9] sm:$0x3]
        %v1870 = vlaneseq
        %v1871 = vshrl.u32 %v1870, 7
        %v1872 = vsub.s32 0, %v1871
        %v1873 = vrot.slane %v1868, %v1872
        %v1874 = vlaneseq
        %v1875 = vshrl.u32 %v1874, 7
        %v1876 = vsub.s32 1, %v1875
        %v1877 = vrot.slane %v1868, %v1876
        %1880 = vmatprep.subr.mxu0 0.0
        %1881 = vmatpush1.xpose.msra.mxu0 %v1262
        %1882 = vmatprep.subr.mxu0 0.0
        %1883 = vmatpush1.xpose.msra.mxu0 0.0
        %1884 = vmatprep.subr.mxu0 0.0
        %1885 = vmatpush1.xpose.msra.mxu0 0.0
        %1886 = vmatprep.subr.mxu0 0.0
        %1887 = vmatpush1.xpose.msra.mxu0 0.0
        %1888 = vmatprep.subr.mxu0 0.0
        %1889 = vmatpush1.xpose.msra.mxu0 0.0
        %1890 = vmatprep.subr.mxu0 0.0
        %1891 = vmatpush1.xpose.msra.mxu0 0.0
        %1892 = vmatprep.subr.mxu0 0.0
        %1893 = vmatpush1.xpose.msra.mxu0 0.0
        %1894 = vmatprep.subr.mxu0 0.0
        %1895 = vmatpush1.xpose.msra.mxu0 0.0
        %1896 = vmatprep.subr.mxu0 0.0
        %1897 = vmatpush1.xpose.msra.mxu0 0.0
        %1898 = vmatprep.subr.mxu0 0.0
        %1899 = vmatpush1.xpose.msra.mxu0 0.0
        %1900 = vmatprep.subr.mxu0 0.0
        %1901 = vmatpush1.xpose.msra.mxu0 0.0
        %1902 = vmatprep.subr.mxu0 0.0
        %1903 = vmatpush1.xpose.msra.mxu0 0.0
        %1904 = vmatprep.subr.mxu0 0.0
        %1905 = vmatpush1.xpose.msra.mxu0 0.0
        %1906 = vmatprep.subr.mxu0 0.0
        %1907 = vmatpush1.xpose.msra.mxu0 0.0
        %1908 = vmatprep.subr.mxu0 0.0
        %1909 = vmatpush1.xpose.msra.mxu0 0.0
        %1910 = vmatprep.subr.mxu0 0.0
        %1911 = vmatpush1.xpose.msra.mxu0 0.0
        %1912 = vmatprep.subr.mxu0 0.0
        %1913 = vmatpush1.xpose.msra.mxu0 0.0
        %1914 = vmatprep.subr.mxu0 0.0
        %1915 = vmatpush1.xpose.msra.mxu0 0.0
        %1916 = vmatprep.subr.mxu0 0.0
        %1917 = vmatpush1.xpose.msra.mxu0 0.0
        %1918 = vmatprep.subr.mxu0 0.0
        %1919 = vmatpush1.xpose.msra.mxu0 0.0
        %1920 = vmatprep.subr.mxu0 0.0
        %1921 = vmatpush1.xpose.msra.mxu0 0.0
        %1922 = vmatprep.subr.mxu0 0.0
        %1923 = vmatpush1.xpose.msra.mxu0 0.0
        %1924 = vmatprep.subr.mxu0 0.0
        %1925 = vmatpush1.xpose.msra.mxu0 0.0
        %1926 = vmatprep.subr.mxu0 0.0
        %1927 = vmatpush1.xpose.msra.mxu0 0.0
        %1928 = vmatprep.subr.mxu0 0.0
        %1929 = vmatpush1.xpose.msra.mxu0 0.0
        %1930 = vmatprep.subr.mxu0 0.0
        %1931 = vmatpush1.xpose.msra.mxu0 0.0
        %1932 = vmatprep.subr.mxu0 0.0
        %1933 = vmatpush1.xpose.msra.mxu0 0.0
        %1934 = vmatprep.subr.mxu0 0.0
        %1935 = vmatpush1.xpose.msra.mxu0 0.0
        %1936 = vmatprep.subr.mxu0 0.0
        %1937 = vmatpush1.xpose.msra.mxu0 0.0
        %1938 = vmatprep.subr.mxu0 0.0
        %1939 = vmatpush1.xpose.msra.mxu0 0.0
        %1940 = vmatprep.subr.mxu0 0.0
        %1941 = vmatpush1.xpose.msra.mxu0 0.0
        %1942 = vmatprep.subr.mxu0 0.0
        %1943 = vmatpush1.xpose.msra.mxu0 0.0
        %1944 = vmatprep.mubr.f32.mxu0 0.0
        %1945 = vmatmul.mubr.f32.gmra.mrb[0].mxu0 %v754
        %v1946 = vpop.f32.mrb[0].mxu0
        %v1947 = vadd.f32 0.0, %v1946
        %v1948 = vpop.f32.mrb[0].mxu0
        %1949 = vdwg.mxu0
        %v1950 = vsel %vm1419, %v1947, -inf
        %1951 = vmax.xlane.f32.xlu0 %v1950
        %v1952 = vpop.xlane.xlu0 %1951
        %v1953 = vsub.f32 %v1947, %v1952
        %v1954 = vmul.f32 %v1953, 1.442695
        %v1955 = vpow.pop %v1954
        %v1956 = vsel %vm1419, %v1955, 0.0
        %1957 = vadd.xlane.f32.xlu0 %v1956
        %v1958 = vpop.xlane.xlu0 %1957
        %v1959 = vrcp.pop %v1958
        %v1960 = vmul.f32 %v1955, %v1959
        %v1962 = vsel %vm1419, %v1960, 0
        %1964 = vmatprep.subr.mxu0 0.0
        %1965 = vmatpush1.msra.mxu0 %v1333
        %1966 = vmatprep.subr.mxu0 0.0
        %1967 = vmatpush1.msra.mxu0 0.0
        %1968 = vmatprep.subr.mxu0 0.0
        %1969 = vmatpush1.msra.mxu0 0.0
        %1970 = vmatprep.subr.mxu0 0.0
        %1971 = vmatpush1.msra.mxu0 0.0
        %1972 = vmatprep.subr.mxu0 0.0
        %1973 = vmatpush1.msra.mxu0 0.0
        %1974 = vmatprep.subr.mxu0 0.0
        %1975 = vmatpush1.msra.mxu0 0.0
        %1976 = vmatprep.subr.mxu0 0.0
        %1977 = vmatpush1.msra.mxu0 0.0
        %1978 = vmatprep.subr.mxu0 0.0
        %1979 = vmatpush1.msra.mxu0 0.0
        %1980 = vmatprep.subr.mxu0 0.0
        %1981 = vmatpush1.msra.mxu0 0.0
        %1982 = vmatprep.subr.mxu0 0.0
        %1983 = vmatpush1.msra.mxu0 0.0
        %1984 = vmatprep.subr.mxu0 0.0
        %1985 = vmatpush1.msra.mxu0 0.0
        %1986 = vmatprep.subr.mxu0 0.0
        %1987 = vmatpush1.msra.mxu0 0.0
        %1988 = vmatprep.subr.mxu0 0.0
        %1989 = vmatpush1.msra.mxu0 0.0
        %1990 = vmatprep.subr.mxu0 0.0
        %1991 = vmatpush1.msra.mxu0 0.0
        %1992 = vmatprep.subr.mxu0 0.0
        %1993 = vmatpush1.msra.mxu0 0.0
        %1994 = vmatprep.subr.mxu0 0.0
        %1995 = vmatpush1.msra.mxu0 0.0
        %1996 = vmatprep.subr.mxu0 0.0
        %1997 = vmatpush1.msra.mxu0 0.0
        %1998 = vmatprep.subr.mxu0 0.0
        %1999 = vmatpush1.msra.mxu0 0.0
        %2000 = vmatprep.subr.mxu0 0.0
        %2001 = vmatpush1.msra.mxu0 0.0
        %2002 = vmatprep.subr.mxu0 0.0
        %2003 = vmatpush1.msra.mxu0 0.0
        %2004 = vmatprep.subr.mxu0 0.0
        %2005 = vmatpush1.msra.mxu0 0.0
        %2006 = vmatprep.subr.mxu0 0.0
        %2007 = vmatpush1.msra.mxu0 0.0
        %2008 = vmatprep.subr.mxu0 0.0
        %2009 = vmatpush1.msra.mxu0 0.0
        %2010 = vmatprep.subr.mxu0 0.0
        %2011 = vmatpush1.msra.mxu0 0.0
        %2012 = vmatprep.subr.mxu0 0.0
        %2013 = vmatpush1.msra.mxu0 0.0
        %2014 = vmatprep.subr.mxu0 0.0
        %2015 = vmatpush1.msra.mxu0 0.0
        %2016 = vmatprep.subr.mxu0 0.0
        %2017 = vmatpush1.msra.mxu0 0.0
        %2018 = vmatprep.subr.mxu0 0.0
        %2019 = vmatpush1.msra.mxu0 0.0
        %2020 = vmatprep.subr.mxu0 0.0
        %2021 = vmatpush1.msra.mxu0 0.0
        %2022 = vmatprep.subr.mxu0 0.0
        %2023 = vmatpush1.msra.mxu0 0.0
        %2024 = vmatprep.subr.mxu0 0.0
        %2025 = vmatpush1.msra.mxu0 0.0
        %2026 = vmatprep.subr.mxu0 0.0
        %2027 = vmatpush1.msra.mxu0 0.0
        %2028 = vmatprep.mubr.f32.mxu0 0.0
        %2029 = vmatmul.mubr.f32.gmra.mrb[0].mxu0 %v1962
        %v2030 = vpop.f32.mrb[0].mxu0
        %v2031 = vadd.f32 0.0, %v2030
        %v2032 = vpop.f32.mrb[0].mxu0
        %2033 = vdwg.mxu0
        %v2034 = vld [vmem:[%s8] sm:$0xff]
        %v2035 = vld [vmem:[%s8 + $0x8] sm:$0xff]
        %v2036 = vld [vmem:[%s8 + $0x10] sm:$0xff]
        %v2037 = vld [vmem:[%s8 + $0x18] sm:$0xff]
        %v2038 = vld [vmem:[%s8 + $0x20] sm:$0xff]
        %v2039 = vld [vmem:[%s8 + $0x28] sm:$0xff]
        %v2040 = vld [vmem:[%s8 + $0x30] sm:$0xff]
        %v2041 = vld [vmem:[%s8 + $0x38] sm:$0xff]
        %v2042 = vld [vmem:[%s8 + $0x40] sm:$0xff]
        %v2043 = vld [vmem:[%s8 + $0x48] sm:$0xff]
        %v2044 = vld [vmem:[%s8 + $0x50] sm:$0xff]
        %v2045 = vld [vmem:[%s8 + $0x58] sm:$0xff]
        %v2046 = vld [vmem:[%s8 + $0x60] sm:$0xff]
        %v2047 = vld [vmem:[%s8 + $0x68] sm:$0xff]
        %v2048 = vld [vmem:[%s8 + $0x70] sm:$0xff]
        %v2049 = vld [vmem:[%s8 + $0x78] sm:$0xff]
        %v2050 = vld [vmem:[%s8 + $0x80] sm:$0xff]
        %v2051 = vld [vmem:[%s8 + $0x88] sm:$0xff]
        %v2052 = vld [vmem:[%s8 + $0x90] sm:$0xff]
        %v2053 = vld [vmem:[%s8 + $0x98] sm:$0xff]
        %v2054 = vld [vmem:[%s8 + $0xa0] sm:$0xff]
        %v2055 = vld [vmem:[%s8 + $0xa8] sm:$0xff]
        %v2056 = vld [vmem:[%s8 + $0xb0] sm:$0xff]
        %v2057 = vld [vmem:[%s8 + $0xb8] sm:$0xff]
        %v2058 = vld [vmem:[%s8 + $0xc0] sm:$0xff]
        %v2059 = vld [vmem:[%s8 + $0xc8] sm:$0xff]
        %v2060 = vld [vmem:[%s8 + $0xd0] sm:$0xff]
        %v2061 = vld [vmem:[%s8 + $0xd8] sm:$0xff]
        %v2062 = vld [vmem:[%s8 + $0xe0] sm:$0xff]
        %v2063 = vld [vmem:[%s8 + $0xe8] sm:$0xff]
        %v2064 = vld [vmem:[%s8 + $0xf0] sm:$0xff]
        %v2065 = vld [vmem:[%s8 + $0xf8] sm:$0xff]
        %2066 = vmatprep.subr.mxu0 %v2035
        %2067 = vmatpush1.msra.mxu0 %v2034
        %2068 = vmatprep.subr.mxu0 %v2037
        %2069 = vmatpush1.msra.mxu0 %v2036
        %2070 = vmatprep.subr.mxu0 %v2039
        %2071 = vmatpush1.msra.mxu0 %v2038
        %2072 = vmatprep.subr.mxu0 %v2041
        %2073 = vmatpush1.msra.mxu0 %v2040
        %2074 = vmatprep.subr.mxu0 %v2043
        %2075 = vmatpush1.msra.mxu0 %v2042
        %2076 = vmatprep.subr.mxu0 %v2045
        %2077 = vmatpush1.msra.mxu0 %v2044
        %2078 = vmatprep.subr.mxu0 %v2047
        %2079 = vmatpush1.msra.mxu0 %v2046
        %2080 = vmatprep.subr.mxu0 %v2049
        %2081 = vmatpush1.msra.mxu0 %v2048
        %2082 = vmatprep.subr.mxu0 %v2051
        %2083 = vmatpush1.msra.mxu0 %v2050
        %2084 = vmatprep.subr.mxu0 %v2053
        %2085 = vmatpush1.msra.mxu0 %v2052
        %2086 = vmatprep.subr.mxu0 %v2055
        %2087 = vmatpush1.msra.mxu0 %v2054
        %2088 = vmatprep.subr.mxu0 %v2057
        %2089 = vmatpush1.msra.mxu0 %v2056
        %2090 = vmatprep.subr.mxu0 %v2059
        %2091 = vmatpush1.msra.mxu0 %v2058
        %2092 = vmatprep.subr.mxu0 %v2061
        %2093 = vmatpush1.msra.mxu0 %v2060
        %2094 = vmatprep.subr.mxu0 %v2063
        %2095 = vmatpush1.msra.mxu0 %v2062
        %2096 = vmatprep.subr.mxu0 %v2065
        %2097 = vmatpush1.msra.mxu0 %v2064
        %2098 = vmatprep.subr.mxu0 0.0
        %2099 = vmatpush1.msra.mxu0 0.0
        %2100 = vmatprep.subr.mxu0 0.0
        %2101 = vmatpush1.msra.mxu0 0.0
        %2102 = vmatprep.subr.mxu0 0.0
        %2103 = vmatpush1.msra.mxu0 0.0
        %2104 = vmatprep.subr.mxu0 0.0
        %2105 = vmatpush1.msra.mxu0 0.0
        %2106 = vmatprep.subr.mxu0 0.0
        %2107 = vmatpush1.msra.mxu0 0.0
        %2108 = vmatprep.subr.mxu0 0.0
        %2109 = vmatpush1.msra.mxu0 0.0
        %2110 = vmatprep.subr.mxu0 0.0
        %2111 = vmatpush1.msra.mxu0 0.0
        %2112 = vmatprep.subr.mxu0 0.0
        %2113 = vmatpush1.msra.mxu0 0.0
        %2114 = vmatprep.subr.mxu0 0.0
        %2115 = vmatpush1.msra.mxu0 0.0
        %2116 = vmatprep.subr.mxu0 0.0
        %2117 = vmatpush1.msra.mxu0 0.0
        %2118 = vmatprep.subr.mxu0 0.0
        %2119 = vmatpush1.msra.mxu0 0.0
        %2120 = vmatprep.subr.mxu0 0.0
        %2121 = vmatpush1.msra.mxu0 0.0
        %2122 = vmatprep.subr.mxu0 0.0
        %2123 = vmatpush1.msra.mxu0 0.0
        %2124 = vmatprep.subr.mxu0 0.0
        %2125 = vmatpush1.msra.mxu0 0.0
        %2126 = vmatprep.subr.mxu0 0.0
        %2127 = vmatpush1.msra.mxu0 0.0
        %2128 = vmatprep.subr.mxu0 0.0
        %2129 = vmatpush1.msra.mxu0 0.0
        %2130 = vmatprep.mubr.f32.mxu0 0.0
        %2131 = vmatmul.mubr.f32.gmra.mrb[0].mxu0 %v2031
        %v2132 = vpop.f32.mrb[0].mxu0
        %v2133 = vadd.f32 0.0, %v2132
        %v2134 = vpop.f32.mrb[0].mxu0
        %v2135 = vadd.f32 0.0, %v2134
        %2136 = vdwg.mxu0
        %v2137 = vadd.f32 %v1873, %v2133
        %v2138 = vadd.f32 %v1877, %v2135
        %2139 = vmatprep.subr.mxu0 0.0
        %2140 = vmatpush1.xpose.msra.mxu0 %v1264
        %2141 = vmatprep.subr.mxu0 0.0
        %2142 = vmatpush1.xpose.msra.mxu0 0.0
        %2143 = vmatprep.subr.mxu0 0.0
        %2144 = vmatpush1.xpose.msra.mxu0 0.0
        %2145 = vmatprep.subr.mxu0 0.0
        %2146 = vmatpush1.xpose.msra.mxu0 0.0
        %2147 = vmatprep.subr.mxu0 0.0
        %2148 = vmatpush1.xpose.msra.mxu0 0.0
        %2149 = vmatprep.subr.mxu0 0.0
        %2150 = vmatpush1.xpose.msra.mxu0 0.0
        %2151 = vmatprep.subr.mxu0 0.0
        %2152 = vmatpush1.xpose.msra.mxu0 0.0
        %2153 = vmatprep.subr.mxu0 0.0
        %2154 = vmatpush1.xpose.msra.mxu0 0.0
        %2155 = vmatprep.subr.mxu0 0.0
        %2156 = vmatpush1.xpose.msra.mxu0 0.0
        %2157 = vmatprep.subr.mxu0 0.0
        %2158 = vmatpush1.xpose.msra.mxu0 0.0
        %2159 = vmatprep.subr.mxu0 0.0
        %2160 = vmatpush1.xpose.msra.mxu0 0.0
        %2161 = vmatprep.subr.mxu0 0.0
        %2162 = vmatpush1.xpose.msra.mxu0 0.0
        %2163 = vmatprep.subr.mxu0 0.0
        %2164 = vmatpush1.xpose.msra.mxu0 0.0
        %2165 = vmatprep.subr.mxu0 0.0
        %2166 = vmatpush1.xpose.msra.mxu0 0.0
        %2167 = vmatprep.subr.mxu0 0.0
        %2168 = vmatpush1.xpose.msra.mxu0 0.0
        %2169 = vmatprep.subr.mxu0 0.0
        %2170 = vmatpush1.xpose.msra.mxu0 0.0
        %2171 = vmatprep.subr.mxu0 0.0
        %2172 = vmatpush1.xpose.msra.mxu0 0.0
        %2173 = vmatprep.subr.mxu0 0.0
        %2174 = vmatpush1.xpose.msra.mxu0 0.0
        %2175 = vmatprep.subr.mxu0 0.0
        %2176 = vmatpush1.xpose.msra.mxu0 0.0
        %2177 = vmatprep.subr.mxu0 0.0
        %2178 = vmatpush1.xpose.msra.mxu0 0.0
        %2179 = vmatprep.subr.mxu0 0.0
        %2180 = vmatpush1.xpose.msra.mxu0 0.0
        %2181 = vmatprep.subr.mxu0 0.0
        %2182 = vmatpush1.xpose.msra.mxu0 0.0
        %2183 = vmatprep.subr.mxu0 0.0
        %2184 = vmatpush1.xpose.msra.mxu0 0.0
        %2185 = vmatprep.subr.mxu0 0.0
        %2186 = vmatpush1.xpose.msra.mxu0 0.0
        %2187 = vmatprep.subr.mxu0 0.0
        %2188 = vmatpush1.xpose.msra.mxu0 0.0
        %2189 = vmatprep.subr.mxu0 0.0
        %2190 = vmatpush1.xpose.msra.mxu0 0.0
        %2191 = vmatprep.subr.mxu0 0.0
        %2192 = vmatpush1.xpose.msra.mxu0 0.0
        %2193 = vmatprep.subr.mxu0 0.0
        %2194 = vmatpush1.xpose.msra.mxu0 0.0
        %2195 = vmatprep.subr.mxu0 0.0
        %2196 = vmatpush1.xpose.msra.mxu0 0.0
        %2197 = vmatprep.subr.mxu0 0.0
        %2198 = vmatpush1.xpose.msra.mxu0 0.0
        %2199 = vmatprep.subr.mxu0 0.0
        %2200 = vmatpush1.xpose.msra.mxu0 0.0
        %2201 = vmatprep.subr.mxu0 0.0
        %2202 = vmatpush1.xpose.msra.mxu0 0.0
        %2203 = vmatprep.mubr.f32.mxu0 0.0
        %2204 = vmatmul.mubr.f32.gmra.mrb[0].mxu0 %v756
        %v2205 = vpop.f32.mrb[0].mxu0
        %v2206 = vadd.f32 0.0, %v2205
        %v2207 = vpop.f32.mrb[0].mxu0
        %2208 = vdwg.mxu0
        %v2209 = vsel %vm1419, %v2206, -inf
        %2210 = vmax.xlane.f32.xlu0 %v2209
        %v2211 = vpop.xlane.xlu0 %2210
        %v2212 = vsub.f32 %v2206, %v2211
        %v2213 = vmul.f32 %v2212, 1.442695
        %v2214 = vpow.pop %v2213
        %v2215 = vsel %vm1419, %v2214, 0.0
        %2216 = vadd.xlane.f32.xlu0 %v2215
        %v2217 = vpop.xlane.xlu0 %2216
        %v2218 = vrcp.pop %v2217
        %v2219 = vmul.f32 %v2214, %v2218
        %v2221 = vsel %vm1419, %v2219, 0
        %2223 = vmatprep.subr.mxu0 0.0
        %2224 = vmatpush1.msra.mxu0 %v1335
        %2225 = vmatprep.subr.mxu0 0.0
        %2226 = vmatpush1.msra.mxu0 0.0
        %2227 = vmatprep.subr.mxu0 0.0
        %2228 = vmatpush1.msra.mxu0 0.0
        %2229 = vmatprep.subr.mxu0 0.0
        %2230 = vmatpush1.msra.mxu0 0.0
        %2231 = vmatprep.subr.mxu0 0.0
        %2232 = vmatpush1.msra.mxu0 0.0
        %2233 = vmatprep.subr.mxu0 0.0
        %2234 = vmatpush1.msra.mxu0 0.0
        %2235 = vmatprep.subr.mxu0 0.0
        %2236 = vmatpush1.msra.mxu0 0.0
        %2237 = vmatprep.subr.mxu0 0.0
        %2238 = vmatpush1.msra.mxu0 0.0
        %2239 = vmatprep.subr.mxu0 0.0
        %2240 = vmatpush1.msra.mxu0 0.0
        %2241 = vmatprep.subr.mxu0 0.0
        %2242 = vmatpush1.msra.mxu0 0.0
        %2243 = vmatprep.subr.mxu0 0.0
        %2244 = vmatpush1.msra.mxu0 0.0
        %2245 = vmatprep.subr.mxu0 0.0
        %2246 = vmatpush1.msra.mxu0 0.0
        %2247 = vmatprep.subr.mxu0 0.0
        %2248 = vmatpush1.msra.mxu0 0.0
        %2249 = vmatprep.subr.mxu0 0.0
        %2250 = vmatpush1.msra.mxu0 0.0
        %2251 = vmatprep.subr.mxu0 0.0
        %2252 = vmatpush1.msra.mxu0 0.0
        %2253 = vmatprep.subr.mxu0 0.0
        %2254 = vmatpush1.msra.mxu0 0.0
        %2255 = vmatprep.subr.mxu0 0.0
        %2256 = vmatpush1.msra.mxu0 0.0
        %2257 = vmatprep.subr.mxu0 0.0
        %2258 = vmatpush1.msra.mxu0 0.0
        %2259 = vmatprep.subr.mxu0 0.0
        %2260 = vmatpush1.msra.mxu0 0.0
        %2261 = vmatprep.subr.mxu0 0.0
        %2262 = vmatpush1.msra.mxu0 0.0
        %2263 = vmatprep.subr.mxu0 0.0
        %2264 = vmatpush1.msra.mxu0 0.0
        %2265 = vmatprep.subr.mxu0 0.0
        %2266 = vmatpush1.msra.mxu0 0.0
        %2267 = vmatprep.subr.mxu0 0.0
        %2268 = vmatpush1.msra.mxu0 0.0
        %2269 = vmatprep.subr.mxu0 0.0
        %2270 = vmatpush1.msra.mxu0 0.0
        %2271 = vmatprep.subr.mxu0 0.0
        %2272 = vmatpush1.msra.mxu0 0.0
        %2273 = vmatprep.subr.mxu0 0.0
        %2274 = vmatpush1.msra.mxu0 0.0
        %2275 = vmatprep.subr.mxu0 0.0
        %2276 = vmatpush1.msra.mxu0 0.0
        %2277 = vmatprep.subr.mxu0 0.0
        %2278 = vmatpush1.msra.mxu0 0.0
        %2279 = vmatprep.subr.mxu0 0.0
        %2280 = vmatpush1.msra.mxu0 0.0
        %2281 = vmatprep.subr.mxu0 0.0
        %2282 = vmatpush1.msra.mxu0 0.0
        %2283 = vmatprep.subr.mxu0 0.0
        %2284 = vmatpush1.msra.mxu0 0.0
        %2285 = vmatprep.subr.mxu0 0.0
        %2286 = vmatpush1.msra.mxu0 0.0
        %2287 = vmatprep.mubr.f32.mxu0 0.0
        %2288 = vmatmul.mubr.f32.gmra.mrb[0].mxu0 %v2221
        %v2289 = vpop.f32.mrb[0].mxu0
        %v2290 = vadd.f32 0.0, %v2289
        %v2291 = vpop.f32.mrb[0].mxu0
        %2292 = vdwg.mxu0
        %v2293 = vld [vmem:[%s8 + $0x100] sm:$0xff]
        %v2294 = vld [vmem:[%s8 + $0x108] sm:$0xff]
        %v2295 = vld [vmem:[%s8 + $0x110] sm:$0xff]
        %v2296 = vld [vmem:[%s8 + $0x118] sm:$0xff]
        %v2297 = vld [vmem:[%s8 + $0x120] sm:$0xff]
        %v2298 = vld [vmem:[%s8 + $0x128] sm:$0xff]
        %v2299 = vld [vmem:[%s8 + $0x130] sm:$0xff]
        %v2300 = vld [vmem:[%s8 + $0x138] sm:$0xff]
        %v2301 = vld [vmem:[%s8 + $0x140] sm:$0xff]
        %v2302 = vld [vmem:[%s8 + $0x148] sm:$0xff]
        %v2303 = vld [vmem:[%s8 + $0x150] sm:$0xff]
        %v2304 = vld [vmem:[%s8 + $0x158] sm:$0xff]
        %v2305 = vld [vmem:[%s8 + $0x160] sm:$0xff]
        %v2306 = vld [vmem:[%s8 + $0x168] sm:$0xff]
        %v2307 = vld [vmem:[%s8 + $0x170] sm:$0xff]
        %v2308 = vld [vmem:[%s8 + $0x178] sm:$0xff]
        %v2309 = vld [vmem:[%s8 + $0x180] sm:$0xff]
        %v2310 = vld [vmem:[%s8 + $0x188] sm:$0xff]
        %v2311 = vld [vmem:[%s8 + $0x190] sm:$0xff]
        %v2312 = vld [vmem:[%s8 + $0x198] sm:$0xff]
        %v2313 = vld [vmem:[%s8 + $0x1a0] sm:$0xff]
        %v2314 = vld [vmem:[%s8 + $0x1a8] sm:$0xff]
        %v2315 = vld [vmem:[%s8 + $0x1b0] sm:$0xff]
        %v2316 = vld [vmem:[%s8 + $0x1b8] sm:$0xff]
        %v2317 = vld [vmem:[%s8 + $0x1c0] sm:$0xff]
        %v2318 = vld [vmem:[%s8 + $0x1c8] sm:$0xff]
        %v2319 = vld [vmem:[%s8 + $0x1d0] sm:$0xff]
        %v2320 = vld [vmem:[%s8 + $0x1d8] sm:$0xff]
        %v2321 = vld [vmem:[%s8 + $0x1e0] sm:$0xff]
        %v2322 = vld [vmem:[%s8 + $0x1e8] sm:$0xff]
        %v2323 = vld [vmem:[%s8 + $0x1f0] sm:$0xff]
        %v2324 = vld [vmem:[%s8 + $0x1f8] sm:$0xff]
        %2325 = vmatprep.subr.mxu0 %v2294
        %2326 = vmatpush1.msra.mxu0 %v2293
        %2327 = vmatprep.subr.mxu0 %v2296
        %2328 = vmatpush1.msra.mxu0 %v2295
        %2329 = vmatprep.subr.mxu0 %v2298
        %2330 = vmatpush1.msra.mxu0 %v2297
        %2331 = vmatprep.subr.mxu0 %v2300
        %2332 = vmatpush1.msra.mxu0 %v2299
        %2333 = vmatprep.subr.mxu0 %v2302
        %2334 = vmatpush1.msra.mxu0 %v2301
        %2335 = vmatprep.subr.mxu0 %v2304
        %2336 = vmatpush1.msra.mxu0 %v2303
        %2337 = vmatprep.subr.mxu0 %v2306
        %2338 = vmatpush1.msra.mxu0 %v2305
        %2339 = vmatprep.subr.mxu0 %v2308
        %2340 = vmatpush1.msra.mxu0 %v2307
        %2341 = vmatprep.subr.mxu0 %v2310
        %2342 = vmatpush1.msra.mxu0 %v2309
        %2343 = vmatprep.subr.mxu0 %v2312
        %2344 = vmatpush1.msra.mxu0 %v2311
        %2345 = vmatprep.subr.mxu0 %v2314
        %2346 = vmatpush1.msra.mxu0 %v2313
        %2347 = vmatprep.subr.mxu0 %v2316
        %2348 = vmatpush1.msra.mxu0 %v2315
        %2349 = vmatprep.subr.mxu0 %v2318
        %2350 = vmatpush1.msra.mxu0 %v2317
        %2351 = vmatprep.subr.mxu0 %v2320
        %2352 = vmatpush1.msra.mxu0 %v2319
        %2353 = vmatprep.subr.mxu0 %v2322
        %2354 = vmatpush1.msra.mxu0 %v2321
        %2355 = vmatprep.subr.mxu0 %v2324
        %2356 = vmatpush1.msra.mxu0 %v2323
        %2357 = vmatprep.subr.mxu0 0.0
        %2358 = vmatpush1.msra.mxu0 0.0
        %2359 = vmatprep.subr.mxu0 0.0
        %2360 = vmatpush1.msra.mxu0 0.0
        %2361 = vmatprep.subr.mxu0 0.0
        %2362 = vmatpush1.msra.mxu0 0.0
        %2363 = vmatprep.subr.mxu0 0.0
        %2364 = vmatpush1.msra.mxu0 0.0
        %2365 = vmatprep.subr.mxu0 0.0
        %2366 = vmatpush1.msra.mxu0 0.0
        %2367 = vmatprep.subr.mxu0 0.0
        %2368 = vmatpush1.msra.mxu0 0.0
        %2369 = vmatprep.subr.mxu0 0.0
        %2370 = vmatpush1.msra.mxu0 0.0
        %2371 = vmatprep.subr.mxu0 0.0
        %2372 = vmatpush1.msra.mxu0 0.0
        %2373 = vmatprep.subr.mxu0 0.0
        %2374 = vmatpush1.msra.mxu0 0.0
        %2375 = vmatprep.subr.mxu0 0.0
        %2376 = vmatpush1.msra.mxu0 0.0
        %2377 = vmatprep.subr.mxu0 0.0
        %2378 = vmatpush1.msra.mxu0 0.0
        %2379 = vmatprep.subr.mxu0 0.0
        %2380 = vmatpush1.msra.mxu0 0.0
        %2381 = vmatprep.subr.mxu0 0.0
        %2382 = vmatpush1.msra.mxu0 0.0
        %2383 = vmatprep.subr.mxu0 0.0
        %2384 = vmatpush1.msra.mxu0 0.0
        %2385 = vmatprep.subr.mxu0 0.0
        %2386 = vmatpush1.msra.mxu0 0.0
        %2387 = vmatprep.subr.mxu0 0.0
        %2388 = vmatpush1.msra.mxu0 0.0
        %2389 = vmatprep.mubr.f32.mxu0 0.0
        %2390 = vmatmul.mubr.f32.gmra.mrb[0].mxu0 %v2290
        %v2391 = vpop.f32.mrb[0].mxu0
        %v2392 = vadd.f32 0.0, %v2391
        %v2393 = vpop.f32.mrb[0].mxu0
        %v2394 = vadd.f32 0.0, %v2393
        %2395 = vdwg.mxu0
        %v2396 = vadd.f32 %v2137, %v2392
        %v2397 = vadd.f32 %v2138, %v2394
        %v2398 = vld [vmem:[%s10] sm:$0xff]
        %v2399 = vld [vmem:[%s10 + $0x8] sm:$0xff]
        %v2400 = vld [vmem:[%s10 + $0x10] sm:$0xff]
        %v2401 = vld [vmem:[%s10 + $0x18] sm:$0xff]
        %v2402 = vld [vmem:[%s10 + $0x20] sm:$0xff]
        %v2403 = vld [vmem:[%s10 + $0x28] sm:$0xff]
        %v2404 = vld [vmem:[%s10 + $0x30] sm:$0xff]
        %v2405 = vld [vmem:[%s10 + $0x38] sm:$0xff]
        %v2406 = vld [vmem:[%s10 + $0x40] sm:$0xff]
        %v2407 = vld [vmem:[%s10 + $0x48] sm:$0xff]
        %v2408 = vld [vmem:[%s10 + $0x50] sm:$0xff]
        %v2409 = vld [vmem:[%s10 + $0x58] sm:$0xff]
        %v2410 = vld [vmem:[%s10 + $0x60] sm:$0xff]
        %v2411 = vld [vmem:[%s10 + $0x68] sm:$0xff]
        %v2412 = vld [vmem:[%s10 + $0x70] sm:$0xff]
        %v2413 = vld [vmem:[%s10 + $0x78] sm:$0xff]
        %v2414 = vld [vmem:[%s10 + $0x80] sm:$0xff]
        %v2415 = vld [vmem:[%s10 + $0x88] sm:$0xff]
        %v2416 = vld [vmem:[%s10 + $0x90] sm:$0xff]
        %v2417 = vld [vmem:[%s10 + $0x98] sm:$0xff]
        %v2418 = vld [vmem:[%s10 + $0xa0] sm:$0xff]
        %v2419 = vld [vmem:[%s10 + $0xa8] sm:$0xff]
        %v2420 = vld [vmem:[%s10 + $0xb0] sm:$0xff]
        %v2421 = vld [vmem:[%s10 + $0xb8] sm:$0xff]
        %v2422 = vld [vmem:[%s10 + $0xc0] sm:$0xff]
        %v2423 = vld [vmem:[%s10 + $0xc8] sm:$0xff]
        %v2424 = vld [vmem:[%s10 + $0xd0] sm:$0xff]
        %v2425 = vld [vmem:[%s10 + $0xd8] sm:$0xff]
        %v2426 = vld [vmem:[%s10 + $0xe0] sm:$0xff]
        %v2427 = vld [vmem:[%s10 + $0xe8] sm:$0xff]
        %v2428 = vld [vmem:[%s10 + $0xf0] sm:$0xff]
        %v2429 = vld [vmem:[%s10 + $0xf8] sm:$0xff]
        %v2430 = vld [vmem:[%s10 + $0x100] sm:$0xff]
        %v2431 = vld [vmem:[%s10 + $0x108] sm:$0xff]
        %v2432 = vld [vmem:[%s10 + $0x110] sm:$0xff]
        %v2433 = vld [vmem:[%s10 + $0x118] sm:$0xff]
        %v2434 = vld [vmem:[%s10 + $0x120] sm:$0xff]
        %v2435 = vld [vmem:[%s10 + $0x128] sm:$0xff]
        %v2436 = vld [vmem:[%s10 + $0x130] sm:$0xff]
        %v2437 = vld [vmem:[%s10 + $0x138] sm:$0xff]
        %v2438 = vld [vmem:[%s10 + $0x140] sm:$0xff]
        %v2439 = vld [vmem:[%s10 + $0x148] sm:$0xff]
        %v2440 = vld [vmem:[%s10 + $0x150] sm:$0xff]
        %v2441 = vld [vmem:[%s10 + $0x158] sm:$0xff]
        %v2442 = vld [vmem:[%s10 + $0x160] sm:$0xff]
        %v2443 = vld [vmem:[%s10 + $0x168] sm:$0xff]
        %v2444 = vld [vmem:[%s10 + $0x170] sm:$0xff]
        %v2445 = vld [vmem:[%s10 + $0x178] sm:$0xff]
        %v2446 = vld [vmem:[%s10 + $0x180] sm:$0xff]
        %v2447 = vld [vmem:[%s10 + $0x188] sm:$0xff]
        %v2448 = vld [vmem:[%s10 + $0x190] sm:$0xff]
        %v2449 = vld [vmem:[%s10 + $0x198] sm:$0xff]
        %v2450 = vld [vmem:[%s10 + $0x1a0] sm:$0xff]
        %v2451 = vld [vmem:[%s10 + $0x1a8] sm:$0xff]
        %v2452 = vld [vmem:[%s10 + $0x1b0] sm:$0xff]
        %v2453 = vld [vmem:[%s10 + $0x1b8] sm:$0xff]
        %v2454 = vld [vmem:[%s10 + $0x1c0] sm:$0xff]
        %v2455 = vld [vmem:[%s10 + $0x1c8] sm:$0xff]
        %v2456 = vld [vmem:[%s10 + $0x1d0] sm:$0xff]
        %v2457 = vld [vmem:[%s10 + $0x1d8] sm:$0xff]
        %v2458 = vld [vmem:[%s10 + $0x1e0] sm:$0xff]
        %v2459 = vld [vmem:[%s10 + $0x1e8] sm:$0xff]
        %v2460 = vld [vmem:[%s10 + $0x1f0] sm:$0xff]
        %v2461 = vld [vmem:[%s10 + $0x1f8] sm:$0xff]
        %v2462 = vld [vmem:[%s11] sm:$0xff]
        %v2463 = vld [vmem:[%s11 + $0x8] sm:$0xff]
        %v2464 = vld [vmem:[%s11 + $0x10] sm:$0xff]
        %v2465 = vld [vmem:[%s11 + $0x18] sm:$0xff]
        %v2466 = vld [vmem:[%s11 + $0x20] sm:$0xff]
        %v2467 = vld [vmem:[%s11 + $0x28] sm:$0xff]
        %v2468 = vld [vmem:[%s11 + $0x30] sm:$0xff]
        %v2469 = vld [vmem:[%s11 + $0x38] sm:$0xff]
        %v2470 = vld [vmem:[%s11 + $0x40] sm:$0xff]
        %v2471 = vld [vmem:[%s11 + $0x48] sm:$0xff]
        %v2472 = vld [vmem:[%s11 + $0x50] sm:$0xff]
        %v2473 = vld [vmem:[%s11 + $0x58] sm:$0xff]
        %v2474 = vld [vmem:[%s11 + $0x60] sm:$0xff]
        %v2475 = vld [vmem:[%s11 + $0x68] sm:$0xff]
        %v2476 = vld [vmem:[%s11 + $0x70] sm:$0xff]
        %v2477 = vld [vmem:[%s11 + $0x78] sm:$0xff]
        %v2478 = vld [vmem:[%s11 + $0x80] sm:$0xff]
        %v2479 = vld [vmem:[%s11 + $0x88] sm:$0xff]
        %v2480 = vld [vmem:[%s11 + $0x90] sm:$0xff]
        %v2481 = vld [vmem:[%s11 + $0x98] sm:$0xff]
        %v2482 = vld [vmem:[%s11 + $0xa0] sm:$0xff]
        %v2483 = vld [vmem:[%s11 + $0xa8] sm:$0xff]
        %v2484 = vld [vmem:[%s11 + $0xb0] sm:$0xff]
        %v2485 = vld [vmem:[%s11 + $0xb8] sm:$0xff]
        %v2486 = vld [vmem:[%s11 + $0xc0] sm:$0xff]
        %v2487 = vld [vmem:[%s11 + $0xc8] sm:$0xff]
        %v2488 = vld [vmem:[%s11 + $0xd0] sm:$0xff]
        %v2489 = vld [vmem:[%s11 + $0xd8] sm:$0xff]
        %v2490 = vld [vmem:[%s11 + $0xe0] sm:$0xff]
        %v2491 = vld [vmem:[%s11 + $0xe8] sm:$0xff]
        %v2492 = vld [vmem:[%s11 + $0xf0] sm:$0xff]
        %v2493 = vld [vmem:[%s11 + $0xf8] sm:$0xff]
        %v2494 = vld [vmem:[%s11 + $0x100] sm:$0xff]
        %v2495 = vld [vmem:[%s11 + $0x108] sm:$0xff]
        %v2496 = vld [vmem:[%s11 + $0x110] sm:$0xff]
        %v2497 = vld [vmem:[%s11 + $0x118] sm:$0xff]
        %v2498 = vld [vmem:[%s11 + $0x120] sm:$0xff]
        %v2499 = vld [vmem:[%s11 + $0x128] sm:$0xff]
        %v2500 = vld [vmem:[%s11 + $0x130] sm:$0xff]
        %v2501 = vld [vmem:[%s11 + $0x138] sm:$0xff]
        %v2502 = vld [vmem:[%s11 + $0x140] sm:$0xff]
        %v2503 = vld [vmem:[%s11 + $0x148] sm:$0xff]
        %v2504 = vld [vmem:[%s11 + $0x150] sm:$0xff]
        %v2505 = vld [vmem:[%s11 + $0x158] sm:$0xff]
        %v2506 = vld [vmem:[%s11 + $0x160] sm:$0xff]
        %v2507 = vld [vmem:[%s11 + $0x168] sm:$0xff]
        %v2508 = vld [vmem:[%s11 + $0x170] sm:$0xff]
        %v2509 = vld [vmem:[%s11 + $0x178] sm:$0xff]
        %v2510 = vld [vmem:[%s11 + $0x180] sm:$0xff]
        %v2511 = vld [vmem:[%s11 + $0x188] sm:$0xff]
        %v2512 = vld [vmem:[%s11 + $0x190] sm:$0xff]
        %v2513 = vld [vmem:[%s11 + $0x198] sm:$0xff]
        %v2514 = vld [vmem:[%s11 + $0x1a0] sm:$0xff]
        %v2515 = vld [vmem:[%s11 + $0x1a8] sm:$0xff]
        %v2516 = vld [vmem:[%s11 + $0x1b0] sm:$0xff]
        %v2517 = vld [vmem:[%s11 + $0x1b8] sm:$0xff]
        %v2518 = vld [vmem:[%s11 + $0x1c0] sm:$0xff]
        %v2519 = vld [vmem:[%s11 + $0x1c8] sm:$0xff]
        %v2520 = vld [vmem:[%s11 + $0x1d0] sm:$0xff]
        %v2521 = vld [vmem:[%s11 + $0x1d8] sm:$0xff]
        %v2522 = vld [vmem:[%s11 + $0x1e0] sm:$0xff]
        %v2523 = vld [vmem:[%s11 + $0x1e8] sm:$0xff]
        %v2524 = vld [vmem:[%s11 + $0x1f0] sm:$0xff]
        %v2525 = vld [vmem:[%s11 + $0x1f8] sm:$0xff]
        %2526 = vmatprep.subr.mxu0 %v2463
        %2527 = vmatpush1.msra.mxu0 %v2462
        %2528 = vmatprep.subr.mxu0 %v2465
        %2529 = vmatpush1.msra.mxu0 %v2464
        %2530 = vmatprep.subr.mxu0 %v2467
        %2531 = vmatpush1.msra.mxu0 %v2466
        %2532 = vmatprep.subr.mxu0 %v2469
        %2533 = vmatpush1.msra.mxu0 %v2468
        %2534 = vmatprep.subr.mxu0 %v2471
        %2535 = vmatpush1.msra.mxu0 %v2470
        %2536 = vmatprep.subr.mxu0 %v2473
        %2537 = vmatpush1.msra.mxu0 %v2472
        %2538 = vmatprep.subr.mxu0 %v2475
        %2539 = vmatpush1.msra.mxu0 %v2474
        %2540 = vmatprep.subr.mxu0 %v2477
        %2541 = vmatpush1.msra.mxu0 %v2476
        %2542 = vmatprep.subr.mxu0 %v2479
        %2543 = vmatpush1.msra.mxu0 %v2478
        %2544 = vmatprep.subr.mxu0 %v2481
        %2545 = vmatpush1.msra.mxu0 %v2480
        %2546 = vmatprep.subr.mxu0 %v2483
        %2547 = vmatpush1.msra.mxu0 %v2482
        %2548 = vmatprep.subr.mxu0 %v2485
        %2549 = vmatpush1.msra.mxu0 %v2484
        %2550 = vmatprep.subr.mxu0 %v2487
        %2551 = vmatpush1.msra.mxu0 %v2486
        %2552 = vmatprep.subr.mxu0 %v2489
        %2553 = vmatpush1.msra.mxu0 %v2488
        %2554 = vmatprep.subr.mxu0 %v2491
        %2555 = vmatpush1.msra.mxu0 %v2490
        %2556 = vmatprep.subr.mxu0 %v2493
        %2557 = vmatpush1.msra.mxu0 %v2492
        %2558 = vmatprep.subr.mxu0 %v2495
        %2559 = vmatpush1.msra.mxu0 %v2494
        %2560 = vmatprep.subr.mxu0 %v2497
        %2561 = vmatpush1.msra.mxu0 %v2496
        %2562 = vmatprep.subr.mxu0 %v2499
        %2563 = vmatpush1.msra.mxu0 %v2498
        %2564 = vmatprep.subr.mxu0 %v2501
        %2565 = vmatpush1.msra.mxu0 %v2500
        %2566 = vmatprep.subr.mxu0 %v2503
        %2567 = vmatpush1.msra.mxu0 %v2502
        %2568 = vmatprep.subr.mxu0 %v2505
        %2569 = vmatpush1.msra.mxu0 %v2504
        %2570 = vmatprep.subr.mxu0 %v2507
        %2571 = vmatpush1.msra.mxu0 %v2506
        %2572 = vmatprep.subr.mxu0 %v2509
        %2573 = vmatpush1.msra.mxu0 %v2508
        %2574 = vmatprep.subr.mxu0 %v2511
        %2575 = vmatpush1.msra.mxu0 %v2510
        %2576 = vmatprep.subr.mxu0 %v2513
        %2577 = vmatpush1.msra.mxu0 %v2512
        %2578 = vmatprep.subr.mxu0 %v2515
        %2579 = vmatpush1.msra.mxu0 %v2514
        %2580 = vmatprep.subr.mxu0 %v2517
        %2581 = vmatpush1.msra.mxu0 %v2516
        %2582 = vmatprep.subr.mxu0 %v2519
        %2583 = vmatpush1.msra.mxu0 %v2518
        %2584 = vmatprep.subr.mxu0 %v2521
        %2585 = vmatpush1.msra.mxu0 %v2520
        %2586 = vmatprep.subr.mxu0 %v2523
        %2587 = vmatpush1.msra.mxu0 %v2522
        %2588 = vmatprep.subr.mxu0 %v2525
        %2589 = vmatpush1.msra.mxu0 %v2524
        %2590 = vmatprep.mubr.f32.mxu0 %v2397
        %2591 = vmatmul.mubr.f32.gmra.mrb[0].mxu0 %v2396
        %v2592 = vpop.f32.mrb[0].mxu0
        %v2593 = vadd.f32 0.0, %v2592
        %v2594 = vpop.f32.mrb[0].mxu0
        %v2595 = vadd.f32 0.0, %v2594
        %2596 = vdwg.mxu0
        %2597 = vmatprep.subr.mxu0 %v2399
        %2598 = vmatpush1.msra.mxu0 %v2398
        %2599 = vmatprep.subr.mxu0 %v2401
        %2600 = vmatpush1.msra.mxu0 %v2400
        %2601 = vmatprep.subr.mxu0 %v2403
        %2602 = vmatpush1.msra.mxu0 %v2402
        %2603 = vmatprep.subr.mxu0 %v2405
        %2604 = vmatpush1.msra.mxu0 %v2404
        %2605 = vmatprep.subr.mxu0 %v2407
        %2606 = vmatpush1.msra.mxu0 %v2406
        %2607 = vmatprep.subr.mxu0 %v2409
        %2608 = vmatpush1.msra.mxu0 %v2408
        %2609 = vmatprep.subr.mxu0 %v2411
        %2610 = vmatpush1.msra.mxu0 %v2410
        %2611 = vmatprep.subr.mxu0 %v2413
        %2612 = vmatpush1.msra.mxu0 %v2412
        %2613 = vmatprep.subr.mxu0 %v2415
        %2614 = vmatpush1.msra.mxu0 %v2414
        %2615 = vmatprep.subr.mxu0 %v2417
        %2616 = vmatpush1.msra.mxu0 %v2416
        %2617 = vmatprep.subr.mxu0 %v2419
        %2618 = vmatpush1.msra.mxu0 %v2418
        %2619 = vmatprep.subr.mxu0 %v2421
        %2620 = vmatpush1.msra.mxu0 %v2420
        %2621 = vmatprep.subr.mxu0 %v2423
        %2622 = vmatpush1.msra.mxu0 %v2422
        %2623 = vmatprep.subr.mxu0 %v2425
        %2624 = vmatpush1.msra.mxu0 %v2424
        %2625 = vmatprep.subr.mxu0 %v2427
        %2626 = vmatpush1.msra.mxu0 %v2426
        %2627 = vmatprep.subr.mxu0 %v2429
        %2628 = vmatpush1.msra.mxu0 %v2428
        %2629 = vmatprep.subr.mxu0 %v2431
        %2630 = vmatpush1.msra.mxu0 %v2430
        %2631 = vmatprep.subr.mxu0 %v2433
        %2632 = vmatpush1.msra.mxu0 %v2432
        %2633 = vmatprep.subr.mxu0 %v2435
        %2634 = vmatpush1.msra.mxu0 %v2434
        %2635 = vmatprep.subr.mxu0 %v2437
        %2636 = vmatpush1.msra.mxu0 %v2436
        %2637 = vmatprep.subr.mxu0 %v2439
        %2638 = vmatpush1.msra.mxu0 %v2438
        %2639 = vmatprep.subr.mxu0 %v2441
        %2640 = vmatpush1.msra.mxu0 %v2440
        %2641 = vmatprep.subr.mxu0 %v2443
        %2642 = vmatpush1.msra.mxu0 %v2442
        %2643 = vmatprep.subr.mxu0 %v2445
        %2644 = vmatpush1.msra.mxu0 %v2444
        %2645 = vmatprep.subr.mxu0 %v2447
        %2646 = vmatpush1.msra.mxu0 %v2446
        %2647 = vmatprep.subr.mxu0 %v2449
        %2648 = vmatpush1.msra.mxu0 %v2448
        %2649 = vmatprep.subr.mxu0 %v2451
        %2650 = vmatpush1.msra.mxu0 %v2450
        %2651 = vmatprep.subr.mxu0 %v2453
        %2652 = vmatpush1.msra.mxu0 %v2452
        %2653 = vmatprep.subr.mxu0 %v2455
        %2654 = vmatpush1.msra.mxu0 %v2454
        %2655 = vmatprep.subr.mxu0 %v2457
        %2656 = vmatpush1.msra.mxu0 %v2456
        %2657 = vmatprep.subr.mxu0 %v2459
        %2658 = vmatpush1.msra.mxu0 %v2458
        %2659 = vmatprep.subr.mxu0 %v2461
        %2660 = vmatpush1.msra.mxu0 %v2460
        %2661 = vmatprep.mubr.f32.mxu0 %v1867
        %2662 = vmatmul.mubr.f32.gmra.mrb[0].mxu0 %v1866
        %v2663 = vpop.f32.mrb[0].mxu0
        %v2664 = vadd.f32 %v2593, %v2663
        %v2665 = vpop.f32.mrb[0].mxu0
        %v2666 = vadd.f32 %v2595, %v2665
        %2667 = vdwg.mxu0
        %v2668 = vld [vmem:[%s12] sm:$0x3]
        %v2670 = vlaneseq
        %v2671 = vshrl.u32 %v2670, 7
        %v2672 = vsub.s32 0, %v2671
        %v2673 = vrot.slane %v2668, %v2672
        %v2674 = vlaneseq
        %v2675 = vshrl.u32 %v2674, 7
        %v2676 = vsub.s32 1, %v2675
        %v2677 = vrot.slane %v2668, %v2676
        %v2680 = vadd.f32 %v2664, %v2673
        %v2681 = vadd.f32 %v2666, %v2677
        %2682 = vst [vmem:[%s448] sm:$0xff] %v2680
        %2683 = vst [vmem:[%s448 + $0x8] sm:$0xff] %v2681
        %s2684 = sand.u32 %s318, 1
        %s2685 = scalar_lea.sflag [#allocation3], %s2684
        %s2686 = sand.u32 %s318, 1
        %s2687 = smul.addr %s2686, 16
        %s2688 = scalar_lea.vmem [#allocation2], %s2687
        // Predicated region
        $region73: #{dual_cross_attention.1} parent=71 // pred_check
          %p2689 = pneg %p328
        $region74: #{dual_cross_attention.1} parent=71 // pred_check_branch
          %2691 = sbr.rel (%p2689) target = $region76
        $region75: #{dual_cross_attention.1} parent=71 // pred_region
          %s2693 = ssub.s32 256, 256
          %2694 = vsyncadd %s2685, %s2693
          %s2695 = smul.addr %s27, 2
          %s2696 = smul.addr %s2695, 128
          %s2697 = scalar_lea.hbm %s13, %s2696
          %s2699 = sshll.u32 %s2688, 4
          %s2700 = int_to_ptr.vmem [resolvable:$true] %s2699
          %2702 = dma.vmem_to_hbm [thread:$0]  %s2700, 256, %s2697, %s2685
        $region76: #{dual_cross_attention.1} parent=71 // pred_fallthru
          _
      $region72: #{dual_cross_attention.1} parent=5 // pred_fallthru
        _
      %p2703 = scmp.le.s32.totalorder 2, %s22
      // Predicated region
      $region77: #{dual_cross_attention.1} parent=5 // pred_check
        %p2704 = pneg %p2703
      $region78: #{dual_cross_attention.1} parent=5 // pred_check_branch
        %2706 = sbr.rel (%p2704) target = $region80
      $region79: #{dual_cross_attention.1} parent=5 // pred_region
        %s2707 = ssub.s32 %s22, 2
        // Predicated region
        $region81: #{dual_cross_attention.1} parent=79 // pred_check
          %p2708 = pneg %p334
        $region82: #{dual_cross_attention.1} parent=79 // pred_check_branch
          %2710 = sbr.rel (%p2708) target = $region84
        $region83: #{dual_cross_attention.1} parent=79 // pred_region
          %s2711 = sand.u32 %s319, 1
          %s2712 = scalar_lea.sflag [#allocation3], %s2711
          %s2713 = sand.u32 %s319, 1
          %s2714 = smul.addr %s2713, 16
          %s2715 = scalar_lea.vmem [#allocation2], %s2714
          %2716 = dma.done %s2712, 256
        $region84: #{dual_cross_attention.1} parent=79 // pred_fallthru
          _
      $region80: #{dual_cross_attention.1} parent=5 // pred_fallthru
        _
    $region6: #{dual_cross_attention.1} parent=1 // loop_footer
      %s26 = sadd.s32 1, %s22
    $region7: #{dual_cross_attention.1} parent=1 // loop_footer_branch
      %21 = sbr.rel target = $region3
    $region8: #{dual_cross_attention.1} parent=1 // loop_exit
      _
    %2717 = vsyncpa [#allocation3], 1
    %s2718 = scalar_lea.sflag [#allocation3], 1
    %2719 = vsyncpa %s2718, 1

</llo_original>
